<compile_context>
chip_gen: v6e
topology: v6e:2x2x1
jax: 0.10.0
libtpu: 0.0.40
codegen_flags: <defaults>
</compile_context>

<pallas_src>
import functools

import jax
import jax.numpy as jnp
from jax.experimental import pallas as pl
from jax.experimental.pallas import tpu as pltpu

# ----------------------- hyper-parameters ("hp") -----------------------------
VOCAB_SIZE    = 32
EMBEDDING_DIM = 32            # E
HIDDEN_DIM    = 32            # H
TARGET_DIM    = 8             # D
GLU_LAYERS    = 2
LSTM_LAYERS   = 2
KERNEL_SIZE   = 7
PAD           = KERNEL_SIZE // 2

# Residual add (lstm_out + glu_out) silently requires H == E; fail loudly.
assert HIDDEN_DIM == EMBEDDING_DIM, "residual add requires hidden_dim == embedding_dim"

_VMEM = functools.partial(pl.BlockSpec, memory_space=pltpu.MemorySpace.VMEM)


# ----------------------------- fused kernel ----------------------------------
def _build_fused_kernel(n_glu, n_lstm):
    K, E, H, V = KERNEL_SIZE, EMBEDDING_DIM, HIDDEN_DIM, VOCAB_SIZE

    def kernel(*refs):
        # ---- unpack refs ----------------------------------------------------
        tok_ref, embed_ref = refs[0], refs[1]
        pos = 2
        glu_refs = [(refs[pos + 2 * i], refs[pos + 2 * i + 1]) for i in range(n_glu)]
        pos += 2 * n_glu
        wih0_ref, whh0_ref, b0_ref = refs[pos], refs[pos + 1], refs[pos + 2]
        pos += 3
        deep_refs = [(refs[pos + 2 * i], refs[pos + 2 * i + 1])
                     for i in range(n_lstm - 1)]
        pos += 2 * (n_lstm - 1)
        wout_ref, bout_ref = refs[pos], refs[pos + 1]
        o_ref = refs[pos + 2]
        xpad_scr = refs[pos + 3]

        B, T, D = o_ref.shape
        BT = B * T

        # ---------------- embedding: one-hot matmul (no XLA gather) ----------
        tok = tok_ref[...]                                         # (BT, 1) int32
        onehot = jnp.where(
            tok == jax.lax.broadcasted_iota(jnp.int32, (BT, V), 1),
            jnp.float32(1.0), jnp.float32(0.0))                    # (BT, V)
        cur = jnp.dot(onehot, embed_ref[...],
                      preferred_element_type=jnp.float32).reshape(B, T, E)

        # ---------------- GLU conv stack: K shallow dots per layer -----------
        xpad_scr[...] = jnp.zeros_like(xpad_scr)                   # pad rows stay zero
        for gw_ref, gb_ref in glu_refs:
            xpad_scr[:, pl.ds(PAD, T), :] = cur                    # 'same' padding in VMEM
            xpad = xpad_scr[...]                                   # (B, T + K - 1, E)
            acc = None
            for k in range(K):                                     # static unroll
                win = xpad[:, k:k + T, :].reshape(BT, E)
                d = jnp.dot(win, gw_ref[k], preferred_element_type=jnp.float32)
                acc = d if acc is None else acc + d
            acc = acc + gb_ref[...]                                # (BT, 2E)
            cur = (acc[:, :E] * jax.nn.sigmoid(acc[:, E:])).reshape(B, T, E)

        glu_out = cur                                              # residual branch
        x2d = glu_out.reshape(BT, E)

        # ---------------- stacked LSTM (packed gates, fully unrolled) --------
        # Layer-0 input projection hoisted: one (BT,E)@(E,4H) matmul.
        gx0 = (jnp.dot(x2d, wih0_ref[...], preferred_element_type=jnp.float32)
               + b0_ref[...]).reshape(B, T, 4 * H)
        whh0 = whh0_ref[...]                                       # (H, 4H)
        deep = [(w_ref[...], b_ref[...]) for w_ref, b_ref in deep_refs]

        zero = jnp.zeros((B, H), jnp.float32)
        h = [zero] * n_lstm
        c = [zero] * n_lstm
        hs = []

        def cell(gates, c_prev):
            # gate columns packed as [i | f | o | g]
            sig = jax.nn.sigmoid(gates[:, :3 * H])                 # i, f, o  (one EUP region)
            g = jnp.tanh(gates[:, 3 * H:])                         # g
            c_new = sig[:, H:2 * H] * c_prev + sig[:, :H] * g
            h_new = sig[:, 2 * H:3 * H] * jnp.tanh(c_new)
            return h_new, c_new

        for t in range(T):                                         # static unroll (T small)
            gates0 = gx0[:, t, :] + jnp.dot(h[0], whh0,
                                            preferred_element_type=jnp.float32)
            h[0], c[0] = cell(gates0, c[0])
            for l in range(1, n_lstm):
                w_l, b_l = deep[l - 1]                             # (2H, 4H), (1, 4H)
                inp = jnp.concatenate([h[l - 1], h[l]], axis=-1)   # (B, 2H)
                gates = jnp.dot(inp, w_l,
                                preferred_element_type=jnp.float32) + b_l
                h[l], c[l] = cell(gates, c[l])
            hs.append(h[n_lstm - 1])                               # stays in vregs

        lstm_out = jnp.stack(hs, axis=1)                           # (B, T, H)

        # ---------------- residual + head ------------------------------------
        s = (lstm_out + glu_out).reshape(BT, H)
        y = jnp.dot(s, wout_ref[...], preferred_element_type=jnp.float32) + bout_ref[...]
        o_ref[...] = jax.nn.sigmoid(y).reshape(B, T, D).astype(o_ref.dtype)

    return kernel


# ------------------------------ parameters -----------------------------------
def _pack_gate_cols(w, H):
    """PyTorch (4H, in) gate-major (i,f,g,o) -> (in, 4H) lane-packed (i,f,o,g)."""
    w4 = w.reshape(4, H, w.shape[1])[jnp.array([0, 1, 3, 2])]      # reorder gates
    return jnp.transpose(w4, (2, 0, 1)).reshape(w.shape[1], 4 * H)


def init_params(key):
    params = {}
    ks = iter(jax.random.split(key, 1 + 2 * GLU_LAYERS + 4 * LSTM_LAYERS + 2))

    params["embed"] = 0.1 * jax.random.normal(
        next(ks), (VOCAB_SIZE, EMBEDDING_DIM), jnp.float32)

    # GLU conv weights: PyTorch Conv1d weight (2E, E, K) -> (K, E, 2E) so that
    # tap k is a (E, 2E) matrix: W_k[i, o] = w[o, i, k].
    params["glu"] = []
    for _ in range(GLU_LAYERS):
        w = 0.1 * jax.random.normal(
            next(ks), (2 * EMBEDDING_DIM, EMBEDDING_DIM, KERNEL_SIZE), jnp.float32)
        b = 0.1 * jax.random.normal(next(ks), (2 * EMBEDDING_DIM,), jnp.float32)
        params["glu"].append((jnp.transpose(w, (2, 1, 0)), b.reshape(1, -1)))

    H = HIDDEN_DIM
    deep = []
    for layer in range(LSTM_LAYERS):
        in_dim = EMBEDDING_DIM if layer == 0 else HIDDEN_DIM
        w_ih = 0.1 * jax.random.normal(next(ks), (4 * H, in_dim), jnp.float32)
        w_hh = 0.1 * jax.random.normal(next(ks), (4 * H, H), jnp.float32)
        b_ih = 0.1 * jax.random.normal(next(ks), (4 * H,), jnp.float32)
        b_hh = 0.1 * jax.random.normal(next(ks), (4 * H,), jnp.float32)
        wih_p = _pack_gate_cols(w_ih, H)                           # (in, 4H)
        whh_p = _pack_gate_cols(w_hh, H)                           # (H, 4H)
        b_p = (b_ih + b_hh).reshape(4, H)[jnp.array([0, 1, 3, 2])].reshape(1, 4 * H)
        if layer == 0:
            params["lstm0"] = (wih_p, whh_p, b_p)
        else:
            # stack input & recurrent weights: rows 0:H act on h_{l-1,t},
            # rows H:2H act on h_{l,t-1}  -> one (B,2H)@(2H,4H) dot per step.
            deep.append((jnp.concatenate([wih_p, whh_p], axis=0), b_p))
    params["lstm_deep"] = deep

    w_out = 0.1 * jax.random.normal(next(ks), (TARGET_DIM, HIDDEN_DIM), jnp.float32)
    b_out = 0.1 * jax.random.normal(next(ks), (TARGET_DIM,), jnp.float32)
    params["out"] = (w_out.T, b_out.reshape(1, -1))                # (H, D), (1, D)
    return params


# ------------------------------ forward --------------------------------------
@jax.jit
def inference_forward(params, tokens):
    B, T = tokens.shape
    tok2d = tokens.reshape(B * T, 1).astype(jnp.int32)             # trivial reshape only

    flat = [params["embed"]]
    for w_k, b in params["glu"]:
        flat += [w_k, b]
    flat += list(params["lstm0"])
    for w_stack, b in params["lstm_deep"]:
        flat += [w_stack, b]
    flat += [params["out"][0], params["out"][1]]

    return pl.pallas_call(
        _build_fused_kernel(GLU_LAYERS, LSTM_LAYERS),
        out_shape=jax.ShapeDtypeStruct((B, T, TARGET_DIM), jnp.float32),
        in_specs=[_VMEM()] * (1 + len(flat)),
        out_specs=_VMEM(),
        scratch_shapes=[
            pltpu.VMEM((B, T + 2 * PAD, EMBEDDING_DIM), jnp.float32),  # padded conv window
        ],
    )(tok2d, *flat)


if __name__ == "__main__":
    key = jax.random.PRNGKey(0)
    pkey, dkey = jax.random.split(key)
    params = init_params(pkey)

    B, T = 2, 8
    tokens = jax.random.randint(dkey, (B, T), 0, VOCAB_SIZE, dtype=jnp.int32)

    y = inference_forward(params, tokens)
    jax.block_until_ready(y)
    assert y.shape == (B, T, TARGET_DIM)
    assert bool(jnp.all(jnp.isfinite(y)))
    assert bool(jnp.all((y >= 0.0) & (y <= 1.0)))
    print("KERNEL_OK")
</pallas_src>

<mosaic_0001>
module attributes {stable_mosaic.version = 11 : i64} {
  func.func @kernel(%arg0: memref<16x1xi32, #tpu.memory_space<vmem>>, %arg1: memref<32x32xf32, #tpu.memory_space<vmem>>, %arg2: memref<7x32x64xf32, #tpu.memory_space<vmem>>, %arg3: memref<1x64xf32, #tpu.memory_space<vmem>>, %arg4: memref<7x32x64xf32, #tpu.memory_space<vmem>>, %arg5: memref<1x64xf32, #tpu.memory_space<vmem>>, %arg6: memref<32x128xf32, #tpu.memory_space<vmem>>, %arg7: memref<32x128xf32, #tpu.memory_space<vmem>>, %arg8: memref<1x128xf32, #tpu.memory_space<vmem>>, %arg9: memref<64x128xf32, #tpu.memory_space<vmem>>, %arg10: memref<1x128xf32, #tpu.memory_space<vmem>>, %arg11: memref<32x8xf32, #tpu.memory_space<vmem>>, %arg12: memref<1x8xf32, #tpu.memory_space<vmem>>, %arg13: memref<2x8x8xf32, #tpu.memory_space<vmem>>, %arg14: memref<2x14x32xf32, #tpu.memory_space<vmem>>) attributes {dimension_semantics = [], scalar_prefetch = 0 : i64, scratch_operands = 1 : i64, tpu.core_type = #tpu.core_type<tc>} {
    %c0 = arith.constant 0 : index
    %c0_0 = arith.constant 0 : index
    %0 = vector.load %arg0[%c0, %c0_0] : memref<16x1xi32, #tpu.memory_space<vmem>>, vector<16x1xi32>
    %1 = tpu.iota {dimensions = array<i32: 1>} : vector<16x32xi32>
    %2 = vector.broadcast %0 : vector<16x1xi32> to vector<16x32xi32>
    %3 = arith.cmpi eq, %2, %1 : vector<16x32xi32>
    %cst = arith.constant 1.000000e+00 : f32
    %cst_1 = arith.constant 0.000000e+00 : f32
    %4 = vector.broadcast %cst : f32 to vector<16x32xf32>
    %5 = vector.broadcast %cst_1 : f32 to vector<16x32xf32>
    %6 = arith.select %3, %4, %5 : vector<16x32xi1>, vector<16x32xf32>
    %c0_2 = arith.constant 0 : index
    %c0_3 = arith.constant 0 : index
    %7 = vector.load %arg1[%c0_2, %c0_3] : memref<32x32xf32, #tpu.memory_space<vmem>>, vector<32x32xf32>
    %cst_4 = arith.constant dense<0.000000e+00> : vector<16x32xf32>
    %8 = tpu.matmul %6, %7, %cst_4 {dimension_numbers = #tpu.dot_dimension_numbers<[1], [0], [0], [1], [0, 0, 1, 1], [], []>} : vector<16x32xf32>, vector<32x32xf32>, vector<16x32xf32> -> vector<16x32xf32>
    %9 = vector.shape_cast %8 : vector<16x32xf32> to vector<2x8x32xf32>
    %cst_5 = arith.constant 0.000000e+00 : f32
    %10 = vector.broadcast %cst_5 : f32 to vector<2x14x32xf32>
    %c0_6 = arith.constant 0 : index
    %c0_7 = arith.constant 0 : index
    %c0_8 = arith.constant 0 : index
    %11 = vector.load %arg14[%c0_6, %c0_7, %c0_8] : memref<2x14x32xf32, #tpu.memory_space<vmem>>, vector<2x14x32xf32>
    tpu.vector_store %arg14[%c0_6, %c0_7, %c0_8], %10 {strides = array<i32>} : memref<2x14x32xf32, #tpu.memory_space<vmem>>, vector<2x14x32xf32>,
    %c0_9 = arith.constant 0 : index
    %c3 = arith.constant 3 : index
    %c0_10 = arith.constant 0 : index
    %12 = vector.load %arg14[%c0_9, %c3, %c0_10] : memref<2x14x32xf32, #tpu.memory_space<vmem>>, vector<2x8x32xf32>
    tpu.vector_store %arg14[%c0_9, %c3, %c0_10], %9 {strides = array<i32>} : memref<2x14x32xf32, #tpu.memory_space<vmem>>, vector<2x8x32xf32>,
    %c0_11 = arith.constant 0 : index
    %c0_12 = arith.constant 0 : index
    %c0_13 = arith.constant 0 : index
    %13 = vector.load %arg14[%c0_11, %c0_12, %c0_13] : memref<2x14x32xf32, #tpu.memory_space<vmem>>, vector<2x14x32xf32>
    %14 = vector.extract_strided_slice %13 {offsets = [0, 0, 0], sizes = [2, 8, 32], strides = [1, 1, 1]} : vector<2x14x32xf32> to vector<2x8x32xf32>
    %15 = vector.shape_cast %14 : vector<2x8x32xf32> to vector<16x32xf32>
    %c0_14 = arith.constant 0 : index
    %c0_15 = arith.constant 0 : index
    %c0_16 = arith.constant 0 : index
    %16 = vector.load %arg2[%c0_14, %c0_15, %c0_16] : memref<7x32x64xf32, #tpu.memory_space<vmem>>, vector<1x32x64xf32>
    %17 = vector.shape_cast %16 : vector<1x32x64xf32> to vector<32x64xf32>
    %cst_17 = arith.constant dense<0.000000e+00> : vector<16x64xf32>
    %18 = tpu.matmul %15, %17, %cst_17 {dimension_numbers = #tpu.dot_dimension_numbers<[1], [0], [0], [1], [0, 0, 1, 1], [], []>} : vector<16x32xf32>, vector<32x64xf32>, vector<16x64xf32> -> vector<16x64xf32>
    %19 = vector.extract_strided_slice %13 {offsets = [0, 1, 0], sizes = [2, 8, 32], strides = [1, 1, 1]} : vector<2x14x32xf32> to vector<2x8x32xf32>
    %20 = vector.shape_cast %19 : vector<2x8x32xf32> to vector<16x32xf32>
    %c1 = arith.constant 1 : index
    %c0_18 = arith.constant 0 : index
    %c0_19 = arith.constant 0 : index
    %21 = vector.load %arg2[%c1, %c0_18, %c0_19] : memref<7x32x64xf32, #tpu.memory_space<vmem>>, vector<1x32x64xf32>
    %22 = vector.shape_cast %21 : vector<1x32x64xf32> to vector<32x64xf32>
    %cst_20 = arith.constant dense<0.000000e+00> : vector<16x64xf32>
    %23 = tpu.matmul %20, %22, %cst_20 {dimension_numbers = #tpu.dot_dimension_numbers<[1], [0], [0], [1], [0, 0, 1, 1], [], []>} : vector<16x32xf32>, vector<32x64xf32>, vector<16x64xf32> -> vector<16x64xf32>
    %24 = arith.addf %18, %23 : vector<16x64xf32>
    %25 = vector.extract_strided_slice %13 {offsets = [0, 2, 0], sizes = [2, 8, 32], strides = [1, 1, 1]} : vector<2x14x32xf32> to vector<2x8x32xf32>
    %26 = vector.shape_cast %25 : vector<2x8x32xf32> to vector<16x32xf32>
    %c2 = arith.constant 2 : index
    %c0_21 = arith.constant 0 : index
    %c0_22 = arith.constant 0 : index
    %27 = vector.load %arg2[%c2, %c0_21, %c0_22] : memref<7x32x64xf32, #tpu.memory_space<vmem>>, vector<1x32x64xf32>
    %28 = vector.shape_cast %27 : vector<1x32x64xf32> to vector<32x64xf32>
    %cst_23 = arith.constant dense<0.000000e+00> : vector<16x64xf32>
    %29 = tpu.matmul %26, %28, %cst_23 {dimension_numbers = #tpu.dot_dimension_numbers<[1], [0], [0], [1], [0, 0, 1, 1], [], []>} : vector<16x32xf32>, vector<32x64xf32>, vector<16x64xf32> -> vector<16x64xf32>
    %30 = arith.addf %24, %29 : vector<16x64xf32>
    %31 = vector.extract_strided_slice %13 {offsets = [0, 3, 0], sizes = [2, 8, 32], strides = [1, 1, 1]} : vector<2x14x32xf32> to vector<2x8x32xf32>
    %32 = vector.shape_cast %31 : vector<2x8x32xf32> to vector<16x32xf32>
    %c3_24 = arith.constant 3 : index
    %c0_25 = arith.constant 0 : index
    %c0_26 = arith.constant 0 : index
    %33 = vector.load %arg2[%c3_24, %c0_25, %c0_26] : memref<7x32x64xf32, #tpu.memory_space<vmem>>, vector<1x32x64xf32>
    %34 = vector.shape_cast %33 : vector<1x32x64xf32> to vector<32x64xf32>
    %cst_27 = arith.constant dense<0.000000e+00> : vector<16x64xf32>
    %35 = tpu.matmul %32, %34, %cst_27 {dimension_numbers = #tpu.dot_dimension_numbers<[1], [0], [0], [1], [0, 0, 1, 1], [], []>} : vector<16x32xf32>, vector<32x64xf32>, vector<16x64xf32> -> vector<16x64xf32>
    %36 = arith.addf %30, %35 : vector<16x64xf32>
    %37 = vector.extract_strided_slice %13 {offsets = [0, 4, 0], sizes = [2, 8, 32], strides = [1, 1, 1]} : vector<2x14x32xf32> to vector<2x8x32xf32>
    %38 = vector.shape_cast %37 : vector<2x8x32xf32> to vector<16x32xf32>
    %c4 = arith.constant 4 : index
    %c0_28 = arith.constant 0 : index
    %c0_29 = arith.constant 0 : index
    %39 = vector.load %arg2[%c4, %c0_28, %c0_29] : memref<7x32x64xf32, #tpu.memory_space<vmem>>, vector<1x32x64xf32>
    %40 = vector.shape_cast %39 : vector<1x32x64xf32> to vector<32x64xf32>
    %cst_30 = arith.constant dense<0.000000e+00> : vector<16x64xf32>
    %41 = tpu.matmul %38, %40, %cst_30 {dimension_numbers = #tpu.dot_dimension_numbers<[1], [0], [0], [1], [0, 0, 1, 1], [], []>} : vector<16x32xf32>, vector<32x64xf32>, vector<16x64xf32> -> vector<16x64xf32>
    %42 = arith.addf %36, %41 : vector<16x64xf32>
    %43 = vector.extract_strided_slice %13 {offsets = [0, 5, 0], sizes = [2, 8, 32], strides = [1, 1, 1]} : vector<2x14x32xf32> to vector<2x8x32xf32>
    %44 = vector.shape_cast %43 : vector<2x8x32xf32> to vector<16x32xf32>
    %c5 = arith.constant 5 : index
    %c0_31 = arith.constant 0 : index
    %c0_32 = arith.constant 0 : index
    %45 = vector.load %arg2[%c5, %c0_31, %c0_32] : memref<7x32x64xf32, #tpu.memory_space<vmem>>, vector<1x32x64xf32>
    %46 = vector.shape_cast %45 : vector<1x32x64xf32> to vector<32x64xf32>
    %cst_33 = arith.constant dense<0.000000e+00> : vector<16x64xf32>
    %47 = tpu.matmul %44, %46, %cst_33 {dimension_numbers = #tpu.dot_dimension_numbers<[1], [0], [0], [1], [0, 0, 1, 1], [], []>} : vector<16x32xf32>, vector<32x64xf32>, vector<16x64xf32> -> vector<16x64xf32>
    %48 = arith.addf %42, %47 : vector<16x64xf32>
    %49 = vector.extract_strided_slice %13 {offsets = [0, 6, 0], sizes = [2, 8, 32], strides = [1, 1, 1]} : vector<2x14x32xf32> to vector<2x8x32xf32>
    %50 = vector.shape_cast %49 : vector<2x8x32xf32> to vector<16x32xf32>
    %c6 = arith.constant 6 : index
    %c0_34 = arith.constant 0 : index
    %c0_35 = arith.constant 0 : index
    %51 = vector.load %arg2[%c6, %c0_34, %c0_35] : memref<7x32x64xf32, #tpu.memory_space<vmem>>, vector<1x32x64xf32>
    %52 = vector.shape_cast %51 : vector<1x32x64xf32> to vector<32x64xf32>
    %cst_36 = arith.constant dense<0.000000e+00> : vector<16x64xf32>
    %53 = tpu.matmul %50, %52, %cst_36 {dimension_numbers = #tpu.dot_dimension_numbers<[1], [0], [0], [1], [0, 0, 1, 1], [], []>} : vector<16x32xf32>, vector<32x64xf32>, vector<16x64xf32> -> vector<16x64xf32>
    %54 = arith.addf %48, %53 : vector<16x64xf32>
    %c0_37 = arith.constant 0 : index
    %c0_38 = arith.constant 0 : index
    %55 = vector.load %arg3[%c0_37, %c0_38] : memref<1x64xf32, #tpu.memory_space<vmem>>, vector<1x64xf32>
    %56 = vector.broadcast %55 : vector<1x64xf32> to vector<16x64xf32>
    %57 = arith.addf %54, %56 : vector<16x64xf32>
    %58 = vector.extract_strided_slice %57 {offsets = [0, 0], sizes = [16, 32], strides = [1, 1]} : vector<16x64xf32> to vector<16x32xf32>
    %59 = vector.extract_strided_slice %57 {offsets = [0, 32], sizes = [16, 32], strides = [1, 1]} : vector<16x64xf32> to vector<16x32xf32>
    %60 = arith.negf %59 : vector<16x32xf32>
    %61 = math.exp %60 : vector<16x32xf32>
    %cst_39 = arith.constant 1.000000e+00 : f32
    %62 = vector.broadcast %cst_39 : f32 to vector<16x32xf32>
    %63 = arith.addf %62, %61 : vector<16x32xf32>
    %64 = arith.divf %62, %63 : vector<16x32xf32>
    %65 = arith.mulf %58, %64 : vector<16x32xf32>
    %66 = vector.shape_cast %65 : vector<16x32xf32> to vector<2x8x32xf32>
    %c0_40 = arith.constant 0 : index
    %c3_41 = arith.constant 3 : index
    %c0_42 = arith.constant 0 : index
    %67 = vector.load %arg14[%c0_40, %c3_41, %c0_42] : memref<2x14x32xf32, #tpu.memory_space<vmem>>, vector<2x8x32xf32>
    tpu.vector_store %arg14[%c0_40, %c3_41, %c0_42], %66 {strides = array<i32>} : memref<2x14x32xf32, #tpu.memory_space<vmem>>, vector<2x8x32xf32>,
    %c0_43 = arith.constant 0 : index
    %c0_44 = arith.constant 0 : index
    %c0_45 = arith.constant 0 : index
    %68 = vector.load %arg14[%c0_43, %c0_44, %c0_45] : memref<2x14x32xf32, #tpu.memory_space<vmem>>, vector<2x14x32xf32>
    %69 = vector.extract_strided_slice %68 {offsets = [0, 0, 0], sizes = [2, 8, 32], strides = [1, 1, 1]} : vector<2x14x32xf32> to vector<2x8x32xf32>
    %70 = vector.shape_cast %69 : vector<2x8x32xf32> to vector<16x32xf32>
    %c0_46 = arith.constant 0 : index
    %c0_47 = arith.constant 0 : index
    %c0_48 = arith.constant 0 : index
    %71 = vector.load %arg4[%c0_46, %c0_47, %c0_48] : memref<7x32x64xf32, #tpu.memory_space<vmem>>, vector<1x32x64xf32>
    %72 = vector.shape_cast %71 : vector<1x32x64xf32> to vector<32x64xf32>
    %cst_49 = arith.constant dense<0.000000e+00> : vector<16x64xf32>
    %73 = tpu.matmul %70, %72, %cst_49 {dimension_numbers = #tpu.dot_dimension_numbers<[1], [0], [0], [1], [0, 0, 1, 1], [], []>} : vector<16x32xf32>, vector<32x64xf32>, vector<16x64xf32> -> vector<16x64xf32>
    %74 = vector.extract_strided_slice %68 {offsets = [0, 1, 0], sizes = [2, 8, 32], strides = [1, 1, 1]} : vector<2x14x32xf32> to vector<2x8x32xf32>
    %75 = vector.shape_cast %74 : vector<2x8x32xf32> to vector<16x32xf32>
    %c1_50 = arith.constant 1 : index
    %c0_51 = arith.constant 0 : index
    %c0_52 = arith.constant 0 : index
    %76 = vector.load %arg4[%c1_50, %c0_51, %c0_52] : memref<7x32x64xf32, #tpu.memory_space<vmem>>, vector<1x32x64xf32>
    %77 = vector.shape_cast %76 : vector<1x32x64xf32> to vector<32x64xf32>
    %cst_53 = arith.constant dense<0.000000e+00> : vector<16x64xf32>
    %78 = tpu.matmul %75, %77, %cst_53 {dimension_numbers = #tpu.dot_dimension_numbers<[1], [0], [0], [1], [0, 0, 1, 1], [], []>} : vector<16x32xf32>, vector<32x64xf32>, vector<16x64xf32> -> vector<16x64xf32>
    %79 = arith.addf %73, %78 : vector<16x64xf32>
    %80 = vector.extract_strided_slice %68 {offsets = [0, 2, 0], sizes = [2, 8, 32], strides = [1, 1, 1]} : vector<2x14x32xf32> to vector<2x8x32xf32>
    %81 = vector.shape_cast %80 : vector<2x8x32xf32> to vector<16x32xf32>
    %c2_54 = arith.constant 2 : index
    %c0_55 = arith.constant 0 : index
    %c0_56 = arith.constant 0 : index
    %82 = vector.load %arg4[%c2_54, %c0_55, %c0_56] : memref<7x32x64xf32, #tpu.memory_space<vmem>>, vector<1x32x64xf32>
    %83 = vector.shape_cast %82 : vector<1x32x64xf32> to vector<32x64xf32>
    %cst_57 = arith.constant dense<0.000000e+00> : vector<16x64xf32>
    %84 = tpu.matmul %81, %83, %cst_57 {dimension_numbers = #tpu.dot_dimension_numbers<[1], [0], [0], [1], [0, 0, 1, 1], [], []>} : vector<16x32xf32>, vector<32x64xf32>, vector<16x64xf32> -> vector<16x64xf32>
    %85 = arith.addf %79, %84 : vector<16x64xf32>
    %86 = vector.extract_strided_slice %68 {offsets = [0, 3, 0], sizes = [2, 8, 32], strides = [1, 1, 1]} : vector<2x14x32xf32> to vector<2x8x32xf32>
    %87 = vector.shape_cast %86 : vector<2x8x32xf32> to vector<16x32xf32>
    %c3_58 = arith.constant 3 : index
    %c0_59 = arith.constant 0 : index
    %c0_60 = arith.constant 0 : index
    %88 = vector.load %arg4[%c3_58, %c0_59, %c0_60] : memref<7x32x64xf32, #tpu.memory_space<vmem>>, vector<1x32x64xf32>
    %89 = vector.shape_cast %88 : vector<1x32x64xf32> to vector<32x64xf32>
    %cst_61 = arith.constant dense<0.000000e+00> : vector<16x64xf32>
    %90 = tpu.matmul %87, %89, %cst_61 {dimension_numbers = #tpu.dot_dimension_numbers<[1], [0], [0], [1], [0, 0, 1, 1], [], []>} : vector<16x32xf32>, vector<32x64xf32>, vector<16x64xf32> -> vector<16x64xf32>
    %91 = arith.addf %85, %90 : vector<16x64xf32>
    %92 = vector.extract_strided_slice %68 {offsets = [0, 4, 0], sizes = [2, 8, 32], strides = [1, 1, 1]} : vector<2x14x32xf32> to vector<2x8x32xf32>
    %93 = vector.shape_cast %92 : vector<2x8x32xf32> to vector<16x32xf32>
    %c4_62 = arith.constant 4 : index
    %c0_63 = arith.constant 0 : index
    %c0_64 = arith.constant 0 : index
    %94 = vector.load %arg4[%c4_62, %c0_63, %c0_64] : memref<7x32x64xf32, #tpu.memory_space<vmem>>, vector<1x32x64xf32>
    %95 = vector.shape_cast %94 : vector<1x32x64xf32> to vector<32x64xf32>
    %cst_65 = arith.constant dense<0.000000e+00> : vector<16x64xf32>
    %96 = tpu.matmul %93, %95, %cst_65 {dimension_numbers = #tpu.dot_dimension_numbers<[1], [0], [0], [1], [0, 0, 1, 1], [], []>} : vector<16x32xf32>, vector<32x64xf32>, vector<16x64xf32> -> vector<16x64xf32>
    %97 = arith.addf %91, %96 : vector<16x64xf32>
    %98 = vector.extract_strided_slice %68 {offsets = [0, 5, 0], sizes = [2, 8, 32], strides = [1, 1, 1]} : vector<2x14x32xf32> to vector<2x8x32xf32>
    %99 = vector.shape_cast %98 : vector<2x8x32xf32> to vector<16x32xf32>
    %c5_66 = arith.constant 5 : index
    %c0_67 = arith.constant 0 : index
    %c0_68 = arith.constant 0 : index
    %100 = vector.load %arg4[%c5_66, %c0_67, %c0_68] : memref<7x32x64xf32, #tpu.memory_space<vmem>>, vector<1x32x64xf32>
    %101 = vector.shape_cast %100 : vector<1x32x64xf32> to vector<32x64xf32>
    %cst_69 = arith.constant dense<0.000000e+00> : vector<16x64xf32>
    %102 = tpu.matmul %99, %101, %cst_69 {dimension_numbers = #tpu.dot_dimension_numbers<[1], [0], [0], [1], [0, 0, 1, 1], [], []>} : vector<16x32xf32>, vector<32x64xf32>, vector<16x64xf32> -> vector<16x64xf32>
    %103 = arith.addf %97, %102 : vector<16x64xf32>
    %104 = vector.extract_strided_slice %68 {offsets = [0, 6, 0], sizes = [2, 8, 32], strides = [1, 1, 1]} : vector<2x14x32xf32> to vector<2x8x32xf32>
    %105 = vector.shape_cast %104 : vector<2x8x32xf32> to vector<16x32xf32>
    %c6_70 = arith.constant 6 : index
    %c0_71 = arith.constant 0 : index
    %c0_72 = arith.constant 0 : index
    %106 = vector.load %arg4[%c6_70, %c0_71, %c0_72] : memref<7x32x64xf32, #tpu.memory_space<vmem>>, vector<1x32x64xf32>
    %107 = vector.shape_cast %106 : vector<1x32x64xf32> to vector<32x64xf32>
    %cst_73 = arith.constant dense<0.000000e+00> : vector<16x64xf32>
    %108 = tpu.matmul %105, %107, %cst_73 {dimension_numbers = #tpu.dot_dimension_numbers<[1], [0], [0], [1], [0, 0, 1, 1], [], []>} : vector<16x32xf32>, vector<32x64xf32>, vector<16x64xf32> -> vector<16x64xf32>
    %109 = arith.addf %103, %108 : vector<16x64xf32>
    %c0_74 = arith.constant 0 : index
    %c0_75 = arith.constant 0 : index
    %110 = vector.load %arg5[%c0_74, %c0_75] : memref<1x64xf32, #tpu.memory_space<vmem>>, vector<1x64xf32>
    %111 = vector.broadcast %110 : vector<1x64xf32> to vector<16x64xf32>
    %112 = arith.addf %109, %111 : vector<16x64xf32>
    %113 = vector.extract_strided_slice %112 {offsets = [0, 0], sizes = [16, 32], strides = [1, 1]} : vector<16x64xf32> to vector<16x32xf32>
    %114 = vector.extract_strided_slice %112 {offsets = [0, 32], sizes = [16, 32], strides = [1, 1]} : vector<16x64xf32> to vector<16x32xf32>
    %115 = arith.negf %114 : vector<16x32xf32>
    %116 = math.exp %115 : vector<16x32xf32>
    %cst_76 = arith.constant 1.000000e+00 : f32
    %117 = vector.broadcast %cst_76 : f32 to vector<16x32xf32>
    %118 = arith.addf %117, %116 : vector<16x32xf32>
    %119 = arith.divf %117, %118 : vector<16x32xf32>
    %120 = arith.mulf %113, %119 : vector<16x32xf32>
    %121 = vector.shape_cast %120 : vector<16x32xf32> to vector<2x8x32xf32>
    %122 = vector.shape_cast %121 : vector<2x8x32xf32> to vector<16x32xf32>
    %c0_77 = arith.constant 0 : index
    %c0_78 = arith.constant 0 : index
    %123 = vector.load %arg6[%c0_77, %c0_78] : memref<32x128xf32, #tpu.memory_space<vmem>>, vector<32x128xf32>
    %cst_79 = arith.constant dense<0.000000e+00> : vector<16x128xf32>
    %124 = tpu.matmul %122, %123, %cst_79 {dimension_numbers = #tpu.dot_dimension_numbers<[1], [0], [0], [1], [0, 0, 1, 1], [], []>} : vector<16x32xf32>, vector<32x128xf32>, vector<16x128xf32> -> vector<16x128xf32>
    %c0_80 = arith.constant 0 : index
    %c0_81 = arith.constant 0 : index
    %125 = vector.load %arg8[%c0_80, %c0_81] : memref<1x128xf32, #tpu.memory_space<vmem>>, vector<1x128xf32>
    %126 = vector.broadcast %125 : vector<1x128xf32> to vector<16x128xf32>
    %127 = arith.addf %124, %126 : vector<16x128xf32>
    %128 = vector.shape_cast %127 : vector<16x128xf32> to vector<2x8x128xf32>
    %c0_82 = arith.constant 0 : index
    %c0_83 = arith.constant 0 : index
    %129 = vector.load %arg7[%c0_82, %c0_83] : memref<32x128xf32, #tpu.memory_space<vmem>>, vector<32x128xf32>
    %c0_84 = arith.constant 0 : index
    %c0_85 = arith.constant 0 : index
    %130 = vector.load %arg9[%c0_84, %c0_85] : memref<64x128xf32, #tpu.memory_space<vmem>>, vector<64x128xf32>
    %c0_86 = arith.constant 0 : index
    %c0_87 = arith.constant 0 : index
    %131 = vector.load %arg10[%c0_86, %c0_87] : memref<1x128xf32, #tpu.memory_space<vmem>>, vector<1x128xf32>
    %cst_88 = arith.constant 0.000000e+00 : f32
    %132 = vector.broadcast %cst_88 : f32 to vector<2x32xf32>
    %133 = vector.extract_strided_slice %128 {offsets = [0, 0, 0], sizes = [2, 1, 128], strides = [1, 1, 1]} : vector<2x8x128xf32> to vector<2x1x128xf32>
    %134 = vector.shape_cast %133 : vector<2x1x128xf32> to vector<2x128xf32>
    %cst_89 = arith.constant dense<0.000000e+00> : vector<2x128xf32>
    %135 = tpu.matmul %132, %129, %cst_89 {dimension_numbers = #tpu.dot_dimension_numbers<[1], [0], [0], [1], [0, 0, 1, 1], [], []>} : vector<2x32xf32>, vector<32x128xf32>, vector<2x128xf32> -> vector<2x128xf32>
    %136 = arith.addf %134, %135 : vector<2x128xf32>
    %137 = vector.extract_strided_slice %136 {offsets = [0, 0], sizes = [2, 96], strides = [1, 1]} : vector<2x128xf32> to vector<2x96xf32>
    %138 = arith.negf %137 : vector<2x96xf32>
    %139 = math.exp %138 : vector<2x96xf32>
    %cst_90 = arith.constant 1.000000e+00 : f32
    %140 = vector.broadcast %cst_90 : f32 to vector<2x96xf32>
    %141 = arith.addf %140, %139 : vector<2x96xf32>
    %142 = arith.divf %140, %141 : vector<2x96xf32>
    %143 = vector.extract_strided_slice %136 {offsets = [0, 96], sizes = [2, 32], strides = [1, 1]} : vector<2x128xf32> to vector<2x32xf32>
    %144 = math.tanh %143 : vector<2x32xf32>
    %145 = vector.extract_strided_slice %142 {offsets = [0, 32], sizes = [2, 32], strides = [1, 1]} : vector<2x96xf32> to vector<2x32xf32>
    %146 = arith.mulf %145, %132 : vector<2x32xf32>
    %147 = vector.extract_strided_slice %142 {offsets = [0, 0], sizes = [2, 32], strides = [1, 1]} : vector<2x96xf32> to vector<2x32xf32>
    %148 = arith.mulf %147, %144 : vector<2x32xf32>
    %149 = arith.addf %146, %148 : vector<2x32xf32>
    %150 = vector.extract_strided_slice %142 {offsets = [0, 64], sizes = [2, 32], strides = [1, 1]} : vector<2x96xf32> to vector<2x32xf32>
    %151 = math.tanh %149 : vector<2x32xf32>
    %152 = arith.mulf %150, %151 : vector<2x32xf32>
    %153 = tpu.concatenate %152, %132 in 1 : vector<2x32xf32>, vector<2x32xf32> -> vector<2x64xf32>
    %cst_91 = arith.constant dense<0.000000e+00> : vector<2x128xf32>
    %154 = tpu.matmul %153, %130, %cst_91 {dimension_numbers = #tpu.dot_dimension_numbers<[1], [0], [0], [1], [0, 0, 1, 1], [], []>} : vector<2x64xf32>, vector<64x128xf32>, vector<2x128xf32> -> vector<2x128xf32>
    %155 = vector.broadcast %131 : vector<1x128xf32> to vector<2x128xf32>
    %156 = arith.addf %154, %155 : vector<2x128xf32>
    %157 = vector.extract_strided_slice %156 {offsets = [0, 0], sizes = [2, 96], strides = [1, 1]} : vector<2x128xf32> to vector<2x96xf32>
    %158 = arith.negf %157 : vector<2x96xf32>
    %159 = math.exp %158 : vector<2x96xf32>
    %cst_92 = arith.constant 1.000000e+00 : f32
    %160 = vector.broadcast %cst_92 : f32 to vector<2x96xf32>
    %161 = arith.addf %160, %159 : vector<2x96xf32>
    %162 = arith.divf %160, %161 : vector<2x96xf32>
    %163 = vector.extract_strided_slice %156 {offsets = [0, 96], sizes = [2, 32], strides = [1, 1]} : vector<2x128xf32> to vector<2x32xf32>
    %164 = math.tanh %163 : vector<2x32xf32>
    %165 = vector.extract_strided_slice %162 {offsets = [0, 32], sizes = [2, 32], strides = [1, 1]} : vector<2x96xf32> to vector<2x32xf32>
    %166 = arith.mulf %165, %132 : vector<2x32xf32>
    %167 = vector.extract_strided_slice %162 {offsets = [0, 0], sizes = [2, 32], strides = [1, 1]} : vector<2x96xf32> to vector<2x32xf32>
    %168 = arith.mulf %167, %164 : vector<2x32xf32>
    %169 = arith.addf %166, %168 : vector<2x32xf32>
    %170 = vector.extract_strided_slice %162 {offsets = [0, 64], sizes = [2, 32], strides = [1, 1]} : vector<2x96xf32> to vector<2x32xf32>
    %171 = math.tanh %169 : vector<2x32xf32>
    %172 = arith.mulf %170, %171 : vector<2x32xf32>
    %173 = vector.extract_strided_slice %128 {offsets = [0, 1, 0], sizes = [2, 1, 128], strides = [1, 1, 1]} : vector<2x8x128xf32> to vector<2x1x128xf32>
    %174 = vector.shape_cast %173 : vector<2x1x128xf32> to vector<2x128xf32>
    %cst_93 = arith.constant dense<0.000000e+00> : vector<2x128xf32>
    %175 = tpu.matmul %152, %129, %cst_93 {dimension_numbers = #tpu.dot_dimension_numbers<[1], [0], [0], [1], [0, 0, 1, 1], [], []>} : vector<2x32xf32>, vector<32x128xf32>, vector<2x128xf32> -> vector<2x128xf32>
    %176 = arith.addf %174, %175 : vector<2x128xf32>
    %177 = vector.extract_strided_slice %176 {offsets = [0, 0], sizes = [2, 96], strides = [1, 1]} : vector<2x128xf32> to vector<2x96xf32>
    %178 = arith.negf %177 : vector<2x96xf32>
    %179 = math.exp %178 : vector<2x96xf32>
    %cst_94 = arith.constant 1.000000e+00 : f32
    %180 = vector.broadcast %cst_94 : f32 to vector<2x96xf32>
    %181 = arith.addf %180, %179 : vector<2x96xf32>
    %182 = arith.divf %180, %181 : vector<2x96xf32>
    %183 = vector.extract_strided_slice %176 {offsets = [0, 96], sizes = [2, 32], strides = [1, 1]} : vector<2x128xf32> to vector<2x32xf32>
    %184 = math.tanh %183 : vector<2x32xf32>
    %185 = vector.extract_strided_slice %182 {offsets = [0, 32], sizes = [2, 32], strides = [1, 1]} : vector<2x96xf32> to vector<2x32xf32>
    %186 = arith.mulf %185, %149 : vector<2x32xf32>
    %187 = vector.extract_strided_slice %182 {offsets = [0, 0], sizes = [2, 32], strides = [1, 1]} : vector<2x96xf32> to vector<2x32xf32>
    %188 = arith.mulf %187, %184 : vector<2x32xf32>
    %189 = arith.addf %186, %188 : vector<2x32xf32>
    %190 = vector.extract_strided_slice %182 {offsets = [0, 64], sizes = [2, 32], strides = [1, 1]} : vector<2x96xf32> to vector<2x32xf32>
    %191 = math.tanh %189 : vector<2x32xf32>
    %192 = arith.mulf %190, %191 : vector<2x32xf32>
    %193 = tpu.concatenate %192, %172 in 1 : vector<2x32xf32>, vector<2x32xf32> -> vector<2x64xf32>
    %cst_95 = arith.constant dense<0.000000e+00> : vector<2x128xf32>
    %194 = tpu.matmul %193, %130, %cst_95 {dimension_numbers = #tpu.dot_dimension_numbers<[1], [0], [0], [1], [0, 0, 1, 1], [], []>} : vector<2x64xf32>, vector<64x128xf32>, vector<2x128xf32> -> vector<2x128xf32>
    %195 = vector.broadcast %131 : vector<1x128xf32> to vector<2x128xf32>
    %196 = arith.addf %194, %195 : vector<2x128xf32>
    %197 = vector.extract_strided_slice %196 {offsets = [0, 0], sizes = [2, 96], strides = [1, 1]} : vector<2x128xf32> to vector<2x96xf32>
    %198 = arith.negf %197 : vector<2x96xf32>
    %199 = math.exp %198 : vector<2x96xf32>
    %cst_96 = arith.constant 1.000000e+00 : f32
    %200 = vector.broadcast %cst_96 : f32 to vector<2x96xf32>
    %201 = arith.addf %200, %199 : vector<2x96xf32>
    %202 = arith.divf %200, %201 : vector<2x96xf32>
    %203 = vector.extract_strided_slice %196 {offsets = [0, 96], sizes = [2, 32], strides = [1, 1]} : vector<2x128xf32> to vector<2x32xf32>
    %204 = math.tanh %203 : vector<2x32xf32>
    %205 = vector.extract_strided_slice %202 {offsets = [0, 32], sizes = [2, 32], strides = [1, 1]} : vector<2x96xf32> to vector<2x32xf32>
    %206 = arith.mulf %205, %169 : vector<2x32xf32>
    %207 = vector.extract_strided_slice %202 {offsets = [0, 0], sizes = [2, 32], strides = [1, 1]} : vector<2x96xf32> to vector<2x32xf32>
    %208 = arith.mulf %207, %204 : vector<2x32xf32>
    %209 = arith.addf %206, %208 : vector<2x32xf32>
    %210 = vector.extract_strided_slice %202 {offsets = [0, 64], sizes = [2, 32], strides = [1, 1]} : vector<2x96xf32> to vector<2x32xf32>
    %211 = math.tanh %209 : vector<2x32xf32>
    %212 = arith.mulf %210, %211 : vector<2x32xf32>
    %213 = vector.extract_strided_slice %128 {offsets = [0, 2, 0], sizes = [2, 1, 128], strides = [1, 1, 1]} : vector<2x8x128xf32> to vector<2x1x128xf32>
    %214 = vector.shape_cast %213 : vector<2x1x128xf32> to vector<2x128xf32>
    %cst_97 = arith.constant dense<0.000000e+00> : vector<2x128xf32>
    %215 = tpu.matmul %192, %129, %cst_97 {dimension_numbers = #tpu.dot_dimension_numbers<[1], [0], [0], [1], [0, 0, 1, 1], [], []>} : vector<2x32xf32>, vector<32x128xf32>, vector<2x128xf32> -> vector<2x128xf32>
    %216 = arith.addf %214, %215 : vector<2x128xf32>
    %217 = vector.extract_strided_slice %216 {offsets = [0, 0], sizes = [2, 96], strides = [1, 1]} : vector<2x128xf32> to vector<2x96xf32>
    %218 = arith.negf %217 : vector<2x96xf32>
    %219 = math.exp %218 : vector<2x96xf32>
    %cst_98 = arith.constant 1.000000e+00 : f32
    %220 = vector.broadcast %cst_98 : f32 to vector<2x96xf32>
    %221 = arith.addf %220, %219 : vector<2x96xf32>
    %222 = arith.divf %220, %221 : vector<2x96xf32>
    %223 = vector.extract_strided_slice %216 {offsets = [0, 96], sizes = [2, 32], strides = [1, 1]} : vector<2x128xf32> to vector<2x32xf32>
    %224 = math.tanh %223 : vector<2x32xf32>
    %225 = vector.extract_strided_slice %222 {offsets = [0, 32], sizes = [2, 32], strides = [1, 1]} : vector<2x96xf32> to vector<2x32xf32>
    %226 = arith.mulf %225, %189 : vector<2x32xf32>
    %227 = vector.extract_strided_slice %222 {offsets = [0, 0], sizes = [2, 32], strides = [1, 1]} : vector<2x96xf32> to vector<2x32xf32>
    %228 = arith.mulf %227, %224 : vector<2x32xf32>
    %229 = arith.addf %226, %228 : vector<2x32xf32>
    %230 = vector.extract_strided_slice %222 {offsets = [0, 64], sizes = [2, 32], strides = [1, 1]} : vector<2x96xf32> to vector<2x32xf32>
    %231 = math.tanh %229 : vector<2x32xf32>
    %232 = arith.mulf %230, %231 : vector<2x32xf32>
    %233 = tpu.concatenate %232, %212 in 1 : vector<2x32xf32>, vector<2x32xf32> -> vector<2x64xf32>
    %cst_99 = arith.constant dense<0.000000e+00> : vector<2x128xf32>
    %234 = tpu.matmul %233, %130, %cst_99 {dimension_numbers = #tpu.dot_dimension_numbers<[1], [0], [0], [1], [0, 0, 1, 1], [], []>} : vector<2x64xf32>, vector<64x128xf32>, vector<2x128xf32> -> vector<2x128xf32>
    %235 = vector.broadcast %131 : vector<1x128xf32> to vector<2x128xf32>
    %236 = arith.addf %234, %235 : vector<2x128xf32>
    %237 = vector.extract_strided_slice %236 {offsets = [0, 0], sizes = [2, 96], strides = [1, 1]} : vector<2x128xf32> to vector<2x96xf32>
    %238 = arith.negf %237 : vector<2x96xf32>
    %239 = math.exp %238 : vector<2x96xf32>
    %cst_100 = arith.constant 1.000000e+00 : f32
    %240 = vector.broadcast %cst_100 : f32 to vector<2x96xf32>
    %241 = arith.addf %240, %239 : vector<2x96xf32>
    %242 = arith.divf %240, %241 : vector<2x96xf32>
    %243 = vector.extract_strided_slice %236 {offsets = [0, 96], sizes = [2, 32], strides = [1, 1]} : vector<2x128xf32> to vector<2x32xf32>
    %244 = math.tanh %243 : vector<2x32xf32>
    %245 = vector.extract_strided_slice %242 {offsets = [0, 32], sizes = [2, 32], strides = [1, 1]} : vector<2x96xf32> to vector<2x32xf32>
    %246 = arith.mulf %245, %209 : vector<2x32xf32>
    %247 = vector.extract_strided_slice %242 {offsets = [0, 0], sizes = [2, 32], strides = [1, 1]} : vector<2x96xf32> to vector<2x32xf32>
    %248 = arith.mulf %247, %244 : vector<2x32xf32>
    %249 = arith.addf %246, %248 : vector<2x32xf32>
    %250 = vector.extract_strided_slice %242 {offsets = [0, 64], sizes = [2, 32], strides = [1, 1]} : vector<2x96xf32> to vector<2x32xf32>
    %251 = math.tanh %249 : vector<2x32xf32>
    %252 = arith.mulf %250, %251 : vector<2x32xf32>
    %253 = vector.extract_strided_slice %128 {offsets = [0, 3, 0], sizes = [2, 1, 128], strides = [1, 1, 1]} : vector<2x8x128xf32> to vector<2x1x128xf32>
    %254 = vector.shape_cast %253 : vector<2x1x128xf32> to vector<2x128xf32>
    %cst_101 = arith.constant dense<0.000000e+00> : vector<2x128xf32>
    %255 = tpu.matmul %232, %129, %cst_101 {dimension_numbers = #tpu.dot_dimension_numbers<[1], [0], [0], [1], [0, 0, 1, 1], [], []>} : vector<2x32xf32>, vector<32x128xf32>, vector<2x128xf32> -> vector<2x128xf32>
    %256 = arith.addf %254, %255 : vector<2x128xf32>
    %257 = vector.extract_strided_slice %256 {offsets = [0, 0], sizes = [2, 96], strides = [1, 1]} : vector<2x128xf32> to vector<2x96xf32>
    %258 = arith.negf %257 : vector<2x96xf32>
    %259 = math.exp %258 : vector<2x96xf32>
    %cst_102 = arith.constant 1.000000e+00 : f32
    %260 = vector.broadcast %cst_102 : f32 to vector<2x96xf32>
    %261 = arith.addf %260, %259 : vector<2x96xf32>
    %262 = arith.divf %260, %261 : vector<2x96xf32>
    %263 = vector.extract_strided_slice %256 {offsets = [0, 96], sizes = [2, 32], strides = [1, 1]} : vector<2x128xf32> to vector<2x32xf32>
    %264 = math.tanh %263 : vector<2x32xf32>
    %265 = vector.extract_strided_slice %262 {offsets = [0, 32], sizes = [2, 32], strides = [1, 1]} : vector<2x96xf32> to vector<2x32xf32>
    %266 = arith.mulf %265, %229 : vector<2x32xf32>
    %267 = vector.extract_strided_slice %262 {offsets = [0, 0], sizes = [2, 32], strides = [1, 1]} : vector<2x96xf32> to vector<2x32xf32>
    %268 = arith.mulf %267, %264 : vector<2x32xf32>
    %269 = arith.addf %266, %268 : vector<2x32xf32>
    %270 = vector.extract_strided_slice %262 {offsets = [0, 64], sizes = [2, 32], strides = [1, 1]} : vector<2x96xf32> to vector<2x32xf32>
    %271 = math.tanh %269 : vector<2x32xf32>
    %272 = arith.mulf %270, %271 : vector<2x32xf32>
    %273 = tpu.concatenate %272, %252 in 1 : vector<2x32xf32>, vector<2x32xf32> -> vector<2x64xf32>
    %cst_103 = arith.constant dense<0.000000e+00> : vector<2x128xf32>
    %274 = tpu.matmul %273, %130, %cst_103 {dimension_numbers = #tpu.dot_dimension_numbers<[1], [0], [0], [1], [0, 0, 1, 1], [], []>} : vector<2x64xf32>, vector<64x128xf32>, vector<2x128xf32> -> vector<2x128xf32>
    %275 = vector.broadcast %131 : vector<1x128xf32> to vector<2x128xf32>
    %276 = arith.addf %274, %275 : vector<2x128xf32>
    %277 = vector.extract_strided_slice %276 {offsets = [0, 0], sizes = [2, 96], strides = [1, 1]} : vector<2x128xf32> to vector<2x96xf32>
    %278 = arith.negf %277 : vector<2x96xf32>
    %279 = math.exp %278 : vector<2x96xf32>
    %cst_104 = arith.constant 1.000000e+00 : f32
    %280 = vector.broadcast %cst_104 : f32 to vector<2x96xf32>
    %281 = arith.addf %280, %279 : vector<2x96xf32>
    %282 = arith.divf %280, %281 : vector<2x96xf32>
    %283 = vector.extract_strided_slice %276 {offsets = [0, 96], sizes = [2, 32], strides = [1, 1]} : vector<2x128xf32> to vector<2x32xf32>
    %284 = math.tanh %283 : vector<2x32xf32>
    %285 = vector.extract_strided_slice %282 {offsets = [0, 32], sizes = [2, 32], strides = [1, 1]} : vector<2x96xf32> to vector<2x32xf32>
    %286 = arith.mulf %285, %249 : vector<2x32xf32>
    %287 = vector.extract_strided_slice %282 {offsets = [0, 0], sizes = [2, 32], strides = [1, 1]} : vector<2x96xf32> to vector<2x32xf32>
    %288 = arith.mulf %287, %284 : vector<2x32xf32>
    %289 = arith.addf %286, %288 : vector<2x32xf32>
    %290 = vector.extract_strided_slice %282 {offsets = [0, 64], sizes = [2, 32], strides = [1, 1]} : vector<2x96xf32> to vector<2x32xf32>
    %291 = math.tanh %289 : vector<2x32xf32>
    %292 = arith.mulf %290, %291 : vector<2x32xf32>
    %293 = vector.extract_strided_slice %128 {offsets = [0, 4, 0], sizes = [2, 1, 128], strides = [1, 1, 1]} : vector<2x8x128xf32> to vector<2x1x128xf32>
    %294 = vector.shape_cast %293 : vector<2x1x128xf32> to vector<2x128xf32>
    %cst_105 = arith.constant dense<0.000000e+00> : vector<2x128xf32>
    %295 = tpu.matmul %272, %129, %cst_105 {dimension_numbers = #tpu.dot_dimension_numbers<[1], [0], [0], [1], [0, 0, 1, 1], [], []>} : vector<2x32xf32>, vector<32x128xf32>, vector<2x128xf32> -> vector<2x128xf32>
    %296 = arith.addf %294, %295 : vector<2x128xf32>
    %297 = vector.extract_strided_slice %296 {offsets = [0, 0], sizes = [2, 96], strides = [1, 1]} : vector<2x128xf32> to vector<2x96xf32>
    %298 = arith.negf %297 : vector<2x96xf32>
    %299 = math.exp %298 : vector<2x96xf32>
    %cst_106 = arith.constant 1.000000e+00 : f32
    %300 = vector.broadcast %cst_106 : f32 to vector<2x96xf32>
    %301 = arith.addf %300, %299 : vector<2x96xf32>
    %302 = arith.divf %300, %301 : vector<2x96xf32>
    %303 = vector.extract_strided_slice %296 {offsets = [0, 96], sizes = [2, 32], strides = [1, 1]} : vector<2x128xf32> to vector<2x32xf32>
    %304 = math.tanh %303 : vector<2x32xf32>
    %305 = vector.extract_strided_slice %302 {offsets = [0, 32], sizes = [2, 32], strides = [1, 1]} : vector<2x96xf32> to vector<2x32xf32>
    %306 = arith.mulf %305, %269 : vector<2x32xf32>
    %307 = vector.extract_strided_slice %302 {offsets = [0, 0], sizes = [2, 32], strides = [1, 1]} : vector<2x96xf32> to vector<2x32xf32>
    %308 = arith.mulf %307, %304 : vector<2x32xf32>
    %309 = arith.addf %306, %308 : vector<2x32xf32>
    %310 = vector.extract_strided_slice %302 {offsets = [0, 64], sizes = [2, 32], strides = [1, 1]} : vector<2x96xf32> to vector<2x32xf32>
    %311 = math.tanh %309 : vector<2x32xf32>
    %312 = arith.mulf %310, %311 : vector<2x32xf32>
    %313 = tpu.concatenate %312, %292 in 1 : vector<2x32xf32>, vector<2x32xf32> -> vector<2x64xf32>
    %cst_107 = arith.constant dense<0.000000e+00> : vector<2x128xf32>
    %314 = tpu.matmul %313, %130, %cst_107 {dimension_numbers = #tpu.dot_dimension_numbers<[1], [0], [0], [1], [0, 0, 1, 1], [], []>} : vector<2x64xf32>, vector<64x128xf32>, vector<2x128xf32> -> vector<2x128xf32>
    %315 = vector.broadcast %131 : vector<1x128xf32> to vector<2x128xf32>
    %316 = arith.addf %314, %315 : vector<2x128xf32>
    %317 = vector.extract_strided_slice %316 {offsets = [0, 0], sizes = [2, 96], strides = [1, 1]} : vector<2x128xf32> to vector<2x96xf32>
    %318 = arith.negf %317 : vector<2x96xf32>
    %319 = math.exp %318 : vector<2x96xf32>
    %cst_108 = arith.constant 1.000000e+00 : f32
    %320 = vector.broadcast %cst_108 : f32 to vector<2x96xf32>
    %321 = arith.addf %320, %319 : vector<2x96xf32>
    %322 = arith.divf %320, %321 : vector<2x96xf32>
    %323 = vector.extract_strided_slice %316 {offsets = [0, 96], sizes = [2, 32], strides = [1, 1]} : vector<2x128xf32> to vector<2x32xf32>
    %324 = math.tanh %323 : vector<2x32xf32>
    %325 = vector.extract_strided_slice %322 {offsets = [0, 32], sizes = [2, 32], strides = [1, 1]} : vector<2x96xf32> to vector<2x32xf32>
    %326 = arith.mulf %325, %289 : vector<2x32xf32>
    %327 = vector.extract_strided_slice %322 {offsets = [0, 0], sizes = [2, 32], strides = [1, 1]} : vector<2x96xf32> to vector<2x32xf32>
    %328 = arith.mulf %327, %324 : vector<2x32xf32>
    %329 = arith.addf %326, %328 : vector<2x32xf32>
    %330 = vector.extract_strided_slice %322 {offsets = [0, 64], sizes = [2, 32], strides = [1, 1]} : vector<2x96xf32> to vector<2x32xf32>
    %331 = math.tanh %329 : vector<2x32xf32>
    %332 = arith.mulf %330, %331 : vector<2x32xf32>
    %333 = vector.extract_strided_slice %128 {offsets = [0, 5, 0], sizes = [2, 1, 128], strides = [1, 1, 1]} : vector<2x8x128xf32> to vector<2x1x128xf32>
    %334 = vector.shape_cast %333 : vector<2x1x128xf32> to vector<2x128xf32>
    %cst_109 = arith.constant dense<0.000000e+00> : vector<2x128xf32>
    %335 = tpu.matmul %312, %129, %cst_109 {dimension_numbers = #tpu.dot_dimension_numbers<[1], [0], [0], [1], [0, 0, 1, 1], [], []>} : vector<2x32xf32>, vector<32x128xf32>, vector<2x128xf32> -> vector<2x128xf32>
    %336 = arith.addf %334, %335 : vector<2x128xf32>
    %337 = vector.extract_strided_slice %336 {offsets = [0, 0], sizes = [2, 96], strides = [1, 1]} : vector<2x128xf32> to vector<2x96xf32>
    %338 = arith.negf %337 : vector<2x96xf32>
    %339 = math.exp %338 : vector<2x96xf32>
    %cst_110 = arith.constant 1.000000e+00 : f32
    %340 = vector.broadcast %cst_110 : f32 to vector<2x96xf32>
    %341 = arith.addf %340, %339 : vector<2x96xf32>
    %342 = arith.divf %340, %341 : vector<2x96xf32>
    %343 = vector.extract_strided_slice %336 {offsets = [0, 96], sizes = [2, 32], strides = [1, 1]} : vector<2x128xf32> to vector<2x32xf32>
    %344 = math.tanh %343 : vector<2x32xf32>
    %345 = vector.extract_strided_slice %342 {offsets = [0, 32], sizes = [2, 32], strides = [1, 1]} : vector<2x96xf32> to vector<2x32xf32>
    %346 = arith.mulf %345, %309 : vector<2x32xf32>
    %347 = vector.extract_strided_slice %342 {offsets = [0, 0], sizes = [2, 32], strides = [1, 1]} : vector<2x96xf32> to vector<2x32xf32>
    %348 = arith.mulf %347, %344 : vector<2x32xf32>
    %349 = arith.addf %346, %348 : vector<2x32xf32>
    %350 = vector.extract_strided_slice %342 {offsets = [0, 64], sizes = [2, 32], strides = [1, 1]} : vector<2x96xf32> to vector<2x32xf32>
    %351 = math.tanh %349 : vector<2x32xf32>
    %352 = arith.mulf %350, %351 : vector<2x32xf32>
    %353 = tpu.concatenate %352, %332 in 1 : vector<2x32xf32>, vector<2x32xf32> -> vector<2x64xf32>
    %cst_111 = arith.constant dense<0.000000e+00> : vector<2x128xf32>
    %354 = tpu.matmul %353, %130, %cst_111 {dimension_numbers = #tpu.dot_dimension_numbers<[1], [0], [0], [1], [0, 0, 1, 1], [], []>} : vector<2x64xf32>, vector<64x128xf32>, vector<2x128xf32> -> vector<2x128xf32>
    %355 = vector.broadcast %131 : vector<1x128xf32> to vector<2x128xf32>
    %356 = arith.addf %354, %355 : vector<2x128xf32>
    %357 = vector.extract_strided_slice %356 {offsets = [0, 0], sizes = [2, 96], strides = [1, 1]} : vector<2x128xf32> to vector<2x96xf32>
    %358 = arith.negf %357 : vector<2x96xf32>
    %359 = math.exp %358 : vector<2x96xf32>
    %cst_112 = arith.constant 1.000000e+00 : f32
    %360 = vector.broadcast %cst_112 : f32 to vector<2x96xf32>
    %361 = arith.addf %360, %359 : vector<2x96xf32>
    %362 = arith.divf %360, %361 : vector<2x96xf32>
    %363 = vector.extract_strided_slice %356 {offsets = [0, 96], sizes = [2, 32], strides = [1, 1]} : vector<2x128xf32> to vector<2x32xf32>
    %364 = math.tanh %363 : vector<2x32xf32>
    %365 = vector.extract_strided_slice %362 {offsets = [0, 32], sizes = [2, 32], strides = [1, 1]} : vector<2x96xf32> to vector<2x32xf32>
    %366 = arith.mulf %365, %329 : vector<2x32xf32>
    %367 = vector.extract_strided_slice %362 {offsets = [0, 0], sizes = [2, 32], strides = [1, 1]} : vector<2x96xf32> to vector<2x32xf32>
    %368 = arith.mulf %367, %364 : vector<2x32xf32>
    %369 = arith.addf %366, %368 : vector<2x32xf32>
    %370 = vector.extract_strided_slice %362 {offsets = [0, 64], sizes = [2, 32], strides = [1, 1]} : vector<2x96xf32> to vector<2x32xf32>
    %371 = math.tanh %369 : vector<2x32xf32>
    %372 = arith.mulf %370, %371 : vector<2x32xf32>
    %373 = vector.extract_strided_slice %128 {offsets = [0, 6, 0], sizes = [2, 1, 128], strides = [1, 1, 1]} : vector<2x8x128xf32> to vector<2x1x128xf32>
    %374 = vector.shape_cast %373 : vector<2x1x128xf32> to vector<2x128xf32>
    %cst_113 = arith.constant dense<0.000000e+00> : vector<2x128xf32>
    %375 = tpu.matmul %352, %129, %cst_113 {dimension_numbers = #tpu.dot_dimension_numbers<[1], [0], [0], [1], [0, 0, 1, 1], [], []>} : vector<2x32xf32>, vector<32x128xf32>, vector<2x128xf32> -> vector<2x128xf32>
    %376 = arith.addf %374, %375 : vector<2x128xf32>
    %377 = vector.extract_strided_slice %376 {offsets = [0, 0], sizes = [2, 96], strides = [1, 1]} : vector<2x128xf32> to vector<2x96xf32>
    %378 = arith.negf %377 : vector<2x96xf32>
    %379 = math.exp %378 : vector<2x96xf32>
    %cst_114 = arith.constant 1.000000e+00 : f32
    %380 = vector.broadcast %cst_114 : f32 to vector<2x96xf32>
    %381 = arith.addf %380, %379 : vector<2x96xf32>
    %382 = arith.divf %380, %381 : vector<2x96xf32>
    %383 = vector.extract_strided_slice %376 {offsets = [0, 96], sizes = [2, 32], strides = [1, 1]} : vector<2x128xf32> to vector<2x32xf32>
    %384 = math.tanh %383 : vector<2x32xf32>
    %385 = vector.extract_strided_slice %382 {offsets = [0, 32], sizes = [2, 32], strides = [1, 1]} : vector<2x96xf32> to vector<2x32xf32>
    %386 = arith.mulf %385, %349 : vector<2x32xf32>
    %387 = vector.extract_strided_slice %382 {offsets = [0, 0], sizes = [2, 32], strides = [1, 1]} : vector<2x96xf32> to vector<2x32xf32>
    %388 = arith.mulf %387, %384 : vector<2x32xf32>
    %389 = arith.addf %386, %388 : vector<2x32xf32>
    %390 = vector.extract_strided_slice %382 {offsets = [0, 64], sizes = [2, 32], strides = [1, 1]} : vector<2x96xf32> to vector<2x32xf32>
    %391 = math.tanh %389 : vector<2x32xf32>
    %392 = arith.mulf %390, %391 : vector<2x32xf32>
    %393 = tpu.concatenate %392, %372 in 1 : vector<2x32xf32>, vector<2x32xf32> -> vector<2x64xf32>
    %cst_115 = arith.constant dense<0.000000e+00> : vector<2x128xf32>
    %394 = tpu.matmul %393, %130, %cst_115 {dimension_numbers = #tpu.dot_dimension_numbers<[1], [0], [0], [1], [0, 0, 1, 1], [], []>} : vector<2x64xf32>, vector<64x128xf32>, vector<2x128xf32> -> vector<2x128xf32>
    %395 = vector.broadcast %131 : vector<1x128xf32> to vector<2x128xf32>
    %396 = arith.addf %394, %395 : vector<2x128xf32>
    %397 = vector.extract_strided_slice %396 {offsets = [0, 0], sizes = [2, 96], strides = [1, 1]} : vector<2x128xf32> to vector<2x96xf32>
    %398 = arith.negf %397 : vector<2x96xf32>
    %399 = math.exp %398 : vector<2x96xf32>
    %cst_116 = arith.constant 1.000000e+00 : f32
    %400 = vector.broadcast %cst_116 : f32 to vector<2x96xf32>
    %401 = arith.addf %400, %399 : vector<2x96xf32>
    %402 = arith.divf %400, %401 : vector<2x96xf32>
    %403 = vector.extract_strided_slice %396 {offsets = [0, 96], sizes = [2, 32], strides = [1, 1]} : vector<2x128xf32> to vector<2x32xf32>
    %404 = math.tanh %403 : vector<2x32xf32>
    %405 = vector.extract_strided_slice %402 {offsets = [0, 32], sizes = [2, 32], strides = [1, 1]} : vector<2x96xf32> to vector<2x32xf32>
    %406 = arith.mulf %405, %369 : vector<2x32xf32>
    %407 = vector.extract_strided_slice %402 {offsets = [0, 0], sizes = [2, 32], strides = [1, 1]} : vector<2x96xf32> to vector<2x32xf32>
    %408 = arith.mulf %407, %404 : vector<2x32xf32>
    %409 = arith.addf %406, %408 : vector<2x32xf32>
    %410 = vector.extract_strided_slice %402 {offsets = [0, 64], sizes = [2, 32], strides = [1, 1]} : vector<2x96xf32> to vector<2x32xf32>
    %411 = math.tanh %409 : vector<2x32xf32>
    %412 = arith.mulf %410, %411 : vector<2x32xf32>
    %413 = vector.extract_strided_slice %128 {offsets = [0, 7, 0], sizes = [2, 1, 128], strides = [1, 1, 1]} : vector<2x8x128xf32> to vector<2x1x128xf32>
    %414 = vector.shape_cast %413 : vector<2x1x128xf32> to vector<2x128xf32>
    %cst_117 = arith.constant dense<0.000000e+00> : vector<2x128xf32>
    %415 = tpu.matmul %392, %129, %cst_117 {dimension_numbers = #tpu.dot_dimension_numbers<[1], [0], [0], [1], [0, 0, 1, 1], [], []>} : vector<2x32xf32>, vector<32x128xf32>, vector<2x128xf32> -> vector<2x128xf32>
    %416 = arith.addf %414, %415 : vector<2x128xf32>
    %417 = vector.extract_strided_slice %416 {offsets = [0, 0], sizes = [2, 96], strides = [1, 1]} : vector<2x128xf32> to vector<2x96xf32>
    %418 = arith.negf %417 : vector<2x96xf32>
    %419 = math.exp %418 : vector<2x96xf32>
    %cst_118 = arith.constant 1.000000e+00 : f32
    %420 = vector.broadcast %cst_118 : f32 to vector<2x96xf32>
    %421 = arith.addf %420, %419 : vector<2x96xf32>
    %422 = arith.divf %420, %421 : vector<2x96xf32>
    %423 = vector.extract_strided_slice %416 {offsets = [0, 96], sizes = [2, 32], strides = [1, 1]} : vector<2x128xf32> to vector<2x32xf32>
    %424 = math.tanh %423 : vector<2x32xf32>
    %425 = vector.extract_strided_slice %422 {offsets = [0, 32], sizes = [2, 32], strides = [1, 1]} : vector<2x96xf32> to vector<2x32xf32>
    %426 = arith.mulf %425, %389 : vector<2x32xf32>
    %427 = vector.extract_strided_slice %422 {offsets = [0, 0], sizes = [2, 32], strides = [1, 1]} : vector<2x96xf32> to vector<2x32xf32>
    %428 = arith.mulf %427, %424 : vector<2x32xf32>
    %429 = arith.addf %426, %428 : vector<2x32xf32>
    %430 = vector.extract_strided_slice %422 {offsets = [0, 64], sizes = [2, 32], strides = [1, 1]} : vector<2x96xf32> to vector<2x32xf32>
    %431 = math.tanh %429 : vector<2x32xf32>
    %432 = arith.mulf %430, %431 : vector<2x32xf32>
    %433 = tpu.concatenate %432, %412 in 1 : vector<2x32xf32>, vector<2x32xf32> -> vector<2x64xf32>
    %cst_119 = arith.constant dense<0.000000e+00> : vector<2x128xf32>
    %434 = tpu.matmul %433, %130, %cst_119 {dimension_numbers = #tpu.dot_dimension_numbers<[1], [0], [0], [1], [0, 0, 1, 1], [], []>} : vector<2x64xf32>, vector<64x128xf32>, vector<2x128xf32> -> vector<2x128xf32>
    %435 = vector.broadcast %131 : vector<1x128xf32> to vector<2x128xf32>
    %436 = arith.addf %434, %435 : vector<2x128xf32>
    %437 = vector.extract_strided_slice %436 {offsets = [0, 0], sizes = [2, 96], strides = [1, 1]} : vector<2x128xf32> to vector<2x96xf32>
    %438 = arith.negf %437 : vector<2x96xf32>
    %439 = math.exp %438 : vector<2x96xf32>
    %cst_120 = arith.constant 1.000000e+00 : f32
    %440 = vector.broadcast %cst_120 : f32 to vector<2x96xf32>
    %441 = arith.addf %440, %439 : vector<2x96xf32>
    %442 = arith.divf %440, %441 : vector<2x96xf32>
    %443 = vector.extract_strided_slice %436 {offsets = [0, 96], sizes = [2, 32], strides = [1, 1]} : vector<2x128xf32> to vector<2x32xf32>
    %444 = math.tanh %443 : vector<2x32xf32>
    %445 = vector.extract_strided_slice %442 {offsets = [0, 32], sizes = [2, 32], strides = [1, 1]} : vector<2x96xf32> to vector<2x32xf32>
    %446 = arith.mulf %445, %409 : vector<2x32xf32>
    %447 = vector.extract_strided_slice %442 {offsets = [0, 0], sizes = [2, 32], strides = [1, 1]} : vector<2x96xf32> to vector<2x32xf32>
    %448 = arith.mulf %447, %444 : vector<2x32xf32>
    %449 = arith.addf %446, %448 : vector<2x32xf32>
    %450 = vector.extract_strided_slice %442 {offsets = [0, 64], sizes = [2, 32], strides = [1, 1]} : vector<2x96xf32> to vector<2x32xf32>
    %451 = math.tanh %449 : vector<2x32xf32>
    %452 = arith.mulf %450, %451 : vector<2x32xf32>
    %453 = vector.shape_cast %172 : vector<2x32xf32> to vector<2x1x32xf32>
    %454 = vector.shape_cast %212 : vector<2x32xf32> to vector<2x1x32xf32>
    %455 = vector.shape_cast %252 : vector<2x32xf32> to vector<2x1x32xf32>
    %456 = vector.shape_cast %292 : vector<2x32xf32> to vector<2x1x32xf32>
    %457 = vector.shape_cast %332 : vector<2x32xf32> to vector<2x1x32xf32>
    %458 = vector.shape_cast %372 : vector<2x32xf32> to vector<2x1x32xf32>
    %459 = vector.shape_cast %412 : vector<2x32xf32> to vector<2x1x32xf32>
    %460 = vector.shape_cast %452 : vector<2x32xf32> to vector<2x1x32xf32>
    %461 = tpu.concatenate %453, %454, %455, %456, %457, %458, %459, %460 in 1 : vector<2x1x32xf32>, vector<2x1x32xf32>, vector<2x1x32xf32>, vector<2x1x32xf32>, vector<2x1x32xf32>, vector<2x1x32xf32>, vector<2x1x32xf32>, vector<2x1x32xf32> -> vector<2x8x32xf32>
    %462 = arith.addf %461, %121 : vector<2x8x32xf32>
    %463 = vector.shape_cast %462 : vector<2x8x32xf32> to vector<16x32xf32>
    %c0_121 = arith.constant 0 : index
    %c0_122 = arith.constant 0 : index
    %464 = vector.load %arg11[%c0_121, %c0_122] : memref<32x8xf32, #tpu.memory_space<vmem>>, vector<32x8xf32>
    %cst_123 = arith.constant dense<0.000000e+00> : vector<16x8xf32>
    %465 = tpu.matmul %463, %464, %cst_123 {dimension_numbers = #tpu.dot_dimension_numbers<[1], [0], [0], [1], [0, 0, 1, 1], [], []>} : vector<16x32xf32>, vector<32x8xf32>, vector<16x8xf32> -> vector<16x8xf32>
    %c0_124 = arith.constant 0 : index
    %c0_125 = arith.constant 0 : index
    %466 = vector.load %arg12[%c0_124, %c0_125] : memref<1x8xf32, #tpu.memory_space<vmem>>, vector<1x8xf32>
    %467 = vector.broadcast %466 : vector<1x8xf32> to vector<16x8xf32>
    %468 = arith.addf %465, %467 : vector<16x8xf32>
    %469 = arith.negf %468 : vector<16x8xf32>
    %470 = math.exp %469 : vector<16x8xf32>
    %cst_126 = arith.constant 1.000000e+00 : f32
    %471 = vector.broadcast %cst_126 : f32 to vector<16x8xf32>
    %472 = arith.addf %471, %470 : vector<16x8xf32>
    %473 = arith.divf %471, %472 : vector<16x8xf32>
    %474 = vector.shape_cast %473 : vector<16x8xf32> to vector<2x8x8xf32>
    %c0_127 = arith.constant 0 : index
    %c0_128 = arith.constant 0 : index
    %c0_129 = arith.constant 0 : index
    %475 = vector.load %arg13[%c0_127, %c0_128, %c0_129] : memref<2x8x8xf32, #tpu.memory_space<vmem>>, vector<2x8x8xf32>
    tpu.vector_store %arg13[%c0_127, %c0_128, %c0_129], %474 {strides = array<i32>} : memref<2x8x8xf32, #tpu.memory_space<vmem>>, vector<2x8x8xf32>,
    return
  }
}

</mosaic_0001>

<llo_original>
// kernel: inference_forward.1
$region0: #{inference_forward.1}
  #allocation0 [shape = 'u32[]', space=smem, size = 0x4, offset = 0x4, fixed_abs, tag = 'smem constant byte address 0x4 - core index']
  #allocation1 [shape = 'u32[144,128]{1,0:T(1,128)}', space=vmem, size = 0x12000, scoped, tag = 'internal scratch']
  #allocation2 [shape = 'f32[2,14,32]{2,1,0:T(8,128)}', space=vmem, size = 0x4000, scoped, tag = 'scratch operand']
  %s0 = inlined_call_operand.vmem [shape: s32[16,1], index: 0, kind: input, shape index: {}]
  %s1 = inlined_call_operand.hbm [shape: f32[32,32], index: 1, kind: input, shape index: {}]
  %s2 = inlined_call_operand.hbm [shape: f32[7,32,64], index: 2, kind: input, shape index: {}]
  %s3 = inlined_call_operand.hbm [shape: f32[1,64], index: 3, kind: input, shape index: {}]
  %s4 = inlined_call_operand.hbm [shape: f32[7,32,64], index: 4, kind: input, shape index: {}]
  %s5 = inlined_call_operand.hbm [shape: f32[1,64], index: 5, kind: input, shape index: {}]
  %s6 = inlined_call_operand.hbm [shape: f32[32,128], index: 6, kind: input, shape index: {}]
  %s7 = inlined_call_operand.hbm [shape: f32[32,128], index: 7, kind: input, shape index: {}]
  %s8 = inlined_call_operand.hbm [shape: f32[1,128], index: 8, kind: input, shape index: {}]
  %s9 = inlined_call_operand.vmem [shape: f32[64,128], index: 9, kind: input, shape index: {}]
  %s10 = inlined_call_operand.hbm [shape: f32[1,128], index: 10, kind: input, shape index: {}]
  %s11 = inlined_call_operand.vmem [shape: f32[32,8], index: 11, kind: input, shape index: {}]
  %s12 = inlined_call_operand.vmem [shape: f32[1,8], index: 12, kind: input, shape index: {}]
  %s13 = inlined_call_operand.hbm [shape: f32[2,8,8], index: 13, kind: output, shape index: {}]
  %s14 = sld [smem:[#allocation0]]
  $region98: #{inference_forward.1} parent=0
    _
  %s16 = ssub.s32 1, %s14
  %s17 = scalar_select 0, %s16, %s14
  $region1: #{inference_forward.1} parent=0
    #allocation3 [shape = 'u8[16384]{0}', space=vmem, size = 0x4000, scoped, tag = 'input window, operand 1, single buffered']
    #allocation4 [shape = 's32[1]{0}', space=sflag, size = 0x4, scoped, tag = 'scoped memory for inference_forward.1']
    #allocation5 [shape = 's32[1]{0}', space=sflag, size = 0x4, scoped, tag = 'scoped memory for inference_forward.1']
    #allocation6 [shape = 'u8[114688]{0}', space=vmem, size = 0x1c000, scoped, tag = 'input window, operand 2, single buffered']
    #allocation7 [shape = 's32[1]{0}', space=sflag, size = 0x4, scoped, tag = 'scoped memory for inference_forward.1']
    #allocation8 [shape = 'u8[512]{0}', space=vmem, size = 0x400, scoped, tag = 'input window, operand 3, single buffered']
    #allocation9 [shape = 'u8[114688]{0}', space=vmem, size = 0x1c000, scoped, tag = 'input window, operand 4, single buffered']
    #allocation10 [shape = 's32[1]{0}', space=sflag, size = 0x4, scoped, tag = 'scoped memory for inference_forward.1']
    #allocation11 [shape = 'u8[512]{0}', space=vmem, size = 0x400, scoped, tag = 'input window, operand 5, single buffered']
    #allocation12 [shape = 'u8[16384]{0}', space=vmem, size = 0x4000, scoped, tag = 'input window, operand 6, single buffered']
    #allocation13 [shape = 's32[1]{0}', space=sflag, size = 0x4, scoped, tag = 'scoped memory for inference_forward.1']
    #allocation14 [shape = 'u8[16384]{0}', space=vmem, size = 0x4000, scoped, tag = 'input window, operand 7, single buffered']
    #allocation15 [shape = 'u8[512]{0}', space=vmem, size = 0x400, scoped, tag = 'input window, operand 8, single buffered']
    #allocation16 [shape = 's32[1]{0}', space=sflag, size = 0x4, scoped, tag = 'scoped memory for inference_forward.1']
    #allocation17 [shape = 'u8[512]{0}', space=vmem, size = 0x400, scoped, tag = 'input window, operand 10, single buffered']
    #allocation18 [shape = 'u8[8192]{0}', space=vmem, size = 0x2000, scoped, tag = 'output window, operand 0, single buffered']
    %18 = vsyncpa [#allocation4], 0
    %19 = vsyncpa [#allocation7], 0
    %20 = vsyncpa [#allocation10], 0
    %21 = vsyncpa [#allocation13], 0
    %22 = vsyncpa [#allocation16], 0
    %23 = vsyncpa [#allocation5], 0
    // Predicated region
    $region2: #{inference_forward.1} parent=1 // pred_check
      _
    $region3: #{inference_forward.1} parent=1 // pred_check_branch
      %25 = sbr.rel (0) target = $region5
    $region4: #{inference_forward.1} parent=1 // pred_region
      _
    $region5: #{inference_forward.1} parent=1 // pred_fallthru
      _
    // Predicated region
    $region6: #{inference_forward.1} parent=1 // pred_check
      _
    $region7: #{inference_forward.1} parent=1 // pred_check_branch
      %27 = sbr.rel (0) target = $region9
    $region8: #{inference_forward.1} parent=1 // pred_region
      %s29 = ssub.s32 512, 512
      %30 = vsyncadd [#allocation4], %s29
      %s31 = sshll.u32 [#allocation3], 4
      %s32 = int_to_ptr.vmem [resolvable:$true] %s31
      %37 = dma.hbm_to_vmem [thread:$0]  %s1, 512, %s32, [#allocation4], 128, 128, 8
    $region9: #{inference_forward.1} parent=1 // pred_fallthru
      _
    // Predicated region
    $region10: #{inference_forward.1} parent=1 // pred_check
      _
    $region11: #{inference_forward.1} parent=1 // pred_check_branch
      %39 = sbr.rel (0) target = $region13
    $region12: #{inference_forward.1} parent=1 // pred_region
      %s41 = ssub.s32 3584, 3584
      %42 = vsyncadd [#allocation7], %s41
      %s43 = sshll.u32 [#allocation6], 4
      %s44 = int_to_ptr.vmem [resolvable:$true] %s43
      %49 = dma.hbm_to_vmem [thread:$0]  %s2, 3584, %s44, [#allocation7], 128, 128, 8
    $region13: #{inference_forward.1} parent=1 // pred_fallthru
      _
    // Predicated region
    $region14: #{inference_forward.1} parent=1 // pred_check
      _
    $region15: #{inference_forward.1} parent=1 // pred_check_branch
      %51 = sbr.rel (0) target = $region17
    $region16: #{inference_forward.1} parent=1 // pred_region
      %s53 = ssub.s32 16, 16
      %54 = vsyncadd [#allocation7], %s53
      %s56 = sshll.u32 [#allocation8], 4
      %s57 = int_to_ptr.vmem [resolvable:$true] %s56
      %59 = dma.hbm_to_vmem [thread:$0]  %s3, 16, %s57, [#allocation7]
    $region17: #{inference_forward.1} parent=1 // pred_fallthru
      _
    // Predicated region
    $region18: #{inference_forward.1} parent=1 // pred_check
      _
    $region19: #{inference_forward.1} parent=1 // pred_check_branch
      %61 = sbr.rel (0) target = $region21
    $region20: #{inference_forward.1} parent=1 // pred_region
      %s63 = ssub.s32 3584, 3584
      %64 = vsyncadd [#allocation10], %s63
      %s65 = sshll.u32 [#allocation9], 4
      %s66 = int_to_ptr.vmem [resolvable:$true] %s65
      %71 = dma.hbm_to_vmem [thread:$0]  %s4, 3584, %s66, [#allocation10], 128, 128, 8
    $region21: #{inference_forward.1} parent=1 // pred_fallthru
      _
    // Predicated region
    $region22: #{inference_forward.1} parent=1 // pred_check
      _
    $region23: #{inference_forward.1} parent=1 // pred_check_branch
      %73 = sbr.rel (0) target = $region25
    $region24: #{inference_forward.1} parent=1 // pred_region
      %s75 = ssub.s32 16, 16
      %76 = vsyncadd [#allocation10], %s75
      %s78 = sshll.u32 [#allocation11], 4
      %s79 = int_to_ptr.vmem [resolvable:$true] %s78
      %81 = dma.hbm_to_vmem [thread:$0]  %s5, 16, %s79, [#allocation10]
    $region25: #{inference_forward.1} parent=1 // pred_fallthru
      _
    // Predicated region
    $region26: #{inference_forward.1} parent=1 // pred_check
      _
    $region27: #{inference_forward.1} parent=1 // pred_check_branch
      %83 = sbr.rel (0) target = $region29
    $region28: #{inference_forward.1} parent=1 // pred_region
      %s85 = ssub.s32 512, 512
      %86 = vsyncadd [#allocation13], %s85
      %s87 = sshll.u32 [#allocation12], 4
      %s88 = int_to_ptr.vmem [resolvable:$true] %s87
      %93 = dma.hbm_to_vmem [thread:$0]  %s6, 512, %s88, [#allocation13], 128, 128, 8
    $region29: #{inference_forward.1} parent=1 // pred_fallthru
      _
    // Predicated region
    $region30: #{inference_forward.1} parent=1 // pred_check
      _
    $region31: #{inference_forward.1} parent=1 // pred_check_branch
      %95 = sbr.rel (0) target = $region33
    $region32: #{inference_forward.1} parent=1 // pred_region
      %s97 = ssub.s32 512, 512
      %98 = vsyncadd [#allocation13], %s97
      %s99 = sshll.u32 [#allocation14], 4
      %s100 = int_to_ptr.vmem [resolvable:$true] %s99
      %105 = dma.hbm_to_vmem [thread:$0]  %s7, 512, %s100, [#allocation13], 128, 128, 8
    $region33: #{inference_forward.1} parent=1 // pred_fallthru
      _
    // Predicated region
    $region34: #{inference_forward.1} parent=1 // pred_check
      _
    $region35: #{inference_forward.1} parent=1 // pred_check_branch
      %107 = sbr.rel (0) target = $region37
    $region36: #{inference_forward.1} parent=1 // pred_region
      %s109 = ssub.s32 16, 16
      %110 = vsyncadd [#allocation16], %s109
      %s112 = sshll.u32 [#allocation15], 4
      %s113 = int_to_ptr.vmem [resolvable:$true] %s112
      %115 = dma.hbm_to_vmem [thread:$0]  %s8, 16, %s113, [#allocation16]
    $region37: #{inference_forward.1} parent=1 // pred_fallthru
      _
    // Predicated region
    $region38: #{inference_forward.1} parent=1 // pred_check
      _
    $region39: #{inference_forward.1} parent=1 // pred_check_branch
      %117 = sbr.rel (0) target = $region41
    $region40: #{inference_forward.1} parent=1 // pred_region
      _
    $region41: #{inference_forward.1} parent=1 // pred_fallthru
      _
    // Predicated region
    $region42: #{inference_forward.1} parent=1 // pred_check
      _
    $region43: #{inference_forward.1} parent=1 // pred_check_branch
      %119 = sbr.rel (0) target = $region45
    $region44: #{inference_forward.1} parent=1 // pred_region
      %s121 = ssub.s32 16, 16
      %122 = vsyncadd [#allocation16], %s121
      %s124 = sshll.u32 [#allocation17], 4
      %s125 = int_to_ptr.vmem [resolvable:$true] %s124
      %127 = dma.hbm_to_vmem [thread:$0]  %s10, 16, %s125, [#allocation16]
    $region45: #{inference_forward.1} parent=1 // pred_fallthru
      _
    // Predicated region
    $region46: #{inference_forward.1} parent=1 // pred_check
      _
    $region47: #{inference_forward.1} parent=1 // pred_check_branch
      %129 = sbr.rel (0) target = $region49
    $region48: #{inference_forward.1} parent=1 // pred_region
      _
    $region49: #{inference_forward.1} parent=1 // pred_fallthru
      _
    // Predicated region
    $region50: #{inference_forward.1} parent=1 // pred_check
      _
    $region51: #{inference_forward.1} parent=1 // pred_check_branch
      %131 = sbr.rel (0) target = $region53
    $region52: #{inference_forward.1} parent=1 // pred_region
      _
    $region53: #{inference_forward.1} parent=1 // pred_fallthru
      _
    // Predicated region
    $region54: #{inference_forward.1} parent=1 // pred_check
      _
    $region55: #{inference_forward.1} parent=1 // pred_check_branch
      %133 = sbr.rel (0) target = $region57
    $region56: #{inference_forward.1} parent=1 // pred_region
      %134 = dma.done [#allocation4], 512
    $region57: #{inference_forward.1} parent=1 // pred_fallthru
      _
    // Predicated region
    $region58: #{inference_forward.1} parent=1 // pred_check
      _
    $region59: #{inference_forward.1} parent=1 // pred_check_branch
      %136 = sbr.rel (0) target = $region61
    $region60: #{inference_forward.1} parent=1 // pred_region
      %137 = dma.done [#allocation7], 3584
    $region61: #{inference_forward.1} parent=1 // pred_fallthru
      _
    // Predicated region
    $region62: #{inference_forward.1} parent=1 // pred_check
      _
    $region63: #{inference_forward.1} parent=1 // pred_check_branch
      %139 = sbr.rel (0) target = $region65
    $region64: #{inference_forward.1} parent=1 // pred_region
      %140 = dma.done [#allocation7], 16
    $region65: #{inference_forward.1} parent=1 // pred_fallthru
      _
    // Predicated region
    $region66: #{inference_forward.1} parent=1 // pred_check
      _
    $region67: #{inference_forward.1} parent=1 // pred_check_branch
      %142 = sbr.rel (0) target = $region69
    $region68: #{inference_forward.1} parent=1 // pred_region
      %143 = dma.done [#allocation10], 3584
    $region69: #{inference_forward.1} parent=1 // pred_fallthru
      _
    // Predicated region
    $region70: #{inference_forward.1} parent=1 // pred_check
      _
    $region71: #{inference_forward.1} parent=1 // pred_check_branch
      %145 = sbr.rel (0) target = $region73
    $region72: #{inference_forward.1} parent=1 // pred_region
      %146 = dma.done [#allocation10], 16
    $region73: #{inference_forward.1} parent=1 // pred_fallthru
      _
    // Predicated region
    $region74: #{inference_forward.1} parent=1 // pred_check
      _
    $region75: #{inference_forward.1} parent=1 // pred_check_branch
      %148 = sbr.rel (0) target = $region77
    $region76: #{inference_forward.1} parent=1 // pred_region
      %149 = dma.done [#allocation13], 512
    $region77: #{inference_forward.1} parent=1 // pred_fallthru
      _
    // Predicated region
    $region78: #{inference_forward.1} parent=1 // pred_check
      _
    $region79: #{inference_forward.1} parent=1 // pred_check_branch
      %151 = sbr.rel (0) target = $region81
    $region80: #{inference_forward.1} parent=1 // pred_region
      %152 = dma.done [#allocation13], 512
    $region81: #{inference_forward.1} parent=1 // pred_fallthru
      _
    // Predicated region
    $region82: #{inference_forward.1} parent=1 // pred_check
      _
    $region83: #{inference_forward.1} parent=1 // pred_check_branch
      %154 = sbr.rel (0) target = $region85
    $region84: #{inference_forward.1} parent=1 // pred_region
      %155 = dma.done [#allocation16], 16
    $region85: #{inference_forward.1} parent=1 // pred_fallthru
      _
    // Predicated region
    $region86: #{inference_forward.1} parent=1 // pred_check
      _
    $region87: #{inference_forward.1} parent=1 // pred_check_branch
      %157 = sbr.rel (0) target = $region89
    $region88: #{inference_forward.1} parent=1 // pred_region
      %158 = dma.done [#allocation16], 16
    $region89: #{inference_forward.1} parent=1 // pred_fallthru
      _
    %v159 = vld [vmem:[%s0] sm:$0xff]
    %v160 = vld [vmem:[%s0 + $0x8] sm:$0xff]
    %v161 = vlaneseq
    %v162 = vand.u32 %v161, 127
    %163 = vset.pattern.permute.xlu0 0
    %164 = vperm.xlu0 %163, %v159
    %v165 = vpop.permute.xlu0 %164
    %166 = vset.pattern.permute.xlu0 0
    %167 = vperm.xlu0 %166, %v160
    %v168 = vpop.permute.xlu0 %167
    %vm169 = vcmp.eq.s32.totalorder %v165, %v162
    %vm170 = vcmp.eq.s32.totalorder %v168, %v162
    %v171 = vsel %vm169, 1.0, 0.0
    %v172 = vsel %vm170, 1.0, 0.0
    %v173 = vld [vmem:[#allocation3] sm:$0xff]
    %v174 = vld [vmem:[#allocation3 + $0x8] sm:$0xff]
    %v175 = vld [vmem:[#allocation3 + $0x10] sm:$0xff]
    %v176 = vld [vmem:[#allocation3 + $0x18] sm:$0xff]
    %vm177 = vcmask 261120
    %v179 = vsel %vm177, %v171, 0
    %v182 = vsel %vm177, %v172, 0
    %184 = vmatprep.subr.mxu0 0.0
    %185 = vmatpush1.msra.mxu0 0.0
    %186 = vmatprep.subr.mxu0 0.0
    %187 = vmatpush1.msra.mxu0 0.0
    %188 = vmatprep.subr.mxu0 0.0
    %189 = vmatpush1.msra.mxu0 0.0
    %190 = vmatprep.subr.mxu0 0.0
    %191 = vmatpush1.msra.mxu0 0.0
    %192 = vmatprep.subr.mxu0 0.0
    %193 = vmatpush1.msra.mxu0 0.0
    %194 = vmatprep.subr.mxu0 0.0
    %195 = vmatpush1.msra.mxu0 0.0
    %196 = vmatprep.subr.mxu0 0.0
    %197 = vmatpush1.msra.mxu0 0.0
    %198 = vmatprep.subr.mxu0 0.0
    %199 = vmatpush1.msra.mxu0 0.0
    %200 = vmatprep.subr.mxu0 0.0
    %201 = vmatpush1.msra.mxu0 0.0
    %202 = vmatprep.subr.mxu0 0.0
    %203 = vmatpush1.msra.mxu0 0.0
    %204 = vmatprep.subr.mxu0 0.0
    %205 = vmatpush1.msra.mxu0 0.0
    %206 = vmatprep.subr.mxu0 0.0
    %207 = vmatpush1.msra.mxu0 0.0
    %208 = vmatprep.subr.mxu0 0.0
    %209 = vmatpush1.msra.mxu0 %v176
    %210 = vmatprep.subr.mxu0 0.0
    %211 = vmatpush1.msra.mxu0 %v175
    %212 = vmatprep.subr.mxu0 0.0
    %213 = vmatpush1.msra.mxu0 %v174
    %214 = vmatprep.subr.mxu0 0.0
    %215 = vmatpush1.msra.mxu0 %v173
    %216 = vmatprep.subr.mxu0 0.0
    %217 = vmatpush2.msra.mxu0 0.0
    %218 = vmatprep.subr.mxu0 0.0
    %219 = vmatpush2.msra.mxu0 0.0
    %220 = vmatprep.subr.mxu0 0.0
    %221 = vmatpush2.msra.mxu0 0.0
    %222 = vmatprep.subr.mxu0 0.0
    %223 = vmatpush2.msra.mxu0 0.0
    %224 = vmatprep.subr.mxu0 0.0
    %225 = vmatpush2.msra.mxu0 0.0
    %226 = vmatprep.subr.mxu0 0.0
    %227 = vmatpush2.msra.mxu0 0.0
    %228 = vmatprep.subr.mxu0 0.0
    %229 = vmatpush2.msra.mxu0 0.0
    %230 = vmatprep.subr.mxu0 0.0
    %231 = vmatpush2.msra.mxu0 0.0
    %232 = vmatprep.subr.mxu0 0.0
    %233 = vmatpush2.msra.mxu0 0.0
    %234 = vmatprep.subr.mxu0 0.0
    %235 = vmatpush2.msra.mxu0 0.0
    %236 = vmatprep.subr.mxu0 0.0
    %237 = vmatpush2.msra.mxu0 0.0
    %238 = vmatprep.subr.mxu0 0.0
    %239 = vmatpush2.msra.mxu0 0.0
    %240 = vmatprep.subr.mxu0 0.0
    %241 = vmatpush2.msra.mxu0 0.0
    %242 = vmatprep.subr.mxu0 0.0
    %243 = vmatpush2.msra.mxu0 0.0
    %244 = vmatprep.subr.mxu0 0.0
    %245 = vmatpush2.msra.mxu0 0.0
    %246 = vmatprep.subr.mxu0 0.0
    %247 = vmatpush2.msra.mxu0 0.0
    %248 = vmatprep.mubr.f32.mxu0 0.0
    %249 = vmatmul.mubr.f32.gmra.mxu0 %v179
    %v250 = vpop.f32.mrf.mxu0
    %v251 = vadd.f32 0.0, %v250
    %v252 = vpop.f32.mrf.mxu0
    %253 = vmatprep.mubr.f32.mxu0 0.0
    %254 = vmatmul.mubr.f32.gmra.mxu0 %v182
    %v255 = vpop.f32.mrf.mxu0
    %v256 = vadd.f32 0.0, %v255
    %v257 = vpop.f32.mrf.mxu0
    %258 = vdwg.mxu0
    %259 = vst.msk [vmem:[#allocation2] sm:$0xff] %vm177, 0.0
    %vm260 = vcmask 259072
    %261 = vst.msk [vmem:[#allocation2 + $0x8] sm:$0x3f] %vm260, 0.0
    %262 = vst.msk [vmem:[#allocation2 + $0x10] sm:$0xff] %vm177, 0.0
    %263 = vst.msk [vmem:[#allocation2 + $0x18] sm:$0x3f] %vm260, 0.0
    %264 = vst.msk [vmem:[#allocation2 + $0x3] sm:$0xff] %vm177, %v251
    %265 = vst.msk [vmem:[#allocation2 + $0x13] sm:$0xff] %vm177, %v256
    %v266 = vld [vmem:[#allocation2] sm:$0xff]
    %v267 = vld [vmem:[#allocation2 + $0x8] sm:$0x3f]
    %v268 = vld [vmem:[#allocation2 + $0x10] sm:$0xff]
    %v269 = vld [vmem:[#allocation2 + $0x18] sm:$0x3f]
    %v270 = vld [vmem:[#allocation6] sm:$0xff]
    %v271 = vld [vmem:[#allocation6 + $0x8] sm:$0xff]
    %v272 = vld [vmem:[#allocation6 + $0x10] sm:$0xff]
    %v273 = vld [vmem:[#allocation6 + $0x18] sm:$0xff]
    %vm278 = vcmask 1046528
    %v279 = vrot.slane %v266, 1
    %v280 = vrot.slane %v267, 1
    %v281 = vsel %vm278, %v279, %v280
    %v282 = vrot.slane %v268, 1
    %v283 = vrot.slane %v269, 1
    %v284 = vsel %vm278, %v282, %v283
    %s285 = scalar_lea.vmem [#allocation6], 32
    %v286 = vld [vmem:[%s285] sm:$0xff]
    %v287 = vld [vmem:[%s285 + $0x8] sm:$0xff]
    %v288 = vld [vmem:[%s285 + $0x10] sm:$0xff]
    %v289 = vld [vmem:[%s285 + $0x18] sm:$0xff]
    %v290 = vsel %vm177, %v281, 0
    %v292 = vsel %vm177, %v284, 0
    %294 = vmatprep.subr.mxu0 0.0
    %295 = vmatpush1.msra.mxu0 0.0
    %296 = vmatprep.subr.mxu0 0.0
    %297 = vmatpush1.msra.mxu0 0.0
    %298 = vmatprep.subr.mxu0 0.0
    %299 = vmatpush1.msra.mxu0 0.0
    %300 = vmatprep.subr.mxu0 0.0
    %301 = vmatpush1.msra.mxu0 0.0
    %302 = vmatprep.subr.mxu0 0.0
    %303 = vmatpush1.msra.mxu0 0.0
    %304 = vmatprep.subr.mxu0 0.0
    %305 = vmatpush1.msra.mxu0 0.0
    %306 = vmatprep.subr.mxu0 0.0
    %307 = vmatpush1.msra.mxu0 0.0
    %308 = vmatprep.subr.mxu0 0.0
    %309 = vmatpush1.msra.mxu0 0.0
    %310 = vmatprep.subr.mxu0 0.0
    %311 = vmatpush1.msra.mxu0 0.0
    %312 = vmatprep.subr.mxu0 0.0
    %313 = vmatpush1.msra.mxu0 0.0
    %314 = vmatprep.subr.mxu0 0.0
    %315 = vmatpush1.msra.mxu0 0.0
    %316 = vmatprep.subr.mxu0 0.0
    %317 = vmatpush1.msra.mxu0 0.0
    %318 = vmatprep.subr.mxu0 0.0
    %319 = vmatpush1.msra.mxu0 %v289
    %320 = vmatprep.subr.mxu0 0.0
    %321 = vmatpush1.msra.mxu0 %v288
    %322 = vmatprep.subr.mxu0 0.0
    %323 = vmatpush1.msra.mxu0 %v287
    %324 = vmatprep.subr.mxu0 0.0
    %325 = vmatpush1.msra.mxu0 %v286
    %326 = vmatprep.subr.mxu0 0.0
    %327 = vmatpush2.msra.mxu0 0.0
    %328 = vmatprep.subr.mxu0 0.0
    %329 = vmatpush2.msra.mxu0 0.0
    %330 = vmatprep.subr.mxu0 0.0
    %331 = vmatpush2.msra.mxu0 0.0
    %332 = vmatprep.subr.mxu0 0.0
    %333 = vmatpush2.msra.mxu0 0.0
    %334 = vmatprep.subr.mxu0 0.0
    %335 = vmatpush2.msra.mxu0 0.0
    %336 = vmatprep.subr.mxu0 0.0
    %337 = vmatpush2.msra.mxu0 0.0
    %338 = vmatprep.subr.mxu0 0.0
    %339 = vmatpush2.msra.mxu0 0.0
    %340 = vmatprep.subr.mxu0 0.0
    %341 = vmatpush2.msra.mxu0 0.0
    %342 = vmatprep.subr.mxu0 0.0
    %343 = vmatpush2.msra.mxu0 0.0
    %344 = vmatprep.subr.mxu0 0.0
    %345 = vmatpush2.msra.mxu0 0.0
    %346 = vmatprep.subr.mxu0 0.0
    %347 = vmatpush2.msra.mxu0 0.0
    %348 = vmatprep.subr.mxu0 0.0
    %349 = vmatpush2.msra.mxu0 0.0
    %350 = vmatprep.subr.mxu0 0.0
    %351 = vmatpush2.msra.mxu0 0.0
    %352 = vmatprep.subr.mxu0 0.0
    %353 = vmatpush2.msra.mxu0 0.0
    %354 = vmatprep.subr.mxu0 0.0
    %355 = vmatpush2.msra.mxu0 0.0
    %356 = vmatprep.subr.mxu0 0.0
    %357 = vmatpush2.msra.mxu0 0.0
    %358 = vmatprep.mubr.f32.mxu0 0.0
    %359 = vmatmul.mubr.f32.gmra.mxu0 %v290
    %v360 = vpop.f32.mrf.mxu0
    %v361 = vadd.f32 0.0, %v360
    %v362 = vpop.f32.mrf.mxu0
    %363 = vmatprep.mubr.f32.mxu0 0.0
    %364 = vmatmul.mubr.f32.gmra.mxu0 %v292
    %v365 = vpop.f32.mrf.mxu0
    %v366 = vadd.f32 0.0, %v365
    %v367 = vpop.f32.mrf.mxu0
    %368 = vdwg.mxu0
    %v369 = vsel %vm177, %v266, 0
    %v371 = vsel %vm177, %v268, 0
    %373 = vmatprep.subr.mxu0 0.0
    %374 = vmatpush1.msra.mxu0 0.0
    %375 = vmatprep.subr.mxu0 0.0
    %376 = vmatpush1.msra.mxu0 0.0
    %377 = vmatprep.subr.mxu0 0.0
    %378 = vmatpush1.msra.mxu0 0.0
    %379 = vmatprep.subr.mxu0 0.0
    %380 = vmatpush1.msra.mxu0 0.0
    %381 = vmatprep.subr.mxu0 0.0
    %382 = vmatpush1.msra.mxu0 0.0
    %383 = vmatprep.subr.mxu0 0.0
    %384 = vmatpush1.msra.mxu0 0.0
    %385 = vmatprep.subr.mxu0 0.0
    %386 = vmatpush1.msra.mxu0 0.0
    %387 = vmatprep.subr.mxu0 0.0
    %388 = vmatpush1.msra.mxu0 0.0
    %389 = vmatprep.subr.mxu0 0.0
    %390 = vmatpush1.msra.mxu0 0.0
    %391 = vmatprep.subr.mxu0 0.0
    %392 = vmatpush1.msra.mxu0 0.0
    %393 = vmatprep.subr.mxu0 0.0
    %394 = vmatpush1.msra.mxu0 0.0
    %395 = vmatprep.subr.mxu0 0.0
    %396 = vmatpush1.msra.mxu0 0.0
    %397 = vmatprep.subr.mxu0 0.0
    %398 = vmatpush1.msra.mxu0 %v273
    %399 = vmatprep.subr.mxu0 0.0
    %400 = vmatpush1.msra.mxu0 %v272
    %401 = vmatprep.subr.mxu0 0.0
    %402 = vmatpush1.msra.mxu0 %v271
    %403 = vmatprep.subr.mxu0 0.0
    %404 = vmatpush1.msra.mxu0 %v270
    %405 = vmatprep.subr.mxu0 0.0
    %406 = vmatpush2.msra.mxu0 0.0
    %407 = vmatprep.subr.mxu0 0.0
    %408 = vmatpush2.msra.mxu0 0.0
    %409 = vmatprep.subr.mxu0 0.0
    %410 = vmatpush2.msra.mxu0 0.0
    %411 = vmatprep.subr.mxu0 0.0
    %412 = vmatpush2.msra.mxu0 0.0
    %413 = vmatprep.subr.mxu0 0.0
    %414 = vmatpush2.msra.mxu0 0.0
    %415 = vmatprep.subr.mxu0 0.0
    %416 = vmatpush2.msra.mxu0 0.0
    %417 = vmatprep.subr.mxu0 0.0
    %418 = vmatpush2.msra.mxu0 0.0
    %419 = vmatprep.subr.mxu0 0.0
    %420 = vmatpush2.msra.mxu0 0.0
    %421 = vmatprep.subr.mxu0 0.0
    %422 = vmatpush2.msra.mxu0 0.0
    %423 = vmatprep.subr.mxu0 0.0
    %424 = vmatpush2.msra.mxu0 0.0
    %425 = vmatprep.subr.mxu0 0.0
    %426 = vmatpush2.msra.mxu0 0.0
    %427 = vmatprep.subr.mxu0 0.0
    %428 = vmatpush2.msra.mxu0 0.0
    %429 = vmatprep.subr.mxu0 0.0
    %430 = vmatpush2.msra.mxu0 0.0
    %431 = vmatprep.subr.mxu0 0.0
    %432 = vmatpush2.msra.mxu0 0.0
    %433 = vmatprep.subr.mxu0 0.0
    %434 = vmatpush2.msra.mxu0 0.0
    %435 = vmatprep.subr.mxu0 0.0
    %436 = vmatpush2.msra.mxu0 0.0
    %437 = vmatprep.mubr.f32.mxu0 0.0
    %438 = vmatmul.mubr.f32.gmra.mxu0 %v369
    %v439 = vpop.f32.mrf.mxu0
    %v440 = vadd.f32 %v361, %v439
    %v441 = vpop.f32.mrf.mxu0
    %442 = vmatprep.mubr.f32.mxu0 0.0
    %443 = vmatmul.mubr.f32.gmra.mxu0 %v371
    %v444 = vpop.f32.mrf.mxu0
    %v445 = vadd.f32 %v366, %v444
    %v446 = vpop.f32.mrf.mxu0
    %447 = vdwg.mxu0
    %vm448 = vcmask 1045504
    %v449 = vrot.slane %v266, 2
    %v450 = vrot.slane %v267, 2
    %v451 = vsel %vm448, %v449, %v450
    %v452 = vrot.slane %v268, 2
    %v453 = vrot.slane %v269, 2
    %v454 = vsel %vm448, %v452, %v453
    %s455 = scalar_lea.vmem [#allocation6], 64
    %v456 = vld [vmem:[%s455] sm:$0xff]
    %v457 = vld [vmem:[%s455 + $0x8] sm:$0xff]
    %v458 = vld [vmem:[%s455 + $0x10] sm:$0xff]
    %v459 = vld [vmem:[%s455 + $0x18] sm:$0xff]
    %v460 = vsel %vm177, %v451, 0
    %v462 = vsel %vm177, %v454, 0
    %464 = vmatprep.subr.mxu0 0.0
    %465 = vmatpush1.msra.mxu0 0.0
    %466 = vmatprep.subr.mxu0 0.0
    %467 = vmatpush1.msra.mxu0 0.0
    %468 = vmatprep.subr.mxu0 0.0
    %469 = vmatpush1.msra.mxu0 0.0
    %470 = vmatprep.subr.mxu0 0.0
    %471 = vmatpush1.msra.mxu0 0.0
    %472 = vmatprep.subr.mxu0 0.0
    %473 = vmatpush1.msra.mxu0 0.0
    %474 = vmatprep.subr.mxu0 0.0
    %475 = vmatpush1.msra.mxu0 0.0
    %476 = vmatprep.subr.mxu0 0.0
    %477 = vmatpush1.msra.mxu0 0.0
    %478 = vmatprep.subr.mxu0 0.0
    %479 = vmatpush1.msra.mxu0 0.0
    %480 = vmatprep.subr.mxu0 0.0
    %481 = vmatpush1.msra.mxu0 0.0
    %482 = vmatprep.subr.mxu0 0.0
    %483 = vmatpush1.msra.mxu0 0.0
    %484 = vmatprep.subr.mxu0 0.0
    %485 = vmatpush1.msra.mxu0 0.0
    %486 = vmatprep.subr.mxu0 0.0
    %487 = vmatpush1.msra.mxu0 0.0
    %488 = vmatprep.subr.mxu0 0.0
    %489 = vmatpush1.msra.mxu0 %v459
    %490 = vmatprep.subr.mxu0 0.0
    %491 = vmatpush1.msra.mxu0 %v458
    %492 = vmatprep.subr.mxu0 0.0
    %493 = vmatpush1.msra.mxu0 %v457
    %494 = vmatprep.subr.mxu0 0.0
    %495 = vmatpush1.msra.mxu0 %v456
    %496 = vmatprep.subr.mxu0 0.0
    %497 = vmatpush2.msra.mxu0 0.0
    %498 = vmatprep.subr.mxu0 0.0
    %499 = vmatpush2.msra.mxu0 0.0
    %500 = vmatprep.subr.mxu0 0.0
    %501 = vmatpush2.msra.mxu0 0.0
    %502 = vmatprep.subr.mxu0 0.0
    %503 = vmatpush2.msra.mxu0 0.0
    %504 = vmatprep.subr.mxu0 0.0
    %505 = vmatpush2.msra.mxu0 0.0
    %506 = vmatprep.subr.mxu0 0.0
    %507 = vmatpush2.msra.mxu0 0.0
    %508 = vmatprep.subr.mxu0 0.0
    %509 = vmatpush2.msra.mxu0 0.0
    %510 = vmatprep.subr.mxu0 0.0
    %511 = vmatpush2.msra.mxu0 0.0
    %512 = vmatprep.subr.mxu0 0.0
    %513 = vmatpush2.msra.mxu0 0.0
    %514 = vmatprep.subr.mxu0 0.0
    %515 = vmatpush2.msra.mxu0 0.0
    %516 = vmatprep.subr.mxu0 0.0
    %517 = vmatpush2.msra.mxu0 0.0
    %518 = vmatprep.subr.mxu0 0.0
    %519 = vmatpush2.msra.mxu0 0.0
    %520 = vmatprep.subr.mxu0 0.0
    %521 = vmatpush2.msra.mxu0 0.0
    %522 = vmatprep.subr.mxu0 0.0
    %523 = vmatpush2.msra.mxu0 0.0
    %524 = vmatprep.subr.mxu0 0.0
    %525 = vmatpush2.msra.mxu0 0.0
    %526 = vmatprep.subr.mxu0 0.0
    %527 = vmatpush2.msra.mxu0 0.0
    %528 = vmatprep.mubr.f32.mxu0 0.0
    %529 = vmatmul.mubr.f32.gmra.mxu0 %v460
    %v530 = vpop.f32.mrf.mxu0
    %v531 = vadd.f32 0.0, %v530
    %v532 = vpop.f32.mrf.mxu0
    %533 = vmatprep.mubr.f32.mxu0 0.0
    %534 = vmatmul.mubr.f32.gmra.mxu0 %v462
    %v535 = vpop.f32.mrf.mxu0
    %v536 = vadd.f32 0.0, %v535
    %v537 = vpop.f32.mrf.mxu0
    %538 = vdwg.mxu0
    %v539 = vadd.f32 %v440, %v531
    %v540 = vadd.f32 %v445, %v536
    %vm541 = vcmask 1044480
    %v542 = vrot.slane %v266, 3
    %v543 = vrot.slane %v267, 3
    %v544 = vsel %vm541, %v542, %v543
    %v545 = vrot.slane %v268, 3
    %v546 = vrot.slane %v269, 3
    %v547 = vsel %vm541, %v545, %v546
    %s548 = scalar_lea.vmem [#allocation6], 96
    %v549 = vld [vmem:[%s548] sm:$0xff]
    %v550 = vld [vmem:[%s548 + $0x8] sm:$0xff]
    %v551 = vld [vmem:[%s548 + $0x10] sm:$0xff]
    %v552 = vld [vmem:[%s548 + $0x18] sm:$0xff]
    %v553 = vsel %vm177, %v544, 0
    %v555 = vsel %vm177, %v547, 0
    %557 = vmatprep.subr.mxu0 0.0
    %558 = vmatpush1.msra.mxu0 0.0
    %559 = vmatprep.subr.mxu0 0.0
    %560 = vmatpush1.msra.mxu0 0.0
    %561 = vmatprep.subr.mxu0 0.0
    %562 = vmatpush1.msra.mxu0 0.0
    %563 = vmatprep.subr.mxu0 0.0
    %564 = vmatpush1.msra.mxu0 0.0
    %565 = vmatprep.subr.mxu0 0.0
    %566 = vmatpush1.msra.mxu0 0.0
    %567 = vmatprep.subr.mxu0 0.0
    %568 = vmatpush1.msra.mxu0 0.0
    %569 = vmatprep.subr.mxu0 0.0
    %570 = vmatpush1.msra.mxu0 0.0
    %571 = vmatprep.subr.mxu0 0.0
    %572 = vmatpush1.msra.mxu0 0.0
    %573 = vmatprep.subr.mxu0 0.0
    %574 = vmatpush1.msra.mxu0 0.0
    %575 = vmatprep.subr.mxu0 0.0
    %576 = vmatpush1.msra.mxu0 0.0
    %577 = vmatprep.subr.mxu0 0.0
    %578 = vmatpush1.msra.mxu0 0.0
    %579 = vmatprep.subr.mxu0 0.0
    %580 = vmatpush1.msra.mxu0 0.0
    %581 = vmatprep.subr.mxu0 0.0
    %582 = vmatpush1.msra.mxu0 %v552
    %583 = vmatprep.subr.mxu0 0.0
    %584 = vmatpush1.msra.mxu0 %v551
    %585 = vmatprep.subr.mxu0 0.0
    %586 = vmatpush1.msra.mxu0 %v550
    %587 = vmatprep.subr.mxu0 0.0
    %588 = vmatpush1.msra.mxu0 %v549
    %589 = vmatprep.subr.mxu0 0.0
    %590 = vmatpush2.msra.mxu0 0.0
    %591 = vmatprep.subr.mxu0 0.0
    %592 = vmatpush2.msra.mxu0 0.0
    %593 = vmatprep.subr.mxu0 0.0
    %594 = vmatpush2.msra.mxu0 0.0
    %595 = vmatprep.subr.mxu0 0.0
    %596 = vmatpush2.msra.mxu0 0.0
    %597 = vmatprep.subr.mxu0 0.0
    %598 = vmatpush2.msra.mxu0 0.0
    %599 = vmatprep.subr.mxu0 0.0
    %600 = vmatpush2.msra.mxu0 0.0
    %601 = vmatprep.subr.mxu0 0.0
    %602 = vmatpush2.msra.mxu0 0.0
    %603 = vmatprep.subr.mxu0 0.0
    %604 = vmatpush2.msra.mxu0 0.0
    %605 = vmatprep.subr.mxu0 0.0
    %606 = vmatpush2.msra.mxu0 0.0
    %607 = vmatprep.subr.mxu0 0.0
    %608 = vmatpush2.msra.mxu0 0.0
    %609 = vmatprep.subr.mxu0 0.0
    %610 = vmatpush2.msra.mxu0 0.0
    %611 = vmatprep.subr.mxu0 0.0
    %612 = vmatpush2.msra.mxu0 0.0
    %613 = vmatprep.subr.mxu0 0.0
    %614 = vmatpush2.msra.mxu0 0.0
    %615 = vmatprep.subr.mxu0 0.0
    %616 = vmatpush2.msra.mxu0 0.0
    %617 = vmatprep.subr.mxu0 0.0
    %618 = vmatpush2.msra.mxu0 0.0
    %619 = vmatprep.subr.mxu0 0.0
    %620 = vmatpush2.msra.mxu0 0.0
    %621 = vmatprep.mubr.f32.mxu0 0.0
    %622 = vmatmul.mubr.f32.gmra.mxu0 %v553
    %v623 = vpop.f32.mrf.mxu0
    %v624 = vadd.f32 0.0, %v623
    %v625 = vpop.f32.mrf.mxu0
    %626 = vmatprep.mubr.f32.mxu0 0.0
    %627 = vmatmul.mubr.f32.gmra.mxu0 %v555
    %v628 = vpop.f32.mrf.mxu0
    %v629 = vadd.f32 0.0, %v628
    %v630 = vpop.f32.mrf.mxu0
    %631 = vdwg.mxu0
    %v632 = vadd.f32 %v539, %v624
    %v633 = vadd.f32 %v540, %v629
    %vm634 = vcmask 1043456
    %v635 = vrot.slane %v266, 4
    %v636 = vrot.slane %v267, 4
    %v637 = vsel %vm634, %v635, %v636
    %v638 = vrot.slane %v268, 4
    %v639 = vrot.slane %v269, 4
    %v640 = vsel %vm634, %v638, %v639
    %s641 = scalar_lea.vmem [#allocation6], 128
    %v642 = vld [vmem:[%s641] sm:$0xff]
    %v643 = vld [vmem:[%s641 + $0x8] sm:$0xff]
    %v644 = vld [vmem:[%s641 + $0x10] sm:$0xff]
    %v645 = vld [vmem:[%s641 + $0x18] sm:$0xff]
    %v646 = vsel %vm177, %v637, 0
    %v648 = vsel %vm177, %v640, 0
    %650 = vmatprep.subr.mxu0 0.0
    %651 = vmatpush1.msra.mxu0 0.0
    %652 = vmatprep.subr.mxu0 0.0
    %653 = vmatpush1.msra.mxu0 0.0
    %654 = vmatprep.subr.mxu0 0.0
    %655 = vmatpush1.msra.mxu0 0.0
    %656 = vmatprep.subr.mxu0 0.0
    %657 = vmatpush1.msra.mxu0 0.0
    %658 = vmatprep.subr.mxu0 0.0
    %659 = vmatpush1.msra.mxu0 0.0
    %660 = vmatprep.subr.mxu0 0.0
    %661 = vmatpush1.msra.mxu0 0.0
    %662 = vmatprep.subr.mxu0 0.0
    %663 = vmatpush1.msra.mxu0 0.0
    %664 = vmatprep.subr.mxu0 0.0
    %665 = vmatpush1.msra.mxu0 0.0
    %666 = vmatprep.subr.mxu0 0.0
    %667 = vmatpush1.msra.mxu0 0.0
    %668 = vmatprep.subr.mxu0 0.0
    %669 = vmatpush1.msra.mxu0 0.0
    %670 = vmatprep.subr.mxu0 0.0
    %671 = vmatpush1.msra.mxu0 0.0
    %672 = vmatprep.subr.mxu0 0.0
    %673 = vmatpush1.msra.mxu0 0.0
    %674 = vmatprep.subr.mxu0 0.0
    %675 = vmatpush1.msra.mxu0 %v645
    %676 = vmatprep.subr.mxu0 0.0
    %677 = vmatpush1.msra.mxu0 %v644
    %678 = vmatprep.subr.mxu0 0.0
    %679 = vmatpush1.msra.mxu0 %v643
    %680 = vmatprep.subr.mxu0 0.0
    %681 = vmatpush1.msra.mxu0 %v642
    %682 = vmatprep.subr.mxu0 0.0
    %683 = vmatpush2.msra.mxu0 0.0
    %684 = vmatprep.subr.mxu0 0.0
    %685 = vmatpush2.msra.mxu0 0.0
    %686 = vmatprep.subr.mxu0 0.0
    %687 = vmatpush2.msra.mxu0 0.0
    %688 = vmatprep.subr.mxu0 0.0
    %689 = vmatpush2.msra.mxu0 0.0
    %690 = vmatprep.subr.mxu0 0.0
    %691 = vmatpush2.msra.mxu0 0.0
    %692 = vmatprep.subr.mxu0 0.0
    %693 = vmatpush2.msra.mxu0 0.0
    %694 = vmatprep.subr.mxu0 0.0
    %695 = vmatpush2.msra.mxu0 0.0
    %696 = vmatprep.subr.mxu0 0.0
    %697 = vmatpush2.msra.mxu0 0.0
    %698 = vmatprep.subr.mxu0 0.0
    %699 = vmatpush2.msra.mxu0 0.0
    %700 = vmatprep.subr.mxu0 0.0
    %701 = vmatpush2.msra.mxu0 0.0
    %702 = vmatprep.subr.mxu0 0.0
    %703 = vmatpush2.msra.mxu0 0.0
    %704 = vmatprep.subr.mxu0 0.0
    %705 = vmatpush2.msra.mxu0 0.0
    %706 = vmatprep.subr.mxu0 0.0
    %707 = vmatpush2.msra.mxu0 0.0
    %708 = vmatprep.subr.mxu0 0.0
    %709 = vmatpush2.msra.mxu0 0.0
    %710 = vmatprep.subr.mxu0 0.0
    %711 = vmatpush2.msra.mxu0 0.0
    %712 = vmatprep.subr.mxu0 0.0
    %713 = vmatpush2.msra.mxu0 0.0
    %714 = vmatprep.mubr.f32.mxu0 0.0
    %715 = vmatmul.mubr.f32.gmra.mxu0 %v646
    %v716 = vpop.f32.mrf.mxu0
    %v717 = vadd.f32 0.0, %v716
    %v718 = vpop.f32.mrf.mxu0
    %719 = vmatprep.mubr.f32.mxu0 0.0
    %720 = vmatmul.mubr.f32.gmra.mxu0 %v648
    %v721 = vpop.f32.mrf.mxu0
    %v722 = vadd.f32 0.0, %v721
    %v723 = vpop.f32.mrf.mxu0
    %724 = vdwg.mxu0
    %v725 = vadd.f32 %v632, %v717
    %v726 = vadd.f32 %v633, %v722
    %vm727 = vcmask 1042432
    %v728 = vrot.slane %v266, 5
    %v729 = vrot.slane %v267, 5
    %v730 = vsel %vm727, %v728, %v729
    %v731 = vrot.slane %v268, 5
    %v732 = vrot.slane %v269, 5
    %v733 = vsel %vm727, %v731, %v732
    %s734 = scalar_lea.vmem [#allocation6], 160
    %v735 = vld [vmem:[%s734] sm:$0xff]
    %v736 = vld [vmem:[%s734 + $0x8] sm:$0xff]
    %v737 = vld [vmem:[%s734 + $0x10] sm:$0xff]
    %v738 = vld [vmem:[%s734 + $0x18] sm:$0xff]
    %v739 = vsel %vm177, %v730, 0
    %v741 = vsel %vm177, %v733, 0
    %743 = vmatprep.subr.mxu0 0.0
    %744 = vmatpush1.msra.mxu0 0.0
    %745 = vmatprep.subr.mxu0 0.0
    %746 = vmatpush1.msra.mxu0 0.0
    %747 = vmatprep.subr.mxu0 0.0
    %748 = vmatpush1.msra.mxu0 0.0
    %749 = vmatprep.subr.mxu0 0.0
    %750 = vmatpush1.msra.mxu0 0.0
    %751 = vmatprep.subr.mxu0 0.0
    %752 = vmatpush1.msra.mxu0 0.0
    %753 = vmatprep.subr.mxu0 0.0
    %754 = vmatpush1.msra.mxu0 0.0
    %755 = vmatprep.subr.mxu0 0.0
    %756 = vmatpush1.msra.mxu0 0.0
    %757 = vmatprep.subr.mxu0 0.0
    %758 = vmatpush1.msra.mxu0 0.0
    %759 = vmatprep.subr.mxu0 0.0
    %760 = vmatpush1.msra.mxu0 0.0
    %761 = vmatprep.subr.mxu0 0.0
    %762 = vmatpush1.msra.mxu0 0.0
    %763 = vmatprep.subr.mxu0 0.0
    %764 = vmatpush1.msra.mxu0 0.0
    %765 = vmatprep.subr.mxu0 0.0
    %766 = vmatpush1.msra.mxu0 0.0
    %767 = vmatprep.subr.mxu0 0.0
    %768 = vmatpush1.msra.mxu0 %v738
    %769 = vmatprep.subr.mxu0 0.0
    %770 = vmatpush1.msra.mxu0 %v737
    %771 = vmatprep.subr.mxu0 0.0
    %772 = vmatpush1.msra.mxu0 %v736
    %773 = vmatprep.subr.mxu0 0.0
    %774 = vmatpush1.msra.mxu0 %v735
    %775 = vmatprep.subr.mxu0 0.0
    %776 = vmatpush2.msra.mxu0 0.0
    %777 = vmatprep.subr.mxu0 0.0
    %778 = vmatpush2.msra.mxu0 0.0
    %779 = vmatprep.subr.mxu0 0.0
    %780 = vmatpush2.msra.mxu0 0.0
    %781 = vmatprep.subr.mxu0 0.0
    %782 = vmatpush2.msra.mxu0 0.0
    %783 = vmatprep.subr.mxu0 0.0
    %784 = vmatpush2.msra.mxu0 0.0
    %785 = vmatprep.subr.mxu0 0.0
    %786 = vmatpush2.msra.mxu0 0.0
    %787 = vmatprep.subr.mxu0 0.0
    %788 = vmatpush2.msra.mxu0 0.0
    %789 = vmatprep.subr.mxu0 0.0
    %790 = vmatpush2.msra.mxu0 0.0
    %791 = vmatprep.subr.mxu0 0.0
    %792 = vmatpush2.msra.mxu0 0.0
    %793 = vmatprep.subr.mxu0 0.0
    %794 = vmatpush2.msra.mxu0 0.0
    %795 = vmatprep.subr.mxu0 0.0
    %796 = vmatpush2.msra.mxu0 0.0
    %797 = vmatprep.subr.mxu0 0.0
    %798 = vmatpush2.msra.mxu0 0.0
    %799 = vmatprep.subr.mxu0 0.0
    %800 = vmatpush2.msra.mxu0 0.0
    %801 = vmatprep.subr.mxu0 0.0
    %802 = vmatpush2.msra.mxu0 0.0
    %803 = vmatprep.subr.mxu0 0.0
    %804 = vmatpush2.msra.mxu0 0.0
    %805 = vmatprep.subr.mxu0 0.0
    %806 = vmatpush2.msra.mxu0 0.0
    %807 = vmatprep.mubr.f32.mxu0 0.0
    %808 = vmatmul.mubr.f32.gmra.mxu0 %v739
    %v809 = vpop.f32.mrf.mxu0
    %v810 = vadd.f32 0.0, %v809
    %v811 = vpop.f32.mrf.mxu0
    %812 = vmatprep.mubr.f32.mxu0 0.0
    %813 = vmatmul.mubr.f32.gmra.mxu0 %v741
    %v814 = vpop.f32.mrf.mxu0
    %v815 = vadd.f32 0.0, %v814
    %v816 = vpop.f32.mrf.mxu0
    %817 = vdwg.mxu0
    %v818 = vadd.f32 %v725, %v810
    %v819 = vadd.f32 %v726, %v815
    %vm820 = vcmask 1041408
    %v821 = vrot.slane %v266, 6
    %v822 = vrot.slane %v267, 6
    %v823 = vsel %vm820, %v821, %v822
    %v824 = vrot.slane %v268, 6
    %v825 = vrot.slane %v269, 6
    %v826 = vsel %vm820, %v824, %v825
    %s827 = scalar_lea.vmem [#allocation6], 192
    %v828 = vld [vmem:[%s827] sm:$0xff]
    %v829 = vld [vmem:[%s827 + $0x8] sm:$0xff]
    %v830 = vld [vmem:[%s827 + $0x10] sm:$0xff]
    %v831 = vld [vmem:[%s827 + $0x18] sm:$0xff]
    %v832 = vsel %vm177, %v823, 0
    %v834 = vsel %vm177, %v826, 0
    %836 = vmatprep.subr.mxu0 0.0
    %837 = vmatpush1.msra.mxu0 0.0
    %838 = vmatprep.subr.mxu0 0.0
    %839 = vmatpush1.msra.mxu0 0.0
    %840 = vmatprep.subr.mxu0 0.0
    %841 = vmatpush1.msra.mxu0 0.0
    %842 = vmatprep.subr.mxu0 0.0
    %843 = vmatpush1.msra.mxu0 0.0
    %844 = vmatprep.subr.mxu0 0.0
    %845 = vmatpush1.msra.mxu0 0.0
    %846 = vmatprep.subr.mxu0 0.0
    %847 = vmatpush1.msra.mxu0 0.0
    %848 = vmatprep.subr.mxu0 0.0
    %849 = vmatpush1.msra.mxu0 0.0
    %850 = vmatprep.subr.mxu0 0.0
    %851 = vmatpush1.msra.mxu0 0.0
    %852 = vmatprep.subr.mxu0 0.0
    %853 = vmatpush1.msra.mxu0 0.0
    %854 = vmatprep.subr.mxu0 0.0
    %855 = vmatpush1.msra.mxu0 0.0
    %856 = vmatprep.subr.mxu0 0.0
    %857 = vmatpush1.msra.mxu0 0.0
    %858 = vmatprep.subr.mxu0 0.0
    %859 = vmatpush1.msra.mxu0 0.0
    %860 = vmatprep.subr.mxu0 0.0
    %861 = vmatpush1.msra.mxu0 %v831
    %862 = vmatprep.subr.mxu0 0.0
    %863 = vmatpush1.msra.mxu0 %v830
    %864 = vmatprep.subr.mxu0 0.0
    %865 = vmatpush1.msra.mxu0 %v829
    %866 = vmatprep.subr.mxu0 0.0
    %867 = vmatpush1.msra.mxu0 %v828
    %868 = vmatprep.subr.mxu0 0.0
    %869 = vmatpush2.msra.mxu0 0.0
    %870 = vmatprep.subr.mxu0 0.0
    %871 = vmatpush2.msra.mxu0 0.0
    %872 = vmatprep.subr.mxu0 0.0
    %873 = vmatpush2.msra.mxu0 0.0
    %874 = vmatprep.subr.mxu0 0.0
    %875 = vmatpush2.msra.mxu0 0.0
    %876 = vmatprep.subr.mxu0 0.0
    %877 = vmatpush2.msra.mxu0 0.0
    %878 = vmatprep.subr.mxu0 0.0
    %879 = vmatpush2.msra.mxu0 0.0
    %880 = vmatprep.subr.mxu0 0.0
    %881 = vmatpush2.msra.mxu0 0.0
    %882 = vmatprep.subr.mxu0 0.0
    %883 = vmatpush2.msra.mxu0 0.0
    %884 = vmatprep.subr.mxu0 0.0
    %885 = vmatpush2.msra.mxu0 0.0
    %886 = vmatprep.subr.mxu0 0.0
    %887 = vmatpush2.msra.mxu0 0.0
    %888 = vmatprep.subr.mxu0 0.0
    %889 = vmatpush2.msra.mxu0 0.0
    %890 = vmatprep.subr.mxu0 0.0
    %891 = vmatpush2.msra.mxu0 0.0
    %892 = vmatprep.subr.mxu0 0.0
    %893 = vmatpush2.msra.mxu0 0.0
    %894 = vmatprep.subr.mxu0 0.0
    %895 = vmatpush2.msra.mxu0 0.0
    %896 = vmatprep.subr.mxu0 0.0
    %897 = vmatpush2.msra.mxu0 0.0
    %898 = vmatprep.subr.mxu0 0.0
    %899 = vmatpush2.msra.mxu0 0.0
    %900 = vmatprep.mubr.f32.mxu0 0.0
    %901 = vmatmul.mubr.f32.gmra.mxu0 %v832
    %v902 = vpop.f32.mrf.mxu0
    %v903 = vadd.f32 0.0, %v902
    %v904 = vpop.f32.mrf.mxu0
    %905 = vmatprep.mubr.f32.mxu0 0.0
    %906 = vmatmul.mubr.f32.gmra.mxu0 %v834
    %v907 = vpop.f32.mrf.mxu0
    %v908 = vadd.f32 0.0, %v907
    %v909 = vpop.f32.mrf.mxu0
    %910 = vdwg.mxu0
    %v911 = vadd.f32 %v818, %v903
    %v912 = vadd.f32 %v819, %v908
    %v913 = vld [vmem:[#allocation8] sm:$0x1]
    %v915 = vlaneseq
    %v916 = vshrl.u32 %v915, 7
    %v917 = vsub.s32 0, %v916
    %v918 = vrot.slane %v913, %v917
    %v920 = vadd.f32 %v911, %v918
    %v921 = vadd.f32 %v912, %v918
    %v922 = vxor.u32 %v920, 2147483648
    %v923 = vxor.u32 %v921, 2147483648
    %v924 = vmul.f32 %v922, 1.442695
    %v925 = vpow.pop %v924
    %v926 = vmul.f32 %v923, 1.442695
    %v927 = vpow.pop %v926
    %v928 = vadd.f32 %v925, 1.0
    %v929 = vadd.f32 %v927, 1.0
    %v930 = vrcp.pop %v928
    %v931 = vmul.f32 1.0, %v930
    %v932 = vrcp.pop %v929
    %v933 = vmul.f32 1.0, %v932
    %936 = vrot.lane.b32.xlu0 %v931, 96
    %v937 = vpop.permute.xlu0 %936
    %938 = vrot.lane.b32.xlu0 %v933, 96
    %v939 = vpop.permute.xlu0 %938
    %v942 = vmul.f32 %v920, %v937
    %v943 = vmul.f32 %v921, %v939
    %944 = vst.msk [vmem:[#allocation2 + $0x3] sm:$0xff] %vm177, %v942
    %945 = vst.msk [vmem:[#allocation2 + $0x13] sm:$0xff] %vm177, %v943
    %v946 = vld [vmem:[#allocation2] sm:$0xff]
    %v947 = vld [vmem:[#allocation2 + $0x8] sm:$0x3f]
    %v948 = vld [vmem:[#allocation2 + $0x10] sm:$0xff]
    %v949 = vld [vmem:[#allocation2 + $0x18] sm:$0x3f]
    %v950 = vld [vmem:[#allocation9] sm:$0xff]
    %v951 = vld [vmem:[#allocation9 + $0x8] sm:$0xff]
    %v952 = vld [vmem:[#allocation9 + $0x10] sm:$0xff]
    %v953 = vld [vmem:[#allocation9 + $0x18] sm:$0xff]
    %v958 = vrot.slane %v946, 1
    %v959 = vrot.slane %v947, 1
    %v960 = vsel %vm278, %v958, %v959
    %v961 = vrot.slane %v948, 1
    %v962 = vrot.slane %v949, 1
    %v963 = vsel %vm278, %v961, %v962
    %s964 = scalar_lea.vmem [#allocation9], 32
    %v965 = vld [vmem:[%s964] sm:$0xff]
    %v966 = vld [vmem:[%s964 + $0x8] sm:$0xff]
    %v967 = vld [vmem:[%s964 + $0x10] sm:$0xff]
    %v968 = vld [vmem:[%s964 + $0x18] sm:$0xff]
    %v969 = vsel %vm177, %v960, 0
    %v971 = vsel %vm177, %v963, 0
    %973 = vmatprep.subr.mxu0 0.0
    %974 = vmatpush1.msra.mxu0 0.0
    %975 = vmatprep.subr.mxu0 0.0
    %976 = vmatpush1.msra.mxu0 0.0
    %977 = vmatprep.subr.mxu0 0.0
    %978 = vmatpush1.msra.mxu0 0.0
    %979 = vmatprep.subr.mxu0 0.0
    %980 = vmatpush1.msra.mxu0 0.0
    %981 = vmatprep.subr.mxu0 0.0
    %982 = vmatpush1.msra.mxu0 0.0
    %983 = vmatprep.subr.mxu0 0.0
    %984 = vmatpush1.msra.mxu0 0.0
    %985 = vmatprep.subr.mxu0 0.0
    %986 = vmatpush1.msra.mxu0 0.0
    %987 = vmatprep.subr.mxu0 0.0
    %988 = vmatpush1.msra.mxu0 0.0
    %989 = vmatprep.subr.mxu0 0.0
    %990 = vmatpush1.msra.mxu0 0.0
    %991 = vmatprep.subr.mxu0 0.0
    %992 = vmatpush1.msra.mxu0 0.0
    %993 = vmatprep.subr.mxu0 0.0
    %994 = vmatpush1.msra.mxu0 0.0
    %995 = vmatprep.subr.mxu0 0.0
    %996 = vmatpush1.msra.mxu0 0.0
    %997 = vmatprep.subr.mxu0 0.0
    %998 = vmatpush1.msra.mxu0 %v968
    %999 = vmatprep.subr.mxu0 0.0
    %1000 = vmatpush1.msra.mxu0 %v967
    %1001 = vmatprep.subr.mxu0 0.0
    %1002 = vmatpush1.msra.mxu0 %v966
    %1003 = vmatprep.subr.mxu0 0.0
    %1004 = vmatpush1.msra.mxu0 %v965
    %1005 = vmatprep.subr.mxu0 0.0
    %1006 = vmatpush2.msra.mxu0 0.0
    %1007 = vmatprep.subr.mxu0 0.0
    %1008 = vmatpush2.msra.mxu0 0.0
    %1009 = vmatprep.subr.mxu0 0.0
    %1010 = vmatpush2.msra.mxu0 0.0
    %1011 = vmatprep.subr.mxu0 0.0
    %1012 = vmatpush2.msra.mxu0 0.0
    %1013 = vmatprep.subr.mxu0 0.0
    %1014 = vmatpush2.msra.mxu0 0.0
    %1015 = vmatprep.subr.mxu0 0.0
    %1016 = vmatpush2.msra.mxu0 0.0
    %1017 = vmatprep.subr.mxu0 0.0
    %1018 = vmatpush2.msra.mxu0 0.0
    %1019 = vmatprep.subr.mxu0 0.0
    %1020 = vmatpush2.msra.mxu0 0.0
    %1021 = vmatprep.subr.mxu0 0.0
    %1022 = vmatpush2.msra.mxu0 0.0
    %1023 = vmatprep.subr.mxu0 0.0
    %1024 = vmatpush2.msra.mxu0 0.0
    %1025 = vmatprep.subr.mxu0 0.0
    %1026 = vmatpush2.msra.mxu0 0.0
    %1027 = vmatprep.subr.mxu0 0.0
    %1028 = vmatpush2.msra.mxu0 0.0
    %1029 = vmatprep.subr.mxu0 0.0
    %1030 = vmatpush2.msra.mxu0 0.0
    %1031 = vmatprep.subr.mxu0 0.0
    %1032 = vmatpush2.msra.mxu0 0.0
    %1033 = vmatprep.subr.mxu0 0.0
    %1034 = vmatpush2.msra.mxu0 0.0
    %1035 = vmatprep.subr.mxu0 0.0
    %1036 = vmatpush2.msra.mxu0 0.0
    %1037 = vmatprep.mubr.f32.mxu0 0.0
    %1038 = vmatmul.mubr.f32.gmra.mxu0 %v969
    %v1039 = vpop.f32.mrf.mxu0
    %v1040 = vadd.f32 0.0, %v1039
    %v1041 = vpop.f32.mrf.mxu0
    %1042 = vmatprep.mubr.f32.mxu0 0.0
    %1043 = vmatmul.mubr.f32.gmra.mxu0 %v971
    %v1044 = vpop.f32.mrf.mxu0
    %v1045 = vadd.f32 0.0, %v1044
    %v1046 = vpop.f32.mrf.mxu0
    %1047 = vdwg.mxu0
    %v1048 = vsel %vm177, %v946, 0
    %v1050 = vsel %vm177, %v948, 0
    %1052 = vmatprep.subr.mxu0 0.0
    %1053 = vmatpush1.msra.mxu0 0.0
    %1054 = vmatprep.subr.mxu0 0.0
    %1055 = vmatpush1.msra.mxu0 0.0
    %1056 = vmatprep.subr.mxu0 0.0
    %1057 = vmatpush1.msra.mxu0 0.0
    %1058 = vmatprep.subr.mxu0 0.0
    %1059 = vmatpush1.msra.mxu0 0.0
    %1060 = vmatprep.subr.mxu0 0.0
    %1061 = vmatpush1.msra.mxu0 0.0
    %1062 = vmatprep.subr.mxu0 0.0
    %1063 = vmatpush1.msra.mxu0 0.0
    %1064 = vmatprep.subr.mxu0 0.0
    %1065 = vmatpush1.msra.mxu0 0.0
    %1066 = vmatprep.subr.mxu0 0.0
    %1067 = vmatpush1.msra.mxu0 0.0
    %1068 = vmatprep.subr.mxu0 0.0
    %1069 = vmatpush1.msra.mxu0 0.0
    %1070 = vmatprep.subr.mxu0 0.0
    %1071 = vmatpush1.msra.mxu0 0.0
    %1072 = vmatprep.subr.mxu0 0.0
    %1073 = vmatpush1.msra.mxu0 0.0
    %1074 = vmatprep.subr.mxu0 0.0
    %1075 = vmatpush1.msra.mxu0 0.0
    %1076 = vmatprep.subr.mxu0 0.0
    %1077 = vmatpush1.msra.mxu0 %v953
    %1078 = vmatprep.subr.mxu0 0.0
    %1079 = vmatpush1.msra.mxu0 %v952
    %1080 = vmatprep.subr.mxu0 0.0
    %1081 = vmatpush1.msra.mxu0 %v951
    %1082 = vmatprep.subr.mxu0 0.0
    %1083 = vmatpush1.msra.mxu0 %v950
    %1084 = vmatprep.subr.mxu0 0.0
    %1085 = vmatpush2.msra.mxu0 0.0
    %1086 = vmatprep.subr.mxu0 0.0
    %1087 = vmatpush2.msra.mxu0 0.0
    %1088 = vmatprep.subr.mxu0 0.0
    %1089 = vmatpush2.msra.mxu0 0.0
    %1090 = vmatprep.subr.mxu0 0.0
    %1091 = vmatpush2.msra.mxu0 0.0
    %1092 = vmatprep.subr.mxu0 0.0
    %1093 = vmatpush2.msra.mxu0 0.0
    %1094 = vmatprep.subr.mxu0 0.0
    %1095 = vmatpush2.msra.mxu0 0.0
    %1096 = vmatprep.subr.mxu0 0.0
    %1097 = vmatpush2.msra.mxu0 0.0
    %1098 = vmatprep.subr.mxu0 0.0
    %1099 = vmatpush2.msra.mxu0 0.0
    %1100 = vmatprep.subr.mxu0 0.0
    %1101 = vmatpush2.msra.mxu0 0.0
    %1102 = vmatprep.subr.mxu0 0.0
    %1103 = vmatpush2.msra.mxu0 0.0
    %1104 = vmatprep.subr.mxu0 0.0
    %1105 = vmatpush2.msra.mxu0 0.0
    %1106 = vmatprep.subr.mxu0 0.0
    %1107 = vmatpush2.msra.mxu0 0.0
    %1108 = vmatprep.subr.mxu0 0.0
    %1109 = vmatpush2.msra.mxu0 0.0
    %1110 = vmatprep.subr.mxu0 0.0
    %1111 = vmatpush2.msra.mxu0 0.0
    %1112 = vmatprep.subr.mxu0 0.0
    %1113 = vmatpush2.msra.mxu0 0.0
    %1114 = vmatprep.subr.mxu0 0.0
    %1115 = vmatpush2.msra.mxu0 0.0
    %1116 = vmatprep.mubr.f32.mxu0 0.0
    %1117 = vmatmul.mubr.f32.gmra.mxu0 %v1048
    %v1118 = vpop.f32.mrf.mxu0
    %v1119 = vadd.f32 %v1040, %v1118
    %v1120 = vpop.f32.mrf.mxu0
    %1121 = vmatprep.mubr.f32.mxu0 0.0
    %1122 = vmatmul.mubr.f32.gmra.mxu0 %v1050
    %v1123 = vpop.f32.mrf.mxu0
    %v1124 = vadd.f32 %v1045, %v1123
    %v1125 = vpop.f32.mrf.mxu0
    %1126 = vdwg.mxu0
    %v1127 = vrot.slane %v946, 2
    %v1128 = vrot.slane %v947, 2
    %v1129 = vsel %vm448, %v1127, %v1128
    %v1130 = vrot.slane %v948, 2
    %v1131 = vrot.slane %v949, 2
    %v1132 = vsel %vm448, %v1130, %v1131
    %s1133 = scalar_lea.vmem [#allocation9], 64
    %v1134 = vld [vmem:[%s1133] sm:$0xff]
    %v1135 = vld [vmem:[%s1133 + $0x8] sm:$0xff]
    %v1136 = vld [vmem:[%s1133 + $0x10] sm:$0xff]
    %v1137 = vld [vmem:[%s1133 + $0x18] sm:$0xff]
    %v1138 = vsel %vm177, %v1129, 0
    %v1140 = vsel %vm177, %v1132, 0
    %1142 = vmatprep.subr.mxu0 0.0
    %1143 = vmatpush1.msra.mxu0 0.0
    %1144 = vmatprep.subr.mxu0 0.0
    %1145 = vmatpush1.msra.mxu0 0.0
    %1146 = vmatprep.subr.mxu0 0.0
    %1147 = vmatpush1.msra.mxu0 0.0
    %1148 = vmatprep.subr.mxu0 0.0
    %1149 = vmatpush1.msra.mxu0 0.0
    %1150 = vmatprep.subr.mxu0 0.0
    %1151 = vmatpush1.msra.mxu0 0.0
    %1152 = vmatprep.subr.mxu0 0.0
    %1153 = vmatpush1.msra.mxu0 0.0
    %1154 = vmatprep.subr.mxu0 0.0
    %1155 = vmatpush1.msra.mxu0 0.0
    %1156 = vmatprep.subr.mxu0 0.0
    %1157 = vmatpush1.msra.mxu0 0.0
    %1158 = vmatprep.subr.mxu0 0.0
    %1159 = vmatpush1.msra.mxu0 0.0
    %1160 = vmatprep.subr.mxu0 0.0
    %1161 = vmatpush1.msra.mxu0 0.0
    %1162 = vmatprep.subr.mxu0 0.0
    %1163 = vmatpush1.msra.mxu0 0.0
    %1164 = vmatprep.subr.mxu0 0.0
    %1165 = vmatpush1.msra.mxu0 0.0
    %1166 = vmatprep.subr.mxu0 0.0
    %1167 = vmatpush1.msra.mxu0 %v1137
    %1168 = vmatprep.subr.mxu0 0.0
    %1169 = vmatpush1.msra.mxu0 %v1136
    %1170 = vmatprep.subr.mxu0 0.0
    %1171 = vmatpush1.msra.mxu0 %v1135
    %1172 = vmatprep.subr.mxu0 0.0
    %1173 = vmatpush1.msra.mxu0 %v1134
    %1174 = vmatprep.subr.mxu0 0.0
    %1175 = vmatpush2.msra.mxu0 0.0
    %1176 = vmatprep.subr.mxu0 0.0
    %1177 = vmatpush2.msra.mxu0 0.0
    %1178 = vmatprep.subr.mxu0 0.0
    %1179 = vmatpush2.msra.mxu0 0.0
    %1180 = vmatprep.subr.mxu0 0.0
    %1181 = vmatpush2.msra.mxu0 0.0
    %1182 = vmatprep.subr.mxu0 0.0
    %1183 = vmatpush2.msra.mxu0 0.0
    %1184 = vmatprep.subr.mxu0 0.0
    %1185 = vmatpush2.msra.mxu0 0.0
    %1186 = vmatprep.subr.mxu0 0.0
    %1187 = vmatpush2.msra.mxu0 0.0
    %1188 = vmatprep.subr.mxu0 0.0
    %1189 = vmatpush2.msra.mxu0 0.0
    %1190 = vmatprep.subr.mxu0 0.0
    %1191 = vmatpush2.msra.mxu0 0.0
    %1192 = vmatprep.subr.mxu0 0.0
    %1193 = vmatpush2.msra.mxu0 0.0
    %1194 = vmatprep.subr.mxu0 0.0
    %1195 = vmatpush2.msra.mxu0 0.0
    %1196 = vmatprep.subr.mxu0 0.0
    %1197 = vmatpush2.msra.mxu0 0.0
    %1198 = vmatprep.subr.mxu0 0.0
    %1199 = vmatpush2.msra.mxu0 0.0
    %1200 = vmatprep.subr.mxu0 0.0
    %1201 = vmatpush2.msra.mxu0 0.0
    %1202 = vmatprep.subr.mxu0 0.0
    %1203 = vmatpush2.msra.mxu0 0.0
    %1204 = vmatprep.subr.mxu0 0.0
    %1205 = vmatpush2.msra.mxu0 0.0
    %1206 = vmatprep.mubr.f32.mxu0 0.0
    %1207 = vmatmul.mubr.f32.gmra.mxu0 %v1138
    %v1208 = vpop.f32.mrf.mxu0
    %v1209 = vadd.f32 0.0, %v1208
    %v1210 = vpop.f32.mrf.mxu0
    %1211 = vmatprep.mubr.f32.mxu0 0.0
    %1212 = vmatmul.mubr.f32.gmra.mxu0 %v1140
    %v1213 = vpop.f32.mrf.mxu0
    %v1214 = vadd.f32 0.0, %v1213
    %v1215 = vpop.f32.mrf.mxu0
    %1216 = vdwg.mxu0
    %v1217 = vadd.f32 %v1119, %v1209
    %v1218 = vadd.f32 %v1124, %v1214
    %v1219 = vrot.slane %v946, 3
    %v1220 = vrot.slane %v947, 3
    %v1221 = vsel %vm541, %v1219, %v1220
    %v1222 = vrot.slane %v948, 3
    %v1223 = vrot.slane %v949, 3
    %v1224 = vsel %vm541, %v1222, %v1223
    %s1225 = scalar_lea.vmem [#allocation9], 96
    %v1226 = vld [vmem:[%s1225] sm:$0xff]
    %v1227 = vld [vmem:[%s1225 + $0x8] sm:$0xff]
    %v1228 = vld [vmem:[%s1225 + $0x10] sm:$0xff]
    %v1229 = vld [vmem:[%s1225 + $0x18] sm:$0xff]
    %v1230 = vsel %vm177, %v1221, 0
    %v1232 = vsel %vm177, %v1224, 0
    %1234 = vmatprep.subr.mxu0 0.0
    %1235 = vmatpush1.msra.mxu0 0.0
    %1236 = vmatprep.subr.mxu0 0.0
    %1237 = vmatpush1.msra.mxu0 0.0
    %1238 = vmatprep.subr.mxu0 0.0
    %1239 = vmatpush1.msra.mxu0 0.0
    %1240 = vmatprep.subr.mxu0 0.0
    %1241 = vmatpush1.msra.mxu0 0.0
    %1242 = vmatprep.subr.mxu0 0.0
    %1243 = vmatpush1.msra.mxu0 0.0
    %1244 = vmatprep.subr.mxu0 0.0
    %1245 = vmatpush1.msra.mxu0 0.0
    %1246 = vmatprep.subr.mxu0 0.0
    %1247 = vmatpush1.msra.mxu0 0.0
    %1248 = vmatprep.subr.mxu0 0.0
    %1249 = vmatpush1.msra.mxu0 0.0
    %1250 = vmatprep.subr.mxu0 0.0
    %1251 = vmatpush1.msra.mxu0 0.0
    %1252 = vmatprep.subr.mxu0 0.0
    %1253 = vmatpush1.msra.mxu0 0.0
    %1254 = vmatprep.subr.mxu0 0.0
    %1255 = vmatpush1.msra.mxu0 0.0
    %1256 = vmatprep.subr.mxu0 0.0
    %1257 = vmatpush1.msra.mxu0 0.0
    %1258 = vmatprep.subr.mxu0 0.0
    %1259 = vmatpush1.msra.mxu0 %v1229
    %1260 = vmatprep.subr.mxu0 0.0
    %1261 = vmatpush1.msra.mxu0 %v1228
    %1262 = vmatprep.subr.mxu0 0.0
    %1263 = vmatpush1.msra.mxu0 %v1227
    %1264 = vmatprep.subr.mxu0 0.0
    %1265 = vmatpush1.msra.mxu0 %v1226
    %1266 = vmatprep.subr.mxu0 0.0
    %1267 = vmatpush2.msra.mxu0 0.0
    %1268 = vmatprep.subr.mxu0 0.0
    %1269 = vmatpush2.msra.mxu0 0.0
    %1270 = vmatprep.subr.mxu0 0.0
    %1271 = vmatpush2.msra.mxu0 0.0
    %1272 = vmatprep.subr.mxu0 0.0
    %1273 = vmatpush2.msra.mxu0 0.0
    %1274 = vmatprep.subr.mxu0 0.0
    %1275 = vmatpush2.msra.mxu0 0.0
    %1276 = vmatprep.subr.mxu0 0.0
    %1277 = vmatpush2.msra.mxu0 0.0
    %1278 = vmatprep.subr.mxu0 0.0
    %1279 = vmatpush2.msra.mxu0 0.0
    %1280 = vmatprep.subr.mxu0 0.0
    %1281 = vmatpush2.msra.mxu0 0.0
    %1282 = vmatprep.subr.mxu0 0.0
    %1283 = vmatpush2.msra.mxu0 0.0
    %1284 = vmatprep.subr.mxu0 0.0
    %1285 = vmatpush2.msra.mxu0 0.0
    %1286 = vmatprep.subr.mxu0 0.0
    %1287 = vmatpush2.msra.mxu0 0.0
    %1288 = vmatprep.subr.mxu0 0.0
    %1289 = vmatpush2.msra.mxu0 0.0
    %1290 = vmatprep.subr.mxu0 0.0
    %1291 = vmatpush2.msra.mxu0 0.0
    %1292 = vmatprep.subr.mxu0 0.0
    %1293 = vmatpush2.msra.mxu0 0.0
    %1294 = vmatprep.subr.mxu0 0.0
    %1295 = vmatpush2.msra.mxu0 0.0
    %1296 = vmatprep.subr.mxu0 0.0
    %1297 = vmatpush2.msra.mxu0 0.0
    %1298 = vmatprep.mubr.f32.mxu0 0.0
    %1299 = vmatmul.mubr.f32.gmra.mxu0 %v1230
    %v1300 = vpop.f32.mrf.mxu0
    %v1301 = vadd.f32 0.0, %v1300
    %v1302 = vpop.f32.mrf.mxu0
    %1303 = vmatprep.mubr.f32.mxu0 0.0
    %1304 = vmatmul.mubr.f32.gmra.mxu0 %v1232
    %v1305 = vpop.f32.mrf.mxu0
    %v1306 = vadd.f32 0.0, %v1305
    %v1307 = vpop.f32.mrf.mxu0
    %1308 = vdwg.mxu0
    %v1309 = vadd.f32 %v1217, %v1301
    %v1310 = vadd.f32 %v1218, %v1306
    %v1311 = vrot.slane %v946, 4
    %v1312 = vrot.slane %v947, 4
    %v1313 = vsel %vm634, %v1311, %v1312
    %v1314 = vrot.slane %v948, 4
    %v1315 = vrot.slane %v949, 4
    %v1316 = vsel %vm634, %v1314, %v1315
    %s1317 = scalar_lea.vmem [#allocation9], 128
    %v1318 = vld [vmem:[%s1317] sm:$0xff]
    %v1319 = vld [vmem:[%s1317 + $0x8] sm:$0xff]
    %v1320 = vld [vmem:[%s1317 + $0x10] sm:$0xff]
    %v1321 = vld [vmem:[%s1317 + $0x18] sm:$0xff]
    %v1322 = vsel %vm177, %v1313, 0
    %v1324 = vsel %vm177, %v1316, 0
    %1326 = vmatprep.subr.mxu0 0.0
    %1327 = vmatpush1.msra.mxu0 0.0
    %1328 = vmatprep.subr.mxu0 0.0
    %1329 = vmatpush1.msra.mxu0 0.0
    %1330 = vmatprep.subr.mxu0 0.0
    %1331 = vmatpush1.msra.mxu0 0.0
    %1332 = vmatprep.subr.mxu0 0.0
    %1333 = vmatpush1.msra.mxu0 0.0
    %1334 = vmatprep.subr.mxu0 0.0
    %1335 = vmatpush1.msra.mxu0 0.0
    %1336 = vmatprep.subr.mxu0 0.0
    %1337 = vmatpush1.msra.mxu0 0.0
    %1338 = vmatprep.subr.mxu0 0.0
    %1339 = vmatpush1.msra.mxu0 0.0
    %1340 = vmatprep.subr.mxu0 0.0
    %1341 = vmatpush1.msra.mxu0 0.0
    %1342 = vmatprep.subr.mxu0 0.0
    %1343 = vmatpush1.msra.mxu0 0.0
    %1344 = vmatprep.subr.mxu0 0.0
    %1345 = vmatpush1.msra.mxu0 0.0
    %1346 = vmatprep.subr.mxu0 0.0
    %1347 = vmatpush1.msra.mxu0 0.0
    %1348 = vmatprep.subr.mxu0 0.0
    %1349 = vmatpush1.msra.mxu0 0.0
    %1350 = vmatprep.subr.mxu0 0.0
    %1351 = vmatpush1.msra.mxu0 %v1321
    %1352 = vmatprep.subr.mxu0 0.0
    %1353 = vmatpush1.msra.mxu0 %v1320
    %1354 = vmatprep.subr.mxu0 0.0
    %1355 = vmatpush1.msra.mxu0 %v1319
    %1356 = vmatprep.subr.mxu0 0.0
    %1357 = vmatpush1.msra.mxu0 %v1318
    %1358 = vmatprep.subr.mxu0 0.0
    %1359 = vmatpush2.msra.mxu0 0.0
    %1360 = vmatprep.subr.mxu0 0.0
    %1361 = vmatpush2.msra.mxu0 0.0
    %1362 = vmatprep.subr.mxu0 0.0
    %1363 = vmatpush2.msra.mxu0 0.0
    %1364 = vmatprep.subr.mxu0 0.0
    %1365 = vmatpush2.msra.mxu0 0.0
    %1366 = vmatprep.subr.mxu0 0.0
    %1367 = vmatpush2.msra.mxu0 0.0
    %1368 = vmatprep.subr.mxu0 0.0
    %1369 = vmatpush2.msra.mxu0 0.0
    %1370 = vmatprep.subr.mxu0 0.0
    %1371 = vmatpush2.msra.mxu0 0.0
    %1372 = vmatprep.subr.mxu0 0.0
    %1373 = vmatpush2.msra.mxu0 0.0
    %1374 = vmatprep.subr.mxu0 0.0
    %1375 = vmatpush2.msra.mxu0 0.0
    %1376 = vmatprep.subr.mxu0 0.0
    %1377 = vmatpush2.msra.mxu0 0.0
    %1378 = vmatprep.subr.mxu0 0.0
    %1379 = vmatpush2.msra.mxu0 0.0
    %1380 = vmatprep.subr.mxu0 0.0
    %1381 = vmatpush2.msra.mxu0 0.0
    %1382 = vmatprep.subr.mxu0 0.0
    %1383 = vmatpush2.msra.mxu0 0.0
    %1384 = vmatprep.subr.mxu0 0.0
    %1385 = vmatpush2.msra.mxu0 0.0
    %1386 = vmatprep.subr.mxu0 0.0
    %1387 = vmatpush2.msra.mxu0 0.0
    %1388 = vmatprep.subr.mxu0 0.0
    %1389 = vmatpush2.msra.mxu0 0.0
    %1390 = vmatprep.mubr.f32.mxu0 0.0
    %1391 = vmatmul.mubr.f32.gmra.mxu0 %v1322
    %v1392 = vpop.f32.mrf.mxu0
    %v1393 = vadd.f32 0.0, %v1392
    %v1394 = vpop.f32.mrf.mxu0
    %1395 = vmatprep.mubr.f32.mxu0 0.0
    %1396 = vmatmul.mubr.f32.gmra.mxu0 %v1324
    %v1397 = vpop.f32.mrf.mxu0
    %v1398 = vadd.f32 0.0, %v1397
    %v1399 = vpop.f32.mrf.mxu0
    %1400 = vdwg.mxu0
    %v1401 = vadd.f32 %v1309, %v1393
    %v1402 = vadd.f32 %v1310, %v1398
    %v1403 = vrot.slane %v946, 5
    %v1404 = vrot.slane %v947, 5
    %v1405 = vsel %vm727, %v1403, %v1404
    %v1406 = vrot.slane %v948, 5
    %v1407 = vrot.slane %v949, 5
    %v1408 = vsel %vm727, %v1406, %v1407
    %s1409 = scalar_lea.vmem [#allocation9], 160
    %v1410 = vld [vmem:[%s1409] sm:$0xff]
    %v1411 = vld [vmem:[%s1409 + $0x8] sm:$0xff]
    %v1412 = vld [vmem:[%s1409 + $0x10] sm:$0xff]
    %v1413 = vld [vmem:[%s1409 + $0x18] sm:$0xff]
    %v1414 = vsel %vm177, %v1405, 0
    %v1416 = vsel %vm177, %v1408, 0
    %1418 = vmatprep.subr.mxu0 0.0
    %1419 = vmatpush1.msra.mxu0 0.0
    %1420 = vmatprep.subr.mxu0 0.0
    %1421 = vmatpush1.msra.mxu0 0.0
    %1422 = vmatprep.subr.mxu0 0.0
    %1423 = vmatpush1.msra.mxu0 0.0
    %1424 = vmatprep.subr.mxu0 0.0
    %1425 = vmatpush1.msra.mxu0 0.0
    %1426 = vmatprep.subr.mxu0 0.0
    %1427 = vmatpush1.msra.mxu0 0.0
    %1428 = vmatprep.subr.mxu0 0.0
    %1429 = vmatpush1.msra.mxu0 0.0
    %1430 = vmatprep.subr.mxu0 0.0
    %1431 = vmatpush1.msra.mxu0 0.0
    %1432 = vmatprep.subr.mxu0 0.0
    %1433 = vmatpush1.msra.mxu0 0.0
    %1434 = vmatprep.subr.mxu0 0.0
    %1435 = vmatpush1.msra.mxu0 0.0
    %1436 = vmatprep.subr.mxu0 0.0
    %1437 = vmatpush1.msra.mxu0 0.0
    %1438 = vmatprep.subr.mxu0 0.0
    %1439 = vmatpush1.msra.mxu0 0.0
    %1440 = vmatprep.subr.mxu0 0.0
    %1441 = vmatpush1.msra.mxu0 0.0
    %1442 = vmatprep.subr.mxu0 0.0
    %1443 = vmatpush1.msra.mxu0 %v1413
    %1444 = vmatprep.subr.mxu0 0.0
    %1445 = vmatpush1.msra.mxu0 %v1412
    %1446 = vmatprep.subr.mxu0 0.0
    %1447 = vmatpush1.msra.mxu0 %v1411
    %1448 = vmatprep.subr.mxu0 0.0
    %1449 = vmatpush1.msra.mxu0 %v1410
    %1450 = vmatprep.subr.mxu0 0.0
    %1451 = vmatpush2.msra.mxu0 0.0
    %1452 = vmatprep.subr.mxu0 0.0
    %1453 = vmatpush2.msra.mxu0 0.0
    %1454 = vmatprep.subr.mxu0 0.0
    %1455 = vmatpush2.msra.mxu0 0.0
    %1456 = vmatprep.subr.mxu0 0.0
    %1457 = vmatpush2.msra.mxu0 0.0
    %1458 = vmatprep.subr.mxu0 0.0
    %1459 = vmatpush2.msra.mxu0 0.0
    %1460 = vmatprep.subr.mxu0 0.0
    %1461 = vmatpush2.msra.mxu0 0.0
    %1462 = vmatprep.subr.mxu0 0.0
    %1463 = vmatpush2.msra.mxu0 0.0
    %1464 = vmatprep.subr.mxu0 0.0
    %1465 = vmatpush2.msra.mxu0 0.0
    %1466 = vmatprep.subr.mxu0 0.0
    %1467 = vmatpush2.msra.mxu0 0.0
    %1468 = vmatprep.subr.mxu0 0.0
    %1469 = vmatpush2.msra.mxu0 0.0
    %1470 = vmatprep.subr.mxu0 0.0
    %1471 = vmatpush2.msra.mxu0 0.0
    %1472 = vmatprep.subr.mxu0 0.0
    %1473 = vmatpush2.msra.mxu0 0.0
    %1474 = vmatprep.subr.mxu0 0.0
    %1475 = vmatpush2.msra.mxu0 0.0
    %1476 = vmatprep.subr.mxu0 0.0
    %1477 = vmatpush2.msra.mxu0 0.0
    %1478 = vmatprep.subr.mxu0 0.0
    %1479 = vmatpush2.msra.mxu0 0.0
    %1480 = vmatprep.subr.mxu0 0.0
    %1481 = vmatpush2.msra.mxu0 0.0
    %1482 = vmatprep.mubr.f32.mxu0 0.0
    %1483 = vmatmul.mubr.f32.gmra.mxu0 %v1414
    %v1484 = vpop.f32.mrf.mxu0
    %v1485 = vadd.f32 0.0, %v1484
    %v1486 = vpop.f32.mrf.mxu0
    %1487 = vmatprep.mubr.f32.mxu0 0.0
    %1488 = vmatmul.mubr.f32.gmra.mxu0 %v1416
    %v1489 = vpop.f32.mrf.mxu0
    %v1490 = vadd.f32 0.0, %v1489
    %v1491 = vpop.f32.mrf.mxu0
    %1492 = vdwg.mxu0
    %v1493 = vadd.f32 %v1401, %v1485
    %v1494 = vadd.f32 %v1402, %v1490
    %v1495 = vrot.slane %v946, 6
    %v1496 = vrot.slane %v947, 6
    %v1497 = vsel %vm820, %v1495, %v1496
    %v1498 = vrot.slane %v948, 6
    %v1499 = vrot.slane %v949, 6
    %v1500 = vsel %vm820, %v1498, %v1499
    %s1501 = scalar_lea.vmem [#allocation9], 192
    %v1502 = vld [vmem:[%s1501] sm:$0xff]
    %v1503 = vld [vmem:[%s1501 + $0x8] sm:$0xff]
    %v1504 = vld [vmem:[%s1501 + $0x10] sm:$0xff]
    %v1505 = vld [vmem:[%s1501 + $0x18] sm:$0xff]
    %v1506 = vsel %vm177, %v1497, 0
    %v1508 = vsel %vm177, %v1500, 0
    %1510 = vmatprep.subr.mxu0 0.0
    %1511 = vmatpush1.msra.mxu0 0.0
    %1512 = vmatprep.subr.mxu0 0.0
    %1513 = vmatpush1.msra.mxu0 0.0
    %1514 = vmatprep.subr.mxu0 0.0
    %1515 = vmatpush1.msra.mxu0 0.0
    %1516 = vmatprep.subr.mxu0 0.0
    %1517 = vmatpush1.msra.mxu0 0.0
    %1518 = vmatprep.subr.mxu0 0.0
    %1519 = vmatpush1.msra.mxu0 0.0
    %1520 = vmatprep.subr.mxu0 0.0
    %1521 = vmatpush1.msra.mxu0 0.0
    %1522 = vmatprep.subr.mxu0 0.0
    %1523 = vmatpush1.msra.mxu0 0.0
    %1524 = vmatprep.subr.mxu0 0.0
    %1525 = vmatpush1.msra.mxu0 0.0
    %1526 = vmatprep.subr.mxu0 0.0
    %1527 = vmatpush1.msra.mxu0 0.0
    %1528 = vmatprep.subr.mxu0 0.0
    %1529 = vmatpush1.msra.mxu0 0.0
    %1530 = vmatprep.subr.mxu0 0.0
    %1531 = vmatpush1.msra.mxu0 0.0
    %1532 = vmatprep.subr.mxu0 0.0
    %1533 = vmatpush1.msra.mxu0 0.0
    %1534 = vmatprep.subr.mxu0 0.0
    %1535 = vmatpush1.msra.mxu0 %v1505
    %1536 = vmatprep.subr.mxu0 0.0
    %1537 = vmatpush1.msra.mxu0 %v1504
    %1538 = vmatprep.subr.mxu0 0.0
    %1539 = vmatpush1.msra.mxu0 %v1503
    %1540 = vmatprep.subr.mxu0 0.0
    %1541 = vmatpush1.msra.mxu0 %v1502
    %1542 = vmatprep.subr.mxu0 0.0
    %1543 = vmatpush2.msra.mxu0 0.0
    %1544 = vmatprep.subr.mxu0 0.0
    %1545 = vmatpush2.msra.mxu0 0.0
    %1546 = vmatprep.subr.mxu0 0.0
    %1547 = vmatpush2.msra.mxu0 0.0
    %1548 = vmatprep.subr.mxu0 0.0
    %1549 = vmatpush2.msra.mxu0 0.0
    %1550 = vmatprep.subr.mxu0 0.0
    %1551 = vmatpush2.msra.mxu0 0.0
    %1552 = vmatprep.subr.mxu0 0.0
    %1553 = vmatpush2.msra.mxu0 0.0
    %1554 = vmatprep.subr.mxu0 0.0
    %1555 = vmatpush2.msra.mxu0 0.0
    %1556 = vmatprep.subr.mxu0 0.0
    %1557 = vmatpush2.msra.mxu0 0.0
    %1558 = vmatprep.subr.mxu0 0.0
    %1559 = vmatpush2.msra.mxu0 0.0
    %1560 = vmatprep.subr.mxu0 0.0
    %1561 = vmatpush2.msra.mxu0 0.0
    %1562 = vmatprep.subr.mxu0 0.0
    %1563 = vmatpush2.msra.mxu0 0.0
    %1564 = vmatprep.subr.mxu0 0.0
    %1565 = vmatpush2.msra.mxu0 0.0
    %1566 = vmatprep.subr.mxu0 0.0
    %1567 = vmatpush2.msra.mxu0 0.0
    %1568 = vmatprep.subr.mxu0 0.0
    %1569 = vmatpush2.msra.mxu0 0.0
    %1570 = vmatprep.subr.mxu0 0.0
    %1571 = vmatpush2.msra.mxu0 0.0
    %1572 = vmatprep.subr.mxu0 0.0
    %1573 = vmatpush2.msra.mxu0 0.0
    %1574 = vmatprep.mubr.f32.mxu0 0.0
    %1575 = vmatmul.mubr.f32.gmra.mxu0 %v1506
    %v1576 = vpop.f32.mrf.mxu0
    %v1577 = vadd.f32 0.0, %v1576
    %v1578 = vpop.f32.mrf.mxu0
    %1579 = vmatprep.mubr.f32.mxu0 0.0
    %1580 = vmatmul.mubr.f32.gmra.mxu0 %v1508
    %v1581 = vpop.f32.mrf.mxu0
    %v1582 = vadd.f32 0.0, %v1581
    %v1583 = vpop.f32.mrf.mxu0
    %1584 = vdwg.mxu0
    %v1585 = vadd.f32 %v1493, %v1577
    %v1586 = vadd.f32 %v1494, %v1582
    %v1587 = vld [vmem:[#allocation11] sm:$0x1]
    %v1589 = vlaneseq
    %v1590 = vshrl.u32 %v1589, 7
    %v1591 = vsub.s32 0, %v1590
    %v1592 = vrot.slane %v1587, %v1591
    %v1594 = vadd.f32 %v1585, %v1592
    %v1595 = vadd.f32 %v1586, %v1592
    %v1596 = vxor.u32 %v1594, 2147483648
    %v1597 = vxor.u32 %v1595, 2147483648
    %v1598 = vmul.f32 %v1596, 1.442695
    %v1599 = vpow.pop %v1598
    %v1600 = vmul.f32 %v1597, 1.442695
    %v1601 = vpow.pop %v1600
    %v1602 = vadd.f32 %v1599, 1.0
    %v1603 = vadd.f32 %v1601, 1.0
    %v1604 = vrcp.pop %v1602
    %v1605 = vmul.f32 1.0, %v1604
    %v1606 = vrcp.pop %v1603
    %v1607 = vmul.f32 1.0, %v1606
    %1610 = vrot.lane.b32.xlu0 %v1605, 96
    %v1611 = vpop.permute.xlu0 %1610
    %1612 = vrot.lane.b32.xlu0 %v1607, 96
    %v1613 = vpop.permute.xlu0 %1612
    %v1616 = vmul.f32 %v1594, %v1611
    %v1617 = vmul.f32 %v1595, %v1613
    %v1618 = vld [vmem:[#allocation12] sm:$0xff]
    %v1619 = vld [vmem:[#allocation12 + $0x8] sm:$0xff]
    %v1620 = vld [vmem:[#allocation12 + $0x10] sm:$0xff]
    %v1621 = vld [vmem:[#allocation12 + $0x18] sm:$0xff]
    %v1622 = vld [vmem:[#allocation15] sm:$0x1]
    %v1624 = vlaneseq
    %v1625 = vshrl.u32 %v1624, 7
    %v1626 = vsub.s32 0, %v1625
    %v1627 = vrot.slane %v1622, %v1626
    %v1630 = vsel %vm177, %v1616, 0
    %v1633 = vsel %vm177, %v1617, 0
    %1635 = vmatprep.subr.mxu0 0.0
    %1636 = vmatpush1.msra.mxu0 0.0
    %1637 = vmatprep.subr.mxu0 0.0
    %1638 = vmatpush1.msra.mxu0 0.0
    %1639 = vmatprep.subr.mxu0 0.0
    %1640 = vmatpush1.msra.mxu0 0.0
    %1641 = vmatprep.subr.mxu0 0.0
    %1642 = vmatpush1.msra.mxu0 0.0
    %1643 = vmatprep.subr.mxu0 0.0
    %1644 = vmatpush1.msra.mxu0 0.0
    %1645 = vmatprep.subr.mxu0 0.0
    %1646 = vmatpush1.msra.mxu0 0.0
    %1647 = vmatprep.subr.mxu0 0.0
    %1648 = vmatpush1.msra.mxu0 0.0
    %1649 = vmatprep.subr.mxu0 0.0
    %1650 = vmatpush1.msra.mxu0 0.0
    %1651 = vmatprep.subr.mxu0 0.0
    %1652 = vmatpush1.msra.mxu0 0.0
    %1653 = vmatprep.subr.mxu0 0.0
    %1654 = vmatpush1.msra.mxu0 0.0
    %1655 = vmatprep.subr.mxu0 0.0
    %1656 = vmatpush1.msra.mxu0 0.0
    %1657 = vmatprep.subr.mxu0 0.0
    %1658 = vmatpush1.msra.mxu0 0.0
    %1659 = vmatprep.subr.mxu0 0.0
    %1660 = vmatpush1.msra.mxu0 %v1621
    %1661 = vmatprep.subr.mxu0 0.0
    %1662 = vmatpush1.msra.mxu0 %v1620
    %1663 = vmatprep.subr.mxu0 0.0
    %1664 = vmatpush1.msra.mxu0 %v1619
    %1665 = vmatprep.subr.mxu0 0.0
    %1666 = vmatpush1.msra.mxu0 %v1618
    %1667 = vmatprep.subr.mxu0 0.0
    %1668 = vmatpush2.msra.mxu0 0.0
    %1669 = vmatprep.subr.mxu0 0.0
    %1670 = vmatpush2.msra.mxu0 0.0
    %1671 = vmatprep.subr.mxu0 0.0
    %1672 = vmatpush2.msra.mxu0 0.0
    %1673 = vmatprep.subr.mxu0 0.0
    %1674 = vmatpush2.msra.mxu0 0.0
    %1675 = vmatprep.subr.mxu0 0.0
    %1676 = vmatpush2.msra.mxu0 0.0
    %1677 = vmatprep.subr.mxu0 0.0
    %1678 = vmatpush2.msra.mxu0 0.0
    %1679 = vmatprep.subr.mxu0 0.0
    %1680 = vmatpush2.msra.mxu0 0.0
    %1681 = vmatprep.subr.mxu0 0.0
    %1682 = vmatpush2.msra.mxu0 0.0
    %1683 = vmatprep.subr.mxu0 0.0
    %1684 = vmatpush2.msra.mxu0 0.0
    %1685 = vmatprep.subr.mxu0 0.0
    %1686 = vmatpush2.msra.mxu0 0.0
    %1687 = vmatprep.subr.mxu0 0.0
    %1688 = vmatpush2.msra.mxu0 0.0
    %1689 = vmatprep.subr.mxu0 0.0
    %1690 = vmatpush2.msra.mxu0 0.0
    %1691 = vmatprep.subr.mxu0 0.0
    %1692 = vmatpush2.msra.mxu0 0.0
    %1693 = vmatprep.subr.mxu0 0.0
    %1694 = vmatpush2.msra.mxu0 0.0
    %1695 = vmatprep.subr.mxu0 0.0
    %1696 = vmatpush2.msra.mxu0 0.0
    %1697 = vmatprep.subr.mxu0 0.0
    %1698 = vmatpush2.msra.mxu0 0.0
    %1699 = vmatprep.mubr.f32.mxu0 0.0
    %1700 = vmatmul.mubr.f32.gmra.mxu0 %v1630
    %v1701 = vpop.f32.mrf.mxu0
    %v1702 = vadd.f32 %v1627, %v1701
    %v1703 = vpop.f32.mrf.mxu0
    %1704 = vmatprep.mubr.f32.mxu0 0.0
    %1705 = vmatmul.mubr.f32.gmra.mxu0 %v1633
    %v1706 = vpop.f32.mrf.mxu0
    %v1707 = vadd.f32 %v1627, %v1706
    %v1708 = vpop.f32.mrf.mxu0
    %1709 = vdwg.mxu0
    %v1710 = vld [vmem:[#allocation14] sm:$0xff]
    %v1711 = vld [vmem:[#allocation14 + $0x8] sm:$0xff]
    %v1712 = vld [vmem:[#allocation14 + $0x10] sm:$0xff]
    %v1713 = vld [vmem:[#allocation14 + $0x18] sm:$0xff]
    %v1714 = vld [vmem:[%s9] sm:$0xff]
    %v1715 = vld [vmem:[%s9 + $0x8] sm:$0xff]
    %v1716 = vld [vmem:[%s9 + $0x10] sm:$0xff]
    %v1717 = vld [vmem:[%s9 + $0x18] sm:$0xff]
    %v1718 = vld [vmem:[%s9 + $0x20] sm:$0xff]
    %v1719 = vld [vmem:[%s9 + $0x28] sm:$0xff]
    %v1720 = vld [vmem:[%s9 + $0x30] sm:$0xff]
    %v1721 = vld [vmem:[%s9 + $0x38] sm:$0xff]
    %v1722 = vld [vmem:[#allocation17] sm:$0x1]
    %v1724 = vsel %vm177, 0.0, 0
    %1726 = vmatprep.subr.mxu0 0.0
    %1727 = vmatpush1.msra.mxu0 0.0
    %1728 = vmatprep.subr.mxu0 0.0
    %1729 = vmatpush1.msra.mxu0 0.0
    %1730 = vmatprep.subr.mxu0 0.0
    %1731 = vmatpush1.msra.mxu0 0.0
    %1732 = vmatprep.subr.mxu0 0.0
    %1733 = vmatpush1.msra.mxu0 0.0
    %1734 = vmatprep.subr.mxu0 0.0
    %1735 = vmatpush1.msra.mxu0 0.0
    %1736 = vmatprep.subr.mxu0 0.0
    %1737 = vmatpush1.msra.mxu0 0.0
    %1738 = vmatprep.subr.mxu0 0.0
    %1739 = vmatpush1.msra.mxu0 0.0
    %1740 = vmatprep.subr.mxu0 0.0
    %1741 = vmatpush1.msra.mxu0 0.0
    %1742 = vmatprep.subr.mxu0 0.0
    %1743 = vmatpush1.msra.mxu0 0.0
    %1744 = vmatprep.subr.mxu0 0.0
    %1745 = vmatpush1.msra.mxu0 0.0
    %1746 = vmatprep.subr.mxu0 0.0
    %1747 = vmatpush1.msra.mxu0 0.0
    %1748 = vmatprep.subr.mxu0 0.0
    %1749 = vmatpush1.msra.mxu0 0.0
    %1750 = vmatprep.subr.mxu0 0.0
    %1751 = vmatpush1.msra.mxu0 %v1713
    %1752 = vmatprep.subr.mxu0 0.0
    %1753 = vmatpush1.msra.mxu0 %v1712
    %1754 = vmatprep.subr.mxu0 0.0
    %1755 = vmatpush1.msra.mxu0 %v1711
    %1756 = vmatprep.subr.mxu0 0.0
    %1757 = vmatpush1.msra.mxu0 %v1710
    %1758 = vmatprep.subr.mxu0 0.0
    %1759 = vmatpush2.msra.mxu0 0.0
    %1760 = vmatprep.subr.mxu0 0.0
    %1761 = vmatpush2.msra.mxu0 0.0
    %1762 = vmatprep.subr.mxu0 0.0
    %1763 = vmatpush2.msra.mxu0 0.0
    %1764 = vmatprep.subr.mxu0 0.0
    %1765 = vmatpush2.msra.mxu0 0.0
    %1766 = vmatprep.subr.mxu0 0.0
    %1767 = vmatpush2.msra.mxu0 0.0
    %1768 = vmatprep.subr.mxu0 0.0
    %1769 = vmatpush2.msra.mxu0 0.0
    %1770 = vmatprep.subr.mxu0 0.0
    %1771 = vmatpush2.msra.mxu0 0.0
    %1772 = vmatprep.subr.mxu0 0.0
    %1773 = vmatpush2.msra.mxu0 0.0
    %1774 = vmatprep.subr.mxu0 0.0
    %1775 = vmatpush2.msra.mxu0 0.0
    %1776 = vmatprep.subr.mxu0 0.0
    %1777 = vmatpush2.msra.mxu0 0.0
    %1778 = vmatprep.subr.mxu0 0.0
    %1779 = vmatpush2.msra.mxu0 0.0
    %1780 = vmatprep.subr.mxu0 0.0
    %1781 = vmatpush2.msra.mxu0 0.0
    %1782 = vmatprep.subr.mxu0 0.0
    %1783 = vmatpush2.msra.mxu0 0.0
    %1784 = vmatprep.subr.mxu0 0.0
    %1785 = vmatpush2.msra.mxu0 0.0
    %1786 = vmatprep.subr.mxu0 0.0
    %1787 = vmatpush2.msra.mxu0 0.0
    %1788 = vmatprep.subr.mxu0 0.0
    %1789 = vmatpush2.msra.mxu0 0.0
    %1790 = vmatprep.mubr.f32.mxu0 0.0
    %1791 = vmatmul.mubr.f32.gmra.mxu0 %v1724
    %v1792 = vpop.f32.mrf.mxu0
    %v1793 = vadd.f32 0.0, %v1792
    %v1794 = vpop.f32.mrf.mxu0
    %1795 = vdwg.mxu0
    %v1797 = vrot.slane %v1793, 1
    %v1800 = vadd.f32 %v1702, %v1793
    %v1801 = vadd.f32 %v1707, %v1797
    %v1802 = vxor.u32 %v1800, 2147483648
    %v1803 = vxor.u32 %v1801, 2147483648
    %v1804 = vmul.f32 %v1802, 1.442695
    %v1805 = vpow.pop %v1804
    %v1806 = vmul.f32 %v1803, 1.442695
    %v1807 = vpow.pop %v1806
    %v1808 = vadd.f32 %v1805, 1.0
    %v1809 = vadd.f32 %v1807, 1.0
    %v1810 = vrcp.pop %v1808
    %v1811 = vmul.f32 1.0, %v1810
    %v1812 = vrcp.pop %v1809
    %v1813 = vmul.f32 1.0, %v1812
    %v1814 = vtanh.pop %v1800
    %v1815 = vtanh.pop %v1801
    %v1816 = vmul.f32 %v1811, 0.0
    %v1817 = vmul.f32 %v1813, 0.0
    %1820 = vrot.lane.b32.xlu0 %v1814, 32
    %v1821 = vpop.permute.xlu0 %1820
    %1822 = vrot.lane.b32.xlu0 %v1815, 32
    %v1823 = vpop.permute.xlu0 %1822
    %v1826 = vmul.f32 %v1811, %v1821
    %v1827 = vmul.f32 %v1813, %v1823
    %1830 = vrot.lane.b32.xlu0 %v1826, 32
    %v1831 = vpop.permute.xlu0 %1830
    %1832 = vrot.lane.b32.xlu0 %v1827, 32
    %v1833 = vpop.permute.xlu0 %1832
    %v1836 = vadd.f32 %v1816, %v1831
    %v1837 = vadd.f32 %v1817, %v1833
    %v1838 = vtanh.pop %v1836
    %v1839 = vtanh.pop %v1837
    %1842 = vrot.lane.b32.xlu0 %v1838, 32
    %v1843 = vpop.permute.xlu0 %1842
    %1844 = vrot.lane.b32.xlu0 %v1839, 32
    %v1845 = vpop.permute.xlu0 %1844
    %v1848 = vmul.f32 %v1811, %v1843
    %v1849 = vmul.f32 %v1813, %v1845
    %v1852 = vrot.slane %v1849, 7
    %vm1853 = vcmask 1041409
    %v1854 = vsel %vm1853, %v1852, %v1848
    %1855 = vrot.lane.b32.xlu0 %v1854, 64
    %v1856 = vpop.permute.xlu0 %1855
    %v1858 = vsel %vm177, %v1856, 0.0
    %v1860 = vlaneseq
    %v1861 = vshrl.u32 %v1860, 7
    %v1862 = vsub.s32 0, %v1861
    %v1863 = vrot.slane %v1722, %v1862
    %vm1865 = vcmask 523264
    %v1867 = vsel %vm1865, %v1858, 0
    %1869 = vmatprep.subr.mxu0 0.0
    %1870 = vmatpush1.msra.mxu0 0.0
    %1871 = vmatprep.subr.mxu0 0.0
    %1872 = vmatpush1.msra.mxu0 0.0
    %1873 = vmatprep.subr.mxu0 0.0
    %1874 = vmatpush1.msra.mxu0 0.0
    %1875 = vmatprep.subr.mxu0 0.0
    %1876 = vmatpush1.msra.mxu0 0.0
    %1877 = vmatprep.subr.mxu0 0.0
    %1878 = vmatpush1.msra.mxu0 0.0
    %1879 = vmatprep.subr.mxu0 0.0
    %1880 = vmatpush1.msra.mxu0 0.0
    %1881 = vmatprep.subr.mxu0 0.0
    %1882 = vmatpush1.msra.mxu0 0.0
    %1883 = vmatprep.subr.mxu0 0.0
    %1884 = vmatpush1.msra.mxu0 0.0
    %1885 = vmatprep.subr.mxu0 0.0
    %1886 = vmatpush1.msra.mxu0 %v1721
    %1887 = vmatprep.subr.mxu0 0.0
    %1888 = vmatpush1.msra.mxu0 %v1720
    %1889 = vmatprep.subr.mxu0 0.0
    %1890 = vmatpush1.msra.mxu0 %v1719
    %1891 = vmatprep.subr.mxu0 0.0
    %1892 = vmatpush1.msra.mxu0 %v1718
    %1893 = vmatprep.subr.mxu0 0.0
    %1894 = vmatpush1.msra.mxu0 %v1717
    %1895 = vmatprep.subr.mxu0 0.0
    %1896 = vmatpush1.msra.mxu0 %v1716
    %1897 = vmatprep.subr.mxu0 0.0
    %1898 = vmatpush1.msra.mxu0 %v1715
    %1899 = vmatprep.subr.mxu0 0.0
    %1900 = vmatpush1.msra.mxu0 %v1714
    %1901 = vmatprep.subr.mxu0 0.0
    %1902 = vmatpush2.msra.mxu0 0.0
    %1903 = vmatprep.subr.mxu0 0.0
    %1904 = vmatpush2.msra.mxu0 0.0
    %1905 = vmatprep.subr.mxu0 0.0
    %1906 = vmatpush2.msra.mxu0 0.0
    %1907 = vmatprep.subr.mxu0 0.0
    %1908 = vmatpush2.msra.mxu0 0.0
    %1909 = vmatprep.subr.mxu0 0.0
    %1910 = vmatpush2.msra.mxu0 0.0
    %1911 = vmatprep.subr.mxu0 0.0
    %1912 = vmatpush2.msra.mxu0 0.0
    %1913 = vmatprep.subr.mxu0 0.0
    %1914 = vmatpush2.msra.mxu0 0.0
    %1915 = vmatprep.subr.mxu0 0.0
    %1916 = vmatpush2.msra.mxu0 0.0
    %1917 = vmatprep.subr.mxu0 0.0
    %1918 = vmatpush2.msra.mxu0 0.0
    %1919 = vmatprep.subr.mxu0 0.0
    %1920 = vmatpush2.msra.mxu0 0.0
    %1921 = vmatprep.subr.mxu0 0.0
    %1922 = vmatpush2.msra.mxu0 0.0
    %1923 = vmatprep.subr.mxu0 0.0
    %1924 = vmatpush2.msra.mxu0 0.0
    %1925 = vmatprep.subr.mxu0 0.0
    %1926 = vmatpush2.msra.mxu0 0.0
    %1927 = vmatprep.subr.mxu0 0.0
    %1928 = vmatpush2.msra.mxu0 0.0
    %1929 = vmatprep.subr.mxu0 0.0
    %1930 = vmatpush2.msra.mxu0 0.0
    %1931 = vmatprep.subr.mxu0 0.0
    %1932 = vmatpush2.msra.mxu0 0.0
    %1933 = vmatprep.mubr.f32.mxu0 0.0
    %1934 = vmatmul.mubr.f32.gmra.mxu0 %v1867
    %v1935 = vpop.f32.mrf.mxu0
    %v1936 = vadd.f32 %v1863, %v1935
    %v1937 = vpop.f32.mrf.mxu0
    %1938 = vdwg.mxu0
    %v1939 = vxor.u32 %v1936, 2147483648
    %v1940 = vmul.f32 %v1939, 1.442695
    %v1941 = vpow.pop %v1940
    %v1942 = vadd.f32 %v1941, 1.0
    %v1943 = vrcp.pop %v1942
    %v1944 = vmul.f32 1.0, %v1943
    %v1945 = vtanh.pop %v1936
    %v1946 = vmul.f32 %v1944, 0.0
    %1948 = vrot.lane.b32.xlu0 %v1945, 32
    %v1949 = vpop.permute.xlu0 %1948
    %v1951 = vmul.f32 %v1944, %v1949
    %1953 = vrot.lane.b32.xlu0 %v1951, 32
    %v1954 = vpop.permute.xlu0 %1953
    %v1956 = vadd.f32 %v1946, %v1954
    %v1957 = vtanh.pop %v1956
    %1959 = vrot.lane.b32.xlu0 %v1957, 32
    %v1960 = vpop.permute.xlu0 %1959
    %v1962 = vmul.f32 %v1944, %v1960
    %v1963 = vsel %vm177, %v1856, 0
    %1965 = vmatprep.subr.mxu0 0.0
    %1966 = vmatpush1.msra.mxu0 0.0
    %1967 = vmatprep.subr.mxu0 0.0
    %1968 = vmatpush1.msra.mxu0 0.0
    %1969 = vmatprep.subr.mxu0 0.0
    %1970 = vmatpush1.msra.mxu0 0.0
    %1971 = vmatprep.subr.mxu0 0.0
    %1972 = vmatpush1.msra.mxu0 0.0
    %1973 = vmatprep.subr.mxu0 0.0
    %1974 = vmatpush1.msra.mxu0 0.0
    %1975 = vmatprep.subr.mxu0 0.0
    %1976 = vmatpush1.msra.mxu0 0.0
    %1977 = vmatprep.subr.mxu0 0.0
    %1978 = vmatpush1.msra.mxu0 0.0
    %1979 = vmatprep.subr.mxu0 0.0
    %1980 = vmatpush1.msra.mxu0 0.0
    %1981 = vmatprep.subr.mxu0 0.0
    %1982 = vmatpush1.msra.mxu0 0.0
    %1983 = vmatprep.subr.mxu0 0.0
    %1984 = vmatpush1.msra.mxu0 0.0
    %1985 = vmatprep.subr.mxu0 0.0
    %1986 = vmatpush1.msra.mxu0 0.0
    %1987 = vmatprep.subr.mxu0 0.0
    %1988 = vmatpush1.msra.mxu0 0.0
    %1989 = vmatprep.subr.mxu0 0.0
    %1990 = vmatpush1.msra.mxu0 %v1713
    %1991 = vmatprep.subr.mxu0 0.0
    %1992 = vmatpush1.msra.mxu0 %v1712
    %1993 = vmatprep.subr.mxu0 0.0
    %1994 = vmatpush1.msra.mxu0 %v1711
    %1995 = vmatprep.subr.mxu0 0.0
    %1996 = vmatpush1.msra.mxu0 %v1710
    %1997 = vmatprep.subr.mxu0 0.0
    %1998 = vmatpush2.msra.mxu0 0.0
    %1999 = vmatprep.subr.mxu0 0.0
    %2000 = vmatpush2.msra.mxu0 0.0
    %2001 = vmatprep.subr.mxu0 0.0
    %2002 = vmatpush2.msra.mxu0 0.0
    %2003 = vmatprep.subr.mxu0 0.0
    %2004 = vmatpush2.msra.mxu0 0.0
    %2005 = vmatprep.subr.mxu0 0.0
    %2006 = vmatpush2.msra.mxu0 0.0
    %2007 = vmatprep.subr.mxu0 0.0
    %2008 = vmatpush2.msra.mxu0 0.0
    %2009 = vmatprep.subr.mxu0 0.0
    %2010 = vmatpush2.msra.mxu0 0.0
    %2011 = vmatprep.subr.mxu0 0.0
    %2012 = vmatpush2.msra.mxu0 0.0
    %2013 = vmatprep.subr.mxu0 0.0
    %2014 = vmatpush2.msra.mxu0 0.0
    %2015 = vmatprep.subr.mxu0 0.0
    %2016 = vmatpush2.msra.mxu0 0.0
    %2017 = vmatprep.subr.mxu0 0.0
    %2018 = vmatpush2.msra.mxu0 0.0
    %2019 = vmatprep.subr.mxu0 0.0
    %2020 = vmatpush2.msra.mxu0 0.0
    %2021 = vmatprep.subr.mxu0 0.0
    %2022 = vmatpush2.msra.mxu0 0.0
    %2023 = vmatprep.subr.mxu0 0.0
    %2024 = vmatpush2.msra.mxu0 0.0
    %2025 = vmatprep.subr.mxu0 0.0
    %2026 = vmatpush2.msra.mxu0 0.0
    %2027 = vmatprep.subr.mxu0 0.0
    %2028 = vmatpush2.msra.mxu0 0.0
    %2029 = vmatprep.mubr.f32.mxu0 0.0
    %2030 = vmatmul.mubr.f32.gmra.mxu0 %v1963
    %v2031 = vpop.f32.mrf.mxu0
    %v2032 = vadd.f32 0.0, %v2031
    %v2033 = vpop.f32.mrf.mxu0
    %2034 = vdwg.mxu0
    %v2036 = vrot.slane %v2032, 7
    %v2039 = vadd.f32 %v1702, %v2036
    %v2040 = vadd.f32 %v1707, %v2032
    %v2041 = vxor.u32 %v2039, 2147483648
    %v2042 = vxor.u32 %v2040, 2147483648
    %v2043 = vmul.f32 %v2041, 1.442695
    %v2044 = vpow.pop %v2043
    %v2045 = vmul.f32 %v2042, 1.442695
    %v2046 = vpow.pop %v2045
    %v2047 = vadd.f32 %v2044, 1.0
    %v2048 = vadd.f32 %v2046, 1.0
    %v2049 = vrcp.pop %v2047
    %v2050 = vmul.f32 1.0, %v2049
    %v2051 = vrcp.pop %v2048
    %v2052 = vmul.f32 1.0, %v2051
    %v2053 = vtanh.pop %v2039
    %v2054 = vtanh.pop %v2040
    %v2057 = vrot.slane %v1836, 7
    %v2058 = vrot.slane %v1837, 7
    %v2061 = vmul.f32 %v2050, %v2057
    %v2062 = vmul.f32 %v2052, %v2058
    %2065 = vrot.lane.b32.xlu0 %v2053, 32
    %v2066 = vpop.permute.xlu0 %2065
    %2067 = vrot.lane.b32.xlu0 %v2054, 32
    %v2068 = vpop.permute.xlu0 %2067
    %v2071 = vmul.f32 %v2050, %v2066
    %v2072 = vmul.f32 %v2052, %v2068
    %2075 = vrot.lane.b32.xlu0 %v2071, 32
    %v2076 = vpop.permute.xlu0 %2075
    %2077 = vrot.lane.b32.xlu0 %v2072, 32
    %v2078 = vpop.permute.xlu0 %2077
    %v2081 = vadd.f32 %v2061, %v2076
    %v2082 = vadd.f32 %v2062, %v2078
    %v2083 = vtanh.pop %v2081
    %v2084 = vtanh.pop %v2082
    %2087 = vrot.lane.b32.xlu0 %v2083, 32
    %v2088 = vpop.permute.xlu0 %2087
    %2089 = vrot.lane.b32.xlu0 %v2084, 32
    %v2090 = vpop.permute.xlu0 %2089
    %v2093 = vmul.f32 %v2050, %v2088
    %v2094 = vmul.f32 %v2052, %v2090
    %v2097 = vrot.slane %v2094, 7
    %vm2098 = vcmask 1042434
    %v2099 = vsel %vm2098, %v2097, %v2093
    %2100 = vrot.lane.b32.xlu0 %v2099, 64
    %v2101 = vpop.permute.xlu0 %2100
    %v2104 = vrot.slane %v1962, 7
    %2105 = vrot.lane.b32.xlu0 %v2104, 96
    %v2106 = vpop.permute.xlu0 %2105
    %v2108 = vsel %vm177, %v2101, %v2106
    %v2110 = vrot.slane %v2108, 1
    %v2111 = vsel %vm1865, %v2110, 0
    %2113 = vmatprep.subr.mxu0 0.0
    %2114 = vmatpush1.msra.mxu0 0.0
    %2115 = vmatprep.subr.mxu0 0.0
    %2116 = vmatpush1.msra.mxu0 0.0
    %2117 = vmatprep.subr.mxu0 0.0
    %2118 = vmatpush1.msra.mxu0 0.0
    %2119 = vmatprep.subr.mxu0 0.0
    %2120 = vmatpush1.msra.mxu0 0.0
    %2121 = vmatprep.subr.mxu0 0.0
    %2122 = vmatpush1.msra.mxu0 0.0
    %2123 = vmatprep.subr.mxu0 0.0
    %2124 = vmatpush1.msra.mxu0 0.0
    %2125 = vmatprep.subr.mxu0 0.0
    %2126 = vmatpush1.msra.mxu0 0.0
    %2127 = vmatprep.subr.mxu0 0.0
    %2128 = vmatpush1.msra.mxu0 0.0
    %2129 = vmatprep.subr.mxu0 0.0
    %2130 = vmatpush1.msra.mxu0 %v1721
    %2131 = vmatprep.subr.mxu0 0.0
    %2132 = vmatpush1.msra.mxu0 %v1720
    %2133 = vmatprep.subr.mxu0 0.0
    %2134 = vmatpush1.msra.mxu0 %v1719
    %2135 = vmatprep.subr.mxu0 0.0
    %2136 = vmatpush1.msra.mxu0 %v1718
    %2137 = vmatprep.subr.mxu0 0.0
    %2138 = vmatpush1.msra.mxu0 %v1717
    %2139 = vmatprep.subr.mxu0 0.0
    %2140 = vmatpush1.msra.mxu0 %v1716
    %2141 = vmatprep.subr.mxu0 0.0
    %2142 = vmatpush1.msra.mxu0 %v1715
    %2143 = vmatprep.subr.mxu0 0.0
    %2144 = vmatpush1.msra.mxu0 %v1714
    %2145 = vmatprep.subr.mxu0 0.0
    %2146 = vmatpush2.msra.mxu0 0.0
    %2147 = vmatprep.subr.mxu0 0.0
    %2148 = vmatpush2.msra.mxu0 0.0
    %2149 = vmatprep.subr.mxu0 0.0
    %2150 = vmatpush2.msra.mxu0 0.0
    %2151 = vmatprep.subr.mxu0 0.0
    %2152 = vmatpush2.msra.mxu0 0.0
    %2153 = vmatprep.subr.mxu0 0.0
    %2154 = vmatpush2.msra.mxu0 0.0
    %2155 = vmatprep.subr.mxu0 0.0
    %2156 = vmatpush2.msra.mxu0 0.0
    %2157 = vmatprep.subr.mxu0 0.0
    %2158 = vmatpush2.msra.mxu0 0.0
    %2159 = vmatprep.subr.mxu0 0.0
    %2160 = vmatpush2.msra.mxu0 0.0
    %2161 = vmatprep.subr.mxu0 0.0
    %2162 = vmatpush2.msra.mxu0 0.0
    %2163 = vmatprep.subr.mxu0 0.0
    %2164 = vmatpush2.msra.mxu0 0.0
    %2165 = vmatprep.subr.mxu0 0.0
    %2166 = vmatpush2.msra.mxu0 0.0
    %2167 = vmatprep.subr.mxu0 0.0
    %2168 = vmatpush2.msra.mxu0 0.0
    %2169 = vmatprep.subr.mxu0 0.0
    %2170 = vmatpush2.msra.mxu0 0.0
    %2171 = vmatprep.subr.mxu0 0.0
    %2172 = vmatpush2.msra.mxu0 0.0
    %2173 = vmatprep.subr.mxu0 0.0
    %2174 = vmatpush2.msra.mxu0 0.0
    %2175 = vmatprep.subr.mxu0 0.0
    %2176 = vmatpush2.msra.mxu0 0.0
    %2177 = vmatprep.mubr.f32.mxu0 0.0
    %2178 = vmatmul.mubr.f32.gmra.mxu0 %v2111
    %v2179 = vpop.f32.mrf.mxu0
    %v2180 = vadd.f32 %v1863, %v2179
    %v2181 = vpop.f32.mrf.mxu0
    %2182 = vdwg.mxu0
    %v2183 = vxor.u32 %v2180, 2147483648
    %v2184 = vmul.f32 %v2183, 1.442695
    %v2185 = vpow.pop %v2184
    %v2186 = vadd.f32 %v2185, 1.0
    %v2187 = vrcp.pop %v2186
    %v2188 = vmul.f32 1.0, %v2187
    %v2189 = vtanh.pop %v2180
    %v2190 = vmul.f32 %v2188, %v1956
    %2192 = vrot.lane.b32.xlu0 %v2189, 32
    %v2193 = vpop.permute.xlu0 %2192
    %v2195 = vmul.f32 %v2188, %v2193
    %2197 = vrot.lane.b32.xlu0 %v2195, 32
    %v2198 = vpop.permute.xlu0 %2197
    %v2200 = vadd.f32 %v2190, %v2198
    %v2201 = vtanh.pop %v2200
    %2203 = vrot.lane.b32.xlu0 %v2201, 32
    %v2204 = vpop.permute.xlu0 %2203
    %v2206 = vmul.f32 %v2188, %v2204
    %v2207 = vrot.slane %v2093, 1
    %v2208 = vsel %vm1853, %v2094, %v2207
    %2209 = vrot.lane.b32.xlu0 %v2208, 64
    %v2210 = vpop.permute.xlu0 %2209
    %v2211 = vsel %vm177, %v2210, 0
    %2213 = vmatprep.subr.mxu0 0.0
    %2214 = vmatpush1.msra.mxu0 0.0
    %2215 = vmatprep.subr.mxu0 0.0
    %2216 = vmatpush1.msra.mxu0 0.0
    %2217 = vmatprep.subr.mxu0 0.0
    %2218 = vmatpush1.msra.mxu0 0.0
    %2219 = vmatprep.subr.mxu0 0.0
    %2220 = vmatpush1.msra.mxu0 0.0
    %2221 = vmatprep.subr.mxu0 0.0
    %2222 = vmatpush1.msra.mxu0 0.0
    %2223 = vmatprep.subr.mxu0 0.0
    %2224 = vmatpush1.msra.mxu0 0.0
    %2225 = vmatprep.subr.mxu0 0.0
    %2226 = vmatpush1.msra.mxu0 0.0
    %2227 = vmatprep.subr.mxu0 0.0
    %2228 = vmatpush1.msra.mxu0 0.0
    %2229 = vmatprep.subr.mxu0 0.0
    %2230 = vmatpush1.msra.mxu0 0.0
    %2231 = vmatprep.subr.mxu0 0.0
    %2232 = vmatpush1.msra.mxu0 0.0
    %2233 = vmatprep.subr.mxu0 0.0
    %2234 = vmatpush1.msra.mxu0 0.0
    %2235 = vmatprep.subr.mxu0 0.0
    %2236 = vmatpush1.msra.mxu0 0.0
    %2237 = vmatprep.subr.mxu0 0.0
    %2238 = vmatpush1.msra.mxu0 %v1713
    %2239 = vmatprep.subr.mxu0 0.0
    %2240 = vmatpush1.msra.mxu0 %v1712
    %2241 = vmatprep.subr.mxu0 0.0
    %2242 = vmatpush1.msra.mxu0 %v1711
    %2243 = vmatprep.subr.mxu0 0.0
    %2244 = vmatpush1.msra.mxu0 %v1710
    %2245 = vmatprep.subr.mxu0 0.0
    %2246 = vmatpush2.msra.mxu0 0.0
    %2247 = vmatprep.subr.mxu0 0.0
    %2248 = vmatpush2.msra.mxu0 0.0
    %2249 = vmatprep.subr.mxu0 0.0
    %2250 = vmatpush2.msra.mxu0 0.0
    %2251 = vmatprep.subr.mxu0 0.0
    %2252 = vmatpush2.msra.mxu0 0.0
    %2253 = vmatprep.subr.mxu0 0.0
    %2254 = vmatpush2.msra.mxu0 0.0
    %2255 = vmatprep.subr.mxu0 0.0
    %2256 = vmatpush2.msra.mxu0 0.0
    %2257 = vmatprep.subr.mxu0 0.0
    %2258 = vmatpush2.msra.mxu0 0.0
    %2259 = vmatprep.subr.mxu0 0.0
    %2260 = vmatpush2.msra.mxu0 0.0
    %2261 = vmatprep.subr.mxu0 0.0
    %2262 = vmatpush2.msra.mxu0 0.0
    %2263 = vmatprep.subr.mxu0 0.0
    %2264 = vmatpush2.msra.mxu0 0.0
    %2265 = vmatprep.subr.mxu0 0.0
    %2266 = vmatpush2.msra.mxu0 0.0
    %2267 = vmatprep.subr.mxu0 0.0
    %2268 = vmatpush2.msra.mxu0 0.0
    %2269 = vmatprep.subr.mxu0 0.0
    %2270 = vmatpush2.msra.mxu0 0.0
    %2271 = vmatprep.subr.mxu0 0.0
    %2272 = vmatpush2.msra.mxu0 0.0
    %2273 = vmatprep.subr.mxu0 0.0
    %2274 = vmatpush2.msra.mxu0 0.0
    %2275 = vmatprep.subr.mxu0 0.0
    %2276 = vmatpush2.msra.mxu0 0.0
    %2277 = vmatprep.mubr.f32.mxu0 0.0
    %2278 = vmatmul.mubr.f32.gmra.mxu0 %v2211
    %v2279 = vpop.f32.mrf.mxu0
    %v2280 = vadd.f32 0.0, %v2279
    %v2281 = vpop.f32.mrf.mxu0
    %2282 = vdwg.mxu0
    %v2284 = vrot.slane %v2280, 6
    %v2285 = vrot.slane %v2280, 7
    %v2288 = vadd.f32 %v1702, %v2284
    %v2289 = vadd.f32 %v1707, %v2285
    %v2290 = vxor.u32 %v2288, 2147483648
    %v2291 = vxor.u32 %v2289, 2147483648
    %v2292 = vmul.f32 %v2290, 1.442695
    %v2293 = vpow.pop %v2292
    %v2294 = vmul.f32 %v2291, 1.442695
    %v2295 = vpow.pop %v2294
    %v2296 = vadd.f32 %v2293, 1.0
    %v2297 = vadd.f32 %v2295, 1.0
    %v2298 = vrcp.pop %v2296
    %v2299 = vmul.f32 1.0, %v2298
    %v2300 = vrcp.pop %v2297
    %v2301 = vmul.f32 1.0, %v2300
    %v2302 = vtanh.pop %v2288
    %v2303 = vtanh.pop %v2289
    %v2306 = vrot.slane %v2081, 7
    %v2307 = vrot.slane %v2082, 7
    %v2310 = vmul.f32 %v2299, %v2306
    %v2311 = vmul.f32 %v2301, %v2307
    %2314 = vrot.lane.b32.xlu0 %v2302, 32
    %v2315 = vpop.permute.xlu0 %2314
    %2316 = vrot.lane.b32.xlu0 %v2303, 32
    %v2317 = vpop.permute.xlu0 %2316
    %v2320 = vmul.f32 %v2299, %v2315
    %v2321 = vmul.f32 %v2301, %v2317
    %2324 = vrot.lane.b32.xlu0 %v2320, 32
    %v2325 = vpop.permute.xlu0 %2324
    %2326 = vrot.lane.b32.xlu0 %v2321, 32
    %v2327 = vpop.permute.xlu0 %2326
    %v2330 = vadd.f32 %v2310, %v2325
    %v2331 = vadd.f32 %v2311, %v2327
    %v2332 = vtanh.pop %v2330
    %v2333 = vtanh.pop %v2331
    %2336 = vrot.lane.b32.xlu0 %v2332, 32
    %v2337 = vpop.permute.xlu0 %2336
    %2338 = vrot.lane.b32.xlu0 %v2333, 32
    %v2339 = vpop.permute.xlu0 %2338
    %v2342 = vmul.f32 %v2299, %v2337
    %v2343 = vmul.f32 %v2301, %v2339
    %v2346 = vrot.slane %v2343, 7
    %vm2347 = vcmask 1043459
    %v2348 = vsel %vm2347, %v2346, %v2342
    %2349 = vrot.lane.b32.xlu0 %v2348, 64
    %v2350 = vpop.permute.xlu0 %2349
    %v2353 = vrot.slane %v2206, 6
    %2354 = vrot.lane.b32.xlu0 %v2353, 96
    %v2355 = vpop.permute.xlu0 %2354
    %v2357 = vsel %vm177, %v2350, %v2355
    %v2359 = vrot.slane %v2357, 2
    %v2360 = vsel %vm1865, %v2359, 0
    %2362 = vmatprep.subr.mxu0 0.0
    %2363 = vmatpush1.msra.mxu0 0.0
    %2364 = vmatprep.subr.mxu0 0.0
    %2365 = vmatpush1.msra.mxu0 0.0
    %2366 = vmatprep.subr.mxu0 0.0
    %2367 = vmatpush1.msra.mxu0 0.0
    %2368 = vmatprep.subr.mxu0 0.0
    %2369 = vmatpush1.msra.mxu0 0.0
    %2370 = vmatprep.subr.mxu0 0.0
    %2371 = vmatpush1.msra.mxu0 0.0
    %2372 = vmatprep.subr.mxu0 0.0
    %2373 = vmatpush1.msra.mxu0 0.0
    %2374 = vmatprep.subr.mxu0 0.0
    %2375 = vmatpush1.msra.mxu0 0.0
    %2376 = vmatprep.subr.mxu0 0.0
    %2377 = vmatpush1.msra.mxu0 0.0
    %2378 = vmatprep.subr.mxu0 0.0
    %2379 = vmatpush1.msra.mxu0 %v1721
    %2380 = vmatprep.subr.mxu0 0.0
    %2381 = vmatpush1.msra.mxu0 %v1720
    %2382 = vmatprep.subr.mxu0 0.0
    %2383 = vmatpush1.msra.mxu0 %v1719
    %2384 = vmatprep.subr.mxu0 0.0
    %2385 = vmatpush1.msra.mxu0 %v1718
    %2386 = vmatprep.subr.mxu0 0.0
    %2387 = vmatpush1.msra.mxu0 %v1717
    %2388 = vmatprep.subr.mxu0 0.0
    %2389 = vmatpush1.msra.mxu0 %v1716
    %2390 = vmatprep.subr.mxu0 0.0
    %2391 = vmatpush1.msra.mxu0 %v1715
    %2392 = vmatprep.subr.mxu0 0.0
    %2393 = vmatpush1.msra.mxu0 %v1714
    %2394 = vmatprep.subr.mxu0 0.0
    %2395 = vmatpush2.msra.mxu0 0.0
    %2396 = vmatprep.subr.mxu0 0.0
    %2397 = vmatpush2.msra.mxu0 0.0
    %2398 = vmatprep.subr.mxu0 0.0
    %2399 = vmatpush2.msra.mxu0 0.0
    %2400 = vmatprep.subr.mxu0 0.0
    %2401 = vmatpush2.msra.mxu0 0.0
    %2402 = vmatprep.subr.mxu0 0.0
    %2403 = vmatpush2.msra.mxu0 0.0
    %2404 = vmatprep.subr.mxu0 0.0
    %2405 = vmatpush2.msra.mxu0 0.0
    %2406 = vmatprep.subr.mxu0 0.0
    %2407 = vmatpush2.msra.mxu0 0.0
    %2408 = vmatprep.subr.mxu0 0.0
    %2409 = vmatpush2.msra.mxu0 0.0
    %2410 = vmatprep.subr.mxu0 0.0
    %2411 = vmatpush2.msra.mxu0 0.0
    %2412 = vmatprep.subr.mxu0 0.0
    %2413 = vmatpush2.msra.mxu0 0.0
    %2414 = vmatprep.subr.mxu0 0.0
    %2415 = vmatpush2.msra.mxu0 0.0
    %2416 = vmatprep.subr.mxu0 0.0
    %2417 = vmatpush2.msra.mxu0 0.0
    %2418 = vmatprep.subr.mxu0 0.0
    %2419 = vmatpush2.msra.mxu0 0.0
    %2420 = vmatprep.subr.mxu0 0.0
    %2421 = vmatpush2.msra.mxu0 0.0
    %2422 = vmatprep.subr.mxu0 0.0
    %2423 = vmatpush2.msra.mxu0 0.0
    %2424 = vmatprep.subr.mxu0 0.0
    %2425 = vmatpush2.msra.mxu0 0.0
    %2426 = vmatprep.mubr.f32.mxu0 0.0
    %2427 = vmatmul.mubr.f32.gmra.mxu0 %v2360
    %v2428 = vpop.f32.mrf.mxu0
    %v2429 = vadd.f32 %v1863, %v2428
    %v2430 = vpop.f32.mrf.mxu0
    %2431 = vdwg.mxu0
    %v2432 = vxor.u32 %v2429, 2147483648
    %v2433 = vmul.f32 %v2432, 1.442695
    %v2434 = vpow.pop %v2433
    %v2435 = vadd.f32 %v2434, 1.0
    %v2436 = vrcp.pop %v2435
    %v2437 = vmul.f32 1.0, %v2436
    %v2438 = vtanh.pop %v2429
    %v2439 = vmul.f32 %v2437, %v2200
    %2441 = vrot.lane.b32.xlu0 %v2438, 32
    %v2442 = vpop.permute.xlu0 %2441
    %v2444 = vmul.f32 %v2437, %v2442
    %2446 = vrot.lane.b32.xlu0 %v2444, 32
    %v2447 = vpop.permute.xlu0 %2446
    %v2449 = vadd.f32 %v2439, %v2447
    %v2450 = vtanh.pop %v2449
    %2452 = vrot.lane.b32.xlu0 %v2450, 32
    %v2453 = vpop.permute.xlu0 %2452
    %v2455 = vmul.f32 %v2437, %v2453
    %v2456 = vrot.slane %v2342, 2
    %v2457 = vrot.slane %v2343, 1
    %v2458 = vsel %vm1853, %v2457, %v2456
    %2459 = vrot.lane.b32.xlu0 %v2458, 64
    %v2460 = vpop.permute.xlu0 %2459
    %v2461 = vsel %vm177, %v2460, 0
    %2463 = vmatprep.subr.mxu0 0.0
    %2464 = vmatpush1.msra.mxu0 0.0
    %2465 = vmatprep.subr.mxu0 0.0
    %2466 = vmatpush1.msra.mxu0 0.0
    %2467 = vmatprep.subr.mxu0 0.0
    %2468 = vmatpush1.msra.mxu0 0.0
    %2469 = vmatprep.subr.mxu0 0.0
    %2470 = vmatpush1.msra.mxu0 0.0
    %2471 = vmatprep.subr.mxu0 0.0
    %2472 = vmatpush1.msra.mxu0 0.0
    %2473 = vmatprep.subr.mxu0 0.0
    %2474 = vmatpush1.msra.mxu0 0.0
    %2475 = vmatprep.subr.mxu0 0.0
    %2476 = vmatpush1.msra.mxu0 0.0
    %2477 = vmatprep.subr.mxu0 0.0
    %2478 = vmatpush1.msra.mxu0 0.0
    %2479 = vmatprep.subr.mxu0 0.0
    %2480 = vmatpush1.msra.mxu0 0.0
    %2481 = vmatprep.subr.mxu0 0.0
    %2482 = vmatpush1.msra.mxu0 0.0
    %2483 = vmatprep.subr.mxu0 0.0
    %2484 = vmatpush1.msra.mxu0 0.0
    %2485 = vmatprep.subr.mxu0 0.0
    %2486 = vmatpush1.msra.mxu0 0.0
    %2487 = vmatprep.subr.mxu0 0.0
    %2488 = vmatpush1.msra.mxu0 %v1713
    %2489 = vmatprep.subr.mxu0 0.0
    %2490 = vmatpush1.msra.mxu0 %v1712
    %2491 = vmatprep.subr.mxu0 0.0
    %2492 = vmatpush1.msra.mxu0 %v1711
    %2493 = vmatprep.subr.mxu0 0.0
    %2494 = vmatpush1.msra.mxu0 %v1710
    %2495 = vmatprep.subr.mxu0 0.0
    %2496 = vmatpush2.msra.mxu0 0.0
    %2497 = vmatprep.subr.mxu0 0.0
    %2498 = vmatpush2.msra.mxu0 0.0
    %2499 = vmatprep.subr.mxu0 0.0
    %2500 = vmatpush2.msra.mxu0 0.0
    %2501 = vmatprep.subr.mxu0 0.0
    %2502 = vmatpush2.msra.mxu0 0.0
    %2503 = vmatprep.subr.mxu0 0.0
    %2504 = vmatpush2.msra.mxu0 0.0
    %2505 = vmatprep.subr.mxu0 0.0
    %2506 = vmatpush2.msra.mxu0 0.0
    %2507 = vmatprep.subr.mxu0 0.0
    %2508 = vmatpush2.msra.mxu0 0.0
    %2509 = vmatprep.subr.mxu0 0.0
    %2510 = vmatpush2.msra.mxu0 0.0
    %2511 = vmatprep.subr.mxu0 0.0
    %2512 = vmatpush2.msra.mxu0 0.0
    %2513 = vmatprep.subr.mxu0 0.0
    %2514 = vmatpush2.msra.mxu0 0.0
    %2515 = vmatprep.subr.mxu0 0.0
    %2516 = vmatpush2.msra.mxu0 0.0
    %2517 = vmatprep.subr.mxu0 0.0
    %2518 = vmatpush2.msra.mxu0 0.0
    %2519 = vmatprep.subr.mxu0 0.0
    %2520 = vmatpush2.msra.mxu0 0.0
    %2521 = vmatprep.subr.mxu0 0.0
    %2522 = vmatpush2.msra.mxu0 0.0
    %2523 = vmatprep.subr.mxu0 0.0
    %2524 = vmatpush2.msra.mxu0 0.0
    %2525 = vmatprep.subr.mxu0 0.0
    %2526 = vmatpush2.msra.mxu0 0.0
    %2527 = vmatprep.mubr.f32.mxu0 0.0
    %2528 = vmatmul.mubr.f32.gmra.mxu0 %v2461
    %v2529 = vpop.f32.mrf.mxu0
    %v2530 = vadd.f32 0.0, %v2529
    %v2531 = vpop.f32.mrf.mxu0
    %2532 = vdwg.mxu0
    %v2534 = vrot.slane %v2530, 5
    %v2535 = vrot.slane %v2530, 6
    %v2538 = vadd.f32 %v1702, %v2534
    %v2539 = vadd.f32 %v1707, %v2535
    %v2540 = vxor.u32 %v2538, 2147483648
    %v2541 = vxor.u32 %v2539, 2147483648
    %v2542 = vmul.f32 %v2540, 1.442695
    %v2543 = vpow.pop %v2542
    %v2544 = vmul.f32 %v2541, 1.442695
    %v2545 = vpow.pop %v2544
    %v2546 = vadd.f32 %v2543, 1.0
    %v2547 = vadd.f32 %v2545, 1.0
    %v2548 = vrcp.pop %v2546
    %v2549 = vmul.f32 1.0, %v2548
    %v2550 = vrcp.pop %v2547
    %v2551 = vmul.f32 1.0, %v2550
    %v2552 = vtanh.pop %v2538
    %v2553 = vtanh.pop %v2539
    %v2556 = vrot.slane %v2330, 7
    %v2557 = vrot.slane %v2331, 7
    %v2560 = vmul.f32 %v2549, %v2556
    %v2561 = vmul.f32 %v2551, %v2557
    %2564 = vrot.lane.b32.xlu0 %v2552, 32
    %v2565 = vpop.permute.xlu0 %2564
    %2566 = vrot.lane.b32.xlu0 %v2553, 32
    %v2567 = vpop.permute.xlu0 %2566
    %v2570 = vmul.f32 %v2549, %v2565
    %v2571 = vmul.f32 %v2551, %v2567
    %2574 = vrot.lane.b32.xlu0 %v2570, 32
    %v2575 = vpop.permute.xlu0 %2574
    %2576 = vrot.lane.b32.xlu0 %v2571, 32
    %v2577 = vpop.permute.xlu0 %2576
    %v2580 = vadd.f32 %v2560, %v2575
    %v2581 = vadd.f32 %v2561, %v2577
    %v2582 = vtanh.pop %v2580
    %v2583 = vtanh.pop %v2581
    %2586 = vrot.lane.b32.xlu0 %v2582, 32
    %v2587 = vpop.permute.xlu0 %2586
    %2588 = vrot.lane.b32.xlu0 %v2583, 32
    %v2589 = vpop.permute.xlu0 %2588
    %v2592 = vmul.f32 %v2549, %v2587
    %v2593 = vmul.f32 %v2551, %v2589
    %v2596 = vrot.slane %v2593, 7
    %vm2597 = vcmask 1044484
    %v2598 = vsel %vm2597, %v2596, %v2592
    %2599 = vrot.lane.b32.xlu0 %v2598, 64
    %v2600 = vpop.permute.xlu0 %2599
    %v2603 = vrot.slane %v2455, 5
    %2604 = vrot.lane.b32.xlu0 %v2603, 96
    %v2605 = vpop.permute.xlu0 %2604
    %v2607 = vsel %vm177, %v2600, %v2605
    %v2609 = vrot.slane %v2607, 3
    %v2610 = vsel %vm1865, %v2609, 0
    %2612 = vmatprep.subr.mxu0 0.0
    %2613 = vmatpush1.msra.mxu0 0.0
    %2614 = vmatprep.subr.mxu0 0.0
    %2615 = vmatpush1.msra.mxu0 0.0
    %2616 = vmatprep.subr.mxu0 0.0
    %2617 = vmatpush1.msra.mxu0 0.0
    %2618 = vmatprep.subr.mxu0 0.0
    %2619 = vmatpush1.msra.mxu0 0.0
    %2620 = vmatprep.subr.mxu0 0.0
    %2621 = vmatpush1.msra.mxu0 0.0
    %2622 = vmatprep.subr.mxu0 0.0
    %2623 = vmatpush1.msra.mxu0 0.0
    %2624 = vmatprep.subr.mxu0 0.0
    %2625 = vmatpush1.msra.mxu0 0.0
    %2626 = vmatprep.subr.mxu0 0.0
    %2627 = vmatpush1.msra.mxu0 0.0
    %2628 = vmatprep.subr.mxu0 0.0
    %2629 = vmatpush1.msra.mxu0 %v1721
    %2630 = vmatprep.subr.mxu0 0.0
    %2631 = vmatpush1.msra.mxu0 %v1720
    %2632 = vmatprep.subr.mxu0 0.0
    %2633 = vmatpush1.msra.mxu0 %v1719
    %2634 = vmatprep.subr.mxu0 0.0
    %2635 = vmatpush1.msra.mxu0 %v1718
    %2636 = vmatprep.subr.mxu0 0.0
    %2637 = vmatpush1.msra.mxu0 %v1717
    %2638 = vmatprep.subr.mxu0 0.0
    %2639 = vmatpush1.msra.mxu0 %v1716
    %2640 = vmatprep.subr.mxu0 0.0
    %2641 = vmatpush1.msra.mxu0 %v1715
    %2642 = vmatprep.subr.mxu0 0.0
    %2643 = vmatpush1.msra.mxu0 %v1714
    %2644 = vmatprep.subr.mxu0 0.0
    %2645 = vmatpush2.msra.mxu0 0.0
    %2646 = vmatprep.subr.mxu0 0.0
    %2647 = vmatpush2.msra.mxu0 0.0
    %2648 = vmatprep.subr.mxu0 0.0
    %2649 = vmatpush2.msra.mxu0 0.0
    %2650 = vmatprep.subr.mxu0 0.0
    %2651 = vmatpush2.msra.mxu0 0.0
    %2652 = vmatprep.subr.mxu0 0.0
    %2653 = vmatpush2.msra.mxu0 0.0
    %2654 = vmatprep.subr.mxu0 0.0
    %2655 = vmatpush2.msra.mxu0 0.0
    %2656 = vmatprep.subr.mxu0 0.0
    %2657 = vmatpush2.msra.mxu0 0.0
    %2658 = vmatprep.subr.mxu0 0.0
    %2659 = vmatpush2.msra.mxu0 0.0
    %2660 = vmatprep.subr.mxu0 0.0
    %2661 = vmatpush2.msra.mxu0 0.0
    %2662 = vmatprep.subr.mxu0 0.0
    %2663 = vmatpush2.msra.mxu0 0.0
    %2664 = vmatprep.subr.mxu0 0.0
    %2665 = vmatpush2.msra.mxu0 0.0
    %2666 = vmatprep.subr.mxu0 0.0
    %2667 = vmatpush2.msra.mxu0 0.0
    %2668 = vmatprep.subr.mxu0 0.0
    %2669 = vmatpush2.msra.mxu0 0.0
    %2670 = vmatprep.subr.mxu0 0.0
    %2671 = vmatpush2.msra.mxu0 0.0
    %2672 = vmatprep.subr.mxu0 0.0
    %2673 = vmatpush2.msra.mxu0 0.0
    %2674 = vmatprep.subr.mxu0 0.0
    %2675 = vmatpush2.msra.mxu0 0.0
    %2676 = vmatprep.mubr.f32.mxu0 0.0
    %2677 = vmatmul.mubr.f32.gmra.mxu0 %v2610
    %v2678 = vpop.f32.mrf.mxu0
    %v2679 = vadd.f32 %v1863, %v2678
    %v2680 = vpop.f32.mrf.mxu0
    %2681 = vdwg.mxu0
    %v2682 = vxor.u32 %v2679, 2147483648
    %v2683 = vmul.f32 %v2682, 1.442695
    %v2684 = vpow.pop %v2683
    %v2685 = vadd.f32 %v2684, 1.0
    %v2686 = vrcp.pop %v2685
    %v2687 = vmul.f32 1.0, %v2686
    %v2688 = vtanh.pop %v2679
    %v2689 = vmul.f32 %v2687, %v2449
    %2691 = vrot.lane.b32.xlu0 %v2688, 32
    %v2692 = vpop.permute.xlu0 %2691
    %v2694 = vmul.f32 %v2687, %v2692
    %2696 = vrot.lane.b32.xlu0 %v2694, 32
    %v2697 = vpop.permute.xlu0 %2696
    %v2699 = vadd.f32 %v2689, %v2697
    %v2700 = vtanh.pop %v2699
    %2702 = vrot.lane.b32.xlu0 %v2700, 32
    %v2703 = vpop.permute.xlu0 %2702
    %v2705 = vmul.f32 %v2687, %v2703
    %v2706 = vrot.slane %v2592, 3
    %v2707 = vrot.slane %v2593, 2
    %v2708 = vsel %vm1853, %v2707, %v2706
    %2709 = vrot.lane.b32.xlu0 %v2708, 64
    %v2710 = vpop.permute.xlu0 %2709
    %v2711 = vsel %vm177, %v2710, 0
    %2713 = vmatprep.subr.mxu0 0.0
    %2714 = vmatpush1.msra.mxu0 0.0
    %2715 = vmatprep.subr.mxu0 0.0
    %2716 = vmatpush1.msra.mxu0 0.0
    %2717 = vmatprep.subr.mxu0 0.0
    %2718 = vmatpush1.msra.mxu0 0.0
    %2719 = vmatprep.subr.mxu0 0.0
    %2720 = vmatpush1.msra.mxu0 0.0
    %2721 = vmatprep.subr.mxu0 0.0
    %2722 = vmatpush1.msra.mxu0 0.0
    %2723 = vmatprep.subr.mxu0 0.0
    %2724 = vmatpush1.msra.mxu0 0.0
    %2725 = vmatprep.subr.mxu0 0.0
    %2726 = vmatpush1.msra.mxu0 0.0
    %2727 = vmatprep.subr.mxu0 0.0
    %2728 = vmatpush1.msra.mxu0 0.0
    %2729 = vmatprep.subr.mxu0 0.0
    %2730 = vmatpush1.msra.mxu0 0.0
    %2731 = vmatprep.subr.mxu0 0.0
    %2732 = vmatpush1.msra.mxu0 0.0
    %2733 = vmatprep.subr.mxu0 0.0
    %2734 = vmatpush1.msra.mxu0 0.0
    %2735 = vmatprep.subr.mxu0 0.0
    %2736 = vmatpush1.msra.mxu0 0.0
    %2737 = vmatprep.subr.mxu0 0.0
    %2738 = vmatpush1.msra.mxu0 %v1713
    %2739 = vmatprep.subr.mxu0 0.0
    %2740 = vmatpush1.msra.mxu0 %v1712
    %2741 = vmatprep.subr.mxu0 0.0
    %2742 = vmatpush1.msra.mxu0 %v1711
    %2743 = vmatprep.subr.mxu0 0.0
    %2744 = vmatpush1.msra.mxu0 %v1710
    %2745 = vmatprep.subr.mxu0 0.0
    %2746 = vmatpush2.msra.mxu0 0.0
    %2747 = vmatprep.subr.mxu0 0.0
    %2748 = vmatpush2.msra.mxu0 0.0
    %2749 = vmatprep.subr.mxu0 0.0
    %2750 = vmatpush2.msra.mxu0 0.0
    %2751 = vmatprep.subr.mxu0 0.0
    %2752 = vmatpush2.msra.mxu0 0.0
    %2753 = vmatprep.subr.mxu0 0.0
    %2754 = vmatpush2.msra.mxu0 0.0
    %2755 = vmatprep.subr.mxu0 0.0
    %2756 = vmatpush2.msra.mxu0 0.0
    %2757 = vmatprep.subr.mxu0 0.0
    %2758 = vmatpush2.msra.mxu0 0.0
    %2759 = vmatprep.subr.mxu0 0.0
    %2760 = vmatpush2.msra.mxu0 0.0
    %2761 = vmatprep.subr.mxu0 0.0
    %2762 = vmatpush2.msra.mxu0 0.0
    %2763 = vmatprep.subr.mxu0 0.0
    %2764 = vmatpush2.msra.mxu0 0.0
    %2765 = vmatprep.subr.mxu0 0.0
    %2766 = vmatpush2.msra.mxu0 0.0
    %2767 = vmatprep.subr.mxu0 0.0
    %2768 = vmatpush2.msra.mxu0 0.0
    %2769 = vmatprep.subr.mxu0 0.0
    %2770 = vmatpush2.msra.mxu0 0.0
    %2771 = vmatprep.subr.mxu0 0.0
    %2772 = vmatpush2.msra.mxu0 0.0
    %2773 = vmatprep.subr.mxu0 0.0
    %2774 = vmatpush2.msra.mxu0 0.0
    %2775 = vmatprep.subr.mxu0 0.0
    %2776 = vmatpush2.msra.mxu0 0.0
    %2777 = vmatprep.mubr.f32.mxu0 0.0
    %2778 = vmatmul.mubr.f32.gmra.mxu0 %v2711
    %v2779 = vpop.f32.mrf.mxu0
    %v2780 = vadd.f32 0.0, %v2779
    %v2781 = vpop.f32.mrf.mxu0
    %2782 = vdwg.mxu0
    %v2784 = vrot.slane %v2780, 4
    %v2785 = vrot.slane %v2780, 5
    %v2788 = vadd.f32 %v1702, %v2784
    %v2789 = vadd.f32 %v1707, %v2785
    %v2790 = vxor.u32 %v2788, 2147483648
    %v2791 = vxor.u32 %v2789, 2147483648
    %v2792 = vmul.f32 %v2790, 1.442695
    %v2793 = vpow.pop %v2792
    %v2794 = vmul.f32 %v2791, 1.442695
    %v2795 = vpow.pop %v2794
    %v2796 = vadd.f32 %v2793, 1.0
    %v2797 = vadd.f32 %v2795, 1.0
    %v2798 = vrcp.pop %v2796
    %v2799 = vmul.f32 1.0, %v2798
    %v2800 = vrcp.pop %v2797
    %v2801 = vmul.f32 1.0, %v2800
    %v2802 = vtanh.pop %v2788
    %v2803 = vtanh.pop %v2789
    %v2806 = vrot.slane %v2580, 7
    %v2807 = vrot.slane %v2581, 7
    %v2810 = vmul.f32 %v2799, %v2806
    %v2811 = vmul.f32 %v2801, %v2807
    %2814 = vrot.lane.b32.xlu0 %v2802, 32
    %v2815 = vpop.permute.xlu0 %2814
    %2816 = vrot.lane.b32.xlu0 %v2803, 32
    %v2817 = vpop.permute.xlu0 %2816
    %v2820 = vmul.f32 %v2799, %v2815
    %v2821 = vmul.f32 %v2801, %v2817
    %2824 = vrot.lane.b32.xlu0 %v2820, 32
    %v2825 = vpop.permute.xlu0 %2824
    %2826 = vrot.lane.b32.xlu0 %v2821, 32
    %v2827 = vpop.permute.xlu0 %2826
    %v2830 = vadd.f32 %v2810, %v2825
    %v2831 = vadd.f32 %v2811, %v2827
    %v2832 = vtanh.pop %v2830
    %v2833 = vtanh.pop %v2831
    %2836 = vrot.lane.b32.xlu0 %v2832, 32
    %v2837 = vpop.permute.xlu0 %2836
    %2838 = vrot.lane.b32.xlu0 %v2833, 32
    %v2839 = vpop.permute.xlu0 %2838
    %v2842 = vmul.f32 %v2799, %v2837
    %v2843 = vmul.f32 %v2801, %v2839
    %v2846 = vrot.slane %v2843, 7
    %vm2847 = vcmask 1045509
    %v2848 = vsel %vm2847, %v2846, %v2842
    %2849 = vrot.lane.b32.xlu0 %v2848, 64
    %v2850 = vpop.permute.xlu0 %2849
    %v2853 = vrot.slane %v2705, 4
    %2854 = vrot.lane.b32.xlu0 %v2853, 96
    %v2855 = vpop.permute.xlu0 %2854
    %v2857 = vsel %vm177, %v2850, %v2855
    %v2859 = vrot.slane %v2857, 4
    %v2860 = vsel %vm1865, %v2859, 0
    %2862 = vmatprep.subr.mxu0 0.0
    %2863 = vmatpush1.msra.mxu0 0.0
    %2864 = vmatprep.subr.mxu0 0.0
    %2865 = vmatpush1.msra.mxu0 0.0
    %2866 = vmatprep.subr.mxu0 0.0
    %2867 = vmatpush1.msra.mxu0 0.0
    %2868 = vmatprep.subr.mxu0 0.0
    %2869 = vmatpush1.msra.mxu0 0.0
    %2870 = vmatprep.subr.mxu0 0.0
    %2871 = vmatpush1.msra.mxu0 0.0
    %2872 = vmatprep.subr.mxu0 0.0
    %2873 = vmatpush1.msra.mxu0 0.0
    %2874 = vmatprep.subr.mxu0 0.0
    %2875 = vmatpush1.msra.mxu0 0.0
    %2876 = vmatprep.subr.mxu0 0.0
    %2877 = vmatpush1.msra.mxu0 0.0
    %2878 = vmatprep.subr.mxu0 0.0
    %2879 = vmatpush1.msra.mxu0 %v1721
    %2880 = vmatprep.subr.mxu0 0.0
    %2881 = vmatpush1.msra.mxu0 %v1720
    %2882 = vmatprep.subr.mxu0 0.0
    %2883 = vmatpush1.msra.mxu0 %v1719
    %2884 = vmatprep.subr.mxu0 0.0
    %2885 = vmatpush1.msra.mxu0 %v1718
    %2886 = vmatprep.subr.mxu0 0.0
    %2887 = vmatpush1.msra.mxu0 %v1717
    %2888 = vmatprep.subr.mxu0 0.0
    %2889 = vmatpush1.msra.mxu0 %v1716
    %2890 = vmatprep.subr.mxu0 0.0
    %2891 = vmatpush1.msra.mxu0 %v1715
    %2892 = vmatprep.subr.mxu0 0.0
    %2893 = vmatpush1.msra.mxu0 %v1714
    %2894 = vmatprep.subr.mxu0 0.0
    %2895 = vmatpush2.msra.mxu0 0.0
    %2896 = vmatprep.subr.mxu0 0.0
    %2897 = vmatpush2.msra.mxu0 0.0
    %2898 = vmatprep.subr.mxu0 0.0
    %2899 = vmatpush2.msra.mxu0 0.0
    %2900 = vmatprep.subr.mxu0 0.0
    %2901 = vmatpush2.msra.mxu0 0.0
    %2902 = vmatprep.subr.mxu0 0.0
    %2903 = vmatpush2.msra.mxu0 0.0
    %2904 = vmatprep.subr.mxu0 0.0
    %2905 = vmatpush2.msra.mxu0 0.0
    %2906 = vmatprep.subr.mxu0 0.0
    %2907 = vmatpush2.msra.mxu0 0.0
    %2908 = vmatprep.subr.mxu0 0.0
    %2909 = vmatpush2.msra.mxu0 0.0
    %2910 = vmatprep.subr.mxu0 0.0
    %2911 = vmatpush2.msra.mxu0 0.0
    %2912 = vmatprep.subr.mxu0 0.0
    %2913 = vmatpush2.msra.mxu0 0.0
    %2914 = vmatprep.subr.mxu0 0.0
    %2915 = vmatpush2.msra.mxu0 0.0
    %2916 = vmatprep.subr.mxu0 0.0
    %2917 = vmatpush2.msra.mxu0 0.0
    %2918 = vmatprep.subr.mxu0 0.0
    %2919 = vmatpush2.msra.mxu0 0.0
    %2920 = vmatprep.subr.mxu0 0.0
    %2921 = vmatpush2.msra.mxu0 0.0
    %2922 = vmatprep.subr.mxu0 0.0
    %2923 = vmatpush2.msra.mxu0 0.0
    %2924 = vmatprep.subr.mxu0 0.0
    %2925 = vmatpush2.msra.mxu0 0.0
    %2926 = vmatprep.mubr.f32.mxu0 0.0
    %2927 = vmatmul.mubr.f32.gmra.mxu0 %v2860
    %v2928 = vpop.f32.mrf.mxu0
    %v2929 = vadd.f32 %v1863, %v2928
    %v2930 = vpop.f32.mrf.mxu0
    %2931 = vdwg.mxu0
    %v2932 = vxor.u32 %v2929, 2147483648
    %v2933 = vmul.f32 %v2932, 1.442695
    %v2934 = vpow.pop %v2933
    %v2935 = vadd.f32 %v2934, 1.0
    %v2936 = vrcp.pop %v2935
    %v2937 = vmul.f32 1.0, %v2936
    %v2938 = vtanh.pop %v2929
    %v2939 = vmul.f32 %v2937, %v2699
    %2941 = vrot.lane.b32.xlu0 %v2938, 32
    %v2942 = vpop.permute.xlu0 %2941
    %v2944 = vmul.f32 %v2937, %v2942
    %2946 = vrot.lane.b32.xlu0 %v2944, 32
    %v2947 = vpop.permute.xlu0 %2946
    %v2949 = vadd.f32 %v2939, %v2947
    %v2950 = vtanh.pop %v2949
    %2952 = vrot.lane.b32.xlu0 %v2950, 32
    %v2953 = vpop.permute.xlu0 %2952
    %v2955 = vmul.f32 %v2937, %v2953
    %v2956 = vrot.slane %v2842, 4
    %v2957 = vrot.slane %v2843, 3
    %v2958 = vsel %vm1853, %v2957, %v2956
    %2959 = vrot.lane.b32.xlu0 %v2958, 64
    %v2960 = vpop.permute.xlu0 %2959
    %v2961 = vsel %vm177, %v2960, 0
    %2963 = vmatprep.subr.mxu0 0.0
    %2964 = vmatpush1.msra.mxu0 0.0
    %2965 = vmatprep.subr.mxu0 0.0
    %2966 = vmatpush1.msra.mxu0 0.0
    %2967 = vmatprep.subr.mxu0 0.0
    %2968 = vmatpush1.msra.mxu0 0.0
    %2969 = vmatprep.subr.mxu0 0.0
    %2970 = vmatpush1.msra.mxu0 0.0
    %2971 = vmatprep.subr.mxu0 0.0
    %2972 = vmatpush1.msra.mxu0 0.0
    %2973 = vmatprep.subr.mxu0 0.0
    %2974 = vmatpush1.msra.mxu0 0.0
    %2975 = vmatprep.subr.mxu0 0.0
    %2976 = vmatpush1.msra.mxu0 0.0
    %2977 = vmatprep.subr.mxu0 0.0
    %2978 = vmatpush1.msra.mxu0 0.0
    %2979 = vmatprep.subr.mxu0 0.0
    %2980 = vmatpush1.msra.mxu0 0.0
    %2981 = vmatprep.subr.mxu0 0.0
    %2982 = vmatpush1.msra.mxu0 0.0
    %2983 = vmatprep.subr.mxu0 0.0
    %2984 = vmatpush1.msra.mxu0 0.0
    %2985 = vmatprep.subr.mxu0 0.0
    %2986 = vmatpush1.msra.mxu0 0.0
    %2987 = vmatprep.subr.mxu0 0.0
    %2988 = vmatpush1.msra.mxu0 %v1713
    %2989 = vmatprep.subr.mxu0 0.0
    %2990 = vmatpush1.msra.mxu0 %v1712
    %2991 = vmatprep.subr.mxu0 0.0
    %2992 = vmatpush1.msra.mxu0 %v1711
    %2993 = vmatprep.subr.mxu0 0.0
    %2994 = vmatpush1.msra.mxu0 %v1710
    %2995 = vmatprep.subr.mxu0 0.0
    %2996 = vmatpush2.msra.mxu0 0.0
    %2997 = vmatprep.subr.mxu0 0.0
    %2998 = vmatpush2.msra.mxu0 0.0
    %2999 = vmatprep.subr.mxu0 0.0
    %3000 = vmatpush2.msra.mxu0 0.0
    %3001 = vmatprep.subr.mxu0 0.0
    %3002 = vmatpush2.msra.mxu0 0.0
    %3003 = vmatprep.subr.mxu0 0.0
    %3004 = vmatpush2.msra.mxu0 0.0
    %3005 = vmatprep.subr.mxu0 0.0
    %3006 = vmatpush2.msra.mxu0 0.0
    %3007 = vmatprep.subr.mxu0 0.0
    %3008 = vmatpush2.msra.mxu0 0.0
    %3009 = vmatprep.subr.mxu0 0.0
    %3010 = vmatpush2.msra.mxu0 0.0
    %3011 = vmatprep.subr.mxu0 0.0
    %3012 = vmatpush2.msra.mxu0 0.0
    %3013 = vmatprep.subr.mxu0 0.0
    %3014 = vmatpush2.msra.mxu0 0.0
    %3015 = vmatprep.subr.mxu0 0.0
    %3016 = vmatpush2.msra.mxu0 0.0
    %3017 = vmatprep.subr.mxu0 0.0
    %3018 = vmatpush2.msra.mxu0 0.0
    %3019 = vmatprep.subr.mxu0 0.0
    %3020 = vmatpush2.msra.mxu0 0.0
    %3021 = vmatprep.subr.mxu0 0.0
    %3022 = vmatpush2.msra.mxu0 0.0
    %3023 = vmatprep.subr.mxu0 0.0
    %3024 = vmatpush2.msra.mxu0 0.0
    %3025 = vmatprep.subr.mxu0 0.0
    %3026 = vmatpush2.msra.mxu0 0.0
    %3027 = vmatprep.mubr.f32.mxu0 0.0
    %3028 = vmatmul.mubr.f32.gmra.mxu0 %v2961
    %v3029 = vpop.f32.mrf.mxu0
    %v3030 = vadd.f32 0.0, %v3029
    %v3031 = vpop.f32.mrf.mxu0
    %3032 = vdwg.mxu0
    %v3034 = vrot.slane %v3030, 3
    %v3035 = vrot.slane %v3030, 4
    %v3038 = vadd.f32 %v1702, %v3034
    %v3039 = vadd.f32 %v1707, %v3035
    %v3040 = vxor.u32 %v3038, 2147483648
    %v3041 = vxor.u32 %v3039, 2147483648
    %v3042 = vmul.f32 %v3040, 1.442695
    %v3043 = vpow.pop %v3042
    %v3044 = vmul.f32 %v3041, 1.442695
    %v3045 = vpow.pop %v3044
    %v3046 = vadd.f32 %v3043, 1.0
    %v3047 = vadd.f32 %v3045, 1.0
    %v3048 = vrcp.pop %v3046
    %v3049 = vmul.f32 1.0, %v3048
    %v3050 = vrcp.pop %v3047
    %v3051 = vmul.f32 1.0, %v3050
    %v3052 = vtanh.pop %v3038
    %v3053 = vtanh.pop %v3039
    %v3056 = vrot.slane %v2830, 7
    %v3057 = vrot.slane %v2831, 7
    %v3060 = vmul.f32 %v3049, %v3056
    %v3061 = vmul.f32 %v3051, %v3057
    %3064 = vrot.lane.b32.xlu0 %v3052, 32
    %v3065 = vpop.permute.xlu0 %3064
    %3066 = vrot.lane.b32.xlu0 %v3053, 32
    %v3067 = vpop.permute.xlu0 %3066
    %v3070 = vmul.f32 %v3049, %v3065
    %v3071 = vmul.f32 %v3051, %v3067
    %3074 = vrot.lane.b32.xlu0 %v3070, 32
    %v3075 = vpop.permute.xlu0 %3074
    %3076 = vrot.lane.b32.xlu0 %v3071, 32
    %v3077 = vpop.permute.xlu0 %3076
    %v3080 = vadd.f32 %v3060, %v3075
    %v3081 = vadd.f32 %v3061, %v3077
    %v3082 = vtanh.pop %v3080
    %v3083 = vtanh.pop %v3081
    %3086 = vrot.lane.b32.xlu0 %v3082, 32
    %v3087 = vpop.permute.xlu0 %3086
    %3088 = vrot.lane.b32.xlu0 %v3083, 32
    %v3089 = vpop.permute.xlu0 %3088
    %v3092 = vmul.f32 %v3049, %v3087
    %v3093 = vmul.f32 %v3051, %v3089
    %v3096 = vrot.slane %v3093, 7
    %vm3097 = vcmask 1046534
    %v3098 = vsel %vm3097, %v3096, %v3092
    %3099 = vrot.lane.b32.xlu0 %v3098, 64
    %v3100 = vpop.permute.xlu0 %3099
    %v3103 = vrot.slane %v2955, 3
    %3104 = vrot.lane.b32.xlu0 %v3103, 96
    %v3105 = vpop.permute.xlu0 %3104
    %v3107 = vsel %vm177, %v3100, %v3105
    %v3109 = vrot.slane %v3107, 5
    %v3110 = vsel %vm1865, %v3109, 0
    %3112 = vmatprep.subr.mxu0 0.0
    %3113 = vmatpush1.msra.mxu0 0.0
    %3114 = vmatprep.subr.mxu0 0.0
    %3115 = vmatpush1.msra.mxu0 0.0
    %3116 = vmatprep.subr.mxu0 0.0
    %3117 = vmatpush1.msra.mxu0 0.0
    %3118 = vmatprep.subr.mxu0 0.0
    %3119 = vmatpush1.msra.mxu0 0.0
    %3120 = vmatprep.subr.mxu0 0.0
    %3121 = vmatpush1.msra.mxu0 0.0
    %3122 = vmatprep.subr.mxu0 0.0
    %3123 = vmatpush1.msra.mxu0 0.0
    %3124 = vmatprep.subr.mxu0 0.0
    %3125 = vmatpush1.msra.mxu0 0.0
    %3126 = vmatprep.subr.mxu0 0.0
    %3127 = vmatpush1.msra.mxu0 0.0
    %3128 = vmatprep.subr.mxu0 0.0
    %3129 = vmatpush1.msra.mxu0 %v1721
    %3130 = vmatprep.subr.mxu0 0.0
    %3131 = vmatpush1.msra.mxu0 %v1720
    %3132 = vmatprep.subr.mxu0 0.0
    %3133 = vmatpush1.msra.mxu0 %v1719
    %3134 = vmatprep.subr.mxu0 0.0
    %3135 = vmatpush1.msra.mxu0 %v1718
    %3136 = vmatprep.subr.mxu0 0.0
    %3137 = vmatpush1.msra.mxu0 %v1717
    %3138 = vmatprep.subr.mxu0 0.0
    %3139 = vmatpush1.msra.mxu0 %v1716
    %3140 = vmatprep.subr.mxu0 0.0
    %3141 = vmatpush1.msra.mxu0 %v1715
    %3142 = vmatprep.subr.mxu0 0.0
    %3143 = vmatpush1.msra.mxu0 %v1714
    %3144 = vmatprep.subr.mxu0 0.0
    %3145 = vmatpush2.msra.mxu0 0.0
    %3146 = vmatprep.subr.mxu0 0.0
    %3147 = vmatpush2.msra.mxu0 0.0
    %3148 = vmatprep.subr.mxu0 0.0
    %3149 = vmatpush2.msra.mxu0 0.0
    %3150 = vmatprep.subr.mxu0 0.0
    %3151 = vmatpush2.msra.mxu0 0.0
    %3152 = vmatprep.subr.mxu0 0.0
    %3153 = vmatpush2.msra.mxu0 0.0
    %3154 = vmatprep.subr.mxu0 0.0
    %3155 = vmatpush2.msra.mxu0 0.0
    %3156 = vmatprep.subr.mxu0 0.0
    %3157 = vmatpush2.msra.mxu0 0.0
    %3158 = vmatprep.subr.mxu0 0.0
    %3159 = vmatpush2.msra.mxu0 0.0
    %3160 = vmatprep.subr.mxu0 0.0
    %3161 = vmatpush2.msra.mxu0 0.0
    %3162 = vmatprep.subr.mxu0 0.0
    %3163 = vmatpush2.msra.mxu0 0.0
    %3164 = vmatprep.subr.mxu0 0.0
    %3165 = vmatpush2.msra.mxu0 0.0
    %3166 = vmatprep.subr.mxu0 0.0
    %3167 = vmatpush2.msra.mxu0 0.0
    %3168 = vmatprep.subr.mxu0 0.0
    %3169 = vmatpush2.msra.mxu0 0.0
    %3170 = vmatprep.subr.mxu0 0.0
    %3171 = vmatpush2.msra.mxu0 0.0
    %3172 = vmatprep.subr.mxu0 0.0
    %3173 = vmatpush2.msra.mxu0 0.0
    %3174 = vmatprep.subr.mxu0 0.0
    %3175 = vmatpush2.msra.mxu0 0.0
    %3176 = vmatprep.mubr.f32.mxu0 0.0
    %3177 = vmatmul.mubr.f32.gmra.mxu0 %v3110
    %v3178 = vpop.f32.mrf.mxu0
    %v3179 = vadd.f32 %v1863, %v3178
    %v3180 = vpop.f32.mrf.mxu0
    %3181 = vdwg.mxu0
    %v3182 = vxor.u32 %v3179, 2147483648
    %v3183 = vmul.f32 %v3182, 1.442695
    %v3184 = vpow.pop %v3183
    %v3185 = vadd.f32 %v3184, 1.0
    %v3186 = vrcp.pop %v3185
    %v3187 = vmul.f32 1.0, %v3186
    %v3188 = vtanh.pop %v3179
    %v3189 = vmul.f32 %v3187, %v2949
    %3191 = vrot.lane.b32.xlu0 %v3188, 32
    %v3192 = vpop.permute.xlu0 %3191
    %v3194 = vmul.f32 %v3187, %v3192
    %3196 = vrot.lane.b32.xlu0 %v3194, 32
    %v3197 = vpop.permute.xlu0 %3196
    %v3199 = vadd.f32 %v3189, %v3197
    %v3200 = vtanh.pop %v3199
    %3202 = vrot.lane.b32.xlu0 %v3200, 32
    %v3203 = vpop.permute.xlu0 %3202
    %v3205 = vmul.f32 %v3187, %v3203
    %v3206 = vrot.slane %v3092, 5
    %v3207 = vrot.slane %v3093, 4
    %v3208 = vsel %vm1853, %v3207, %v3206
    %3209 = vrot.lane.b32.xlu0 %v3208, 64
    %v3210 = vpop.permute.xlu0 %3209
    %v3211 = vsel %vm177, %v3210, 0
    %3213 = vmatprep.subr.mxu0 0.0
    %3214 = vmatpush1.msra.mxu0 0.0
    %3215 = vmatprep.subr.mxu0 0.0
    %3216 = vmatpush1.msra.mxu0 0.0
    %3217 = vmatprep.subr.mxu0 0.0
    %3218 = vmatpush1.msra.mxu0 0.0
    %3219 = vmatprep.subr.mxu0 0.0
    %3220 = vmatpush1.msra.mxu0 0.0
    %3221 = vmatprep.subr.mxu0 0.0
    %3222 = vmatpush1.msra.mxu0 0.0
    %3223 = vmatprep.subr.mxu0 0.0
    %3224 = vmatpush1.msra.mxu0 0.0
    %3225 = vmatprep.subr.mxu0 0.0
    %3226 = vmatpush1.msra.mxu0 0.0
    %3227 = vmatprep.subr.mxu0 0.0
    %3228 = vmatpush1.msra.mxu0 0.0
    %3229 = vmatprep.subr.mxu0 0.0
    %3230 = vmatpush1.msra.mxu0 0.0
    %3231 = vmatprep.subr.mxu0 0.0
    %3232 = vmatpush1.msra.mxu0 0.0
    %3233 = vmatprep.subr.mxu0 0.0
    %3234 = vmatpush1.msra.mxu0 0.0
    %3235 = vmatprep.subr.mxu0 0.0
    %3236 = vmatpush1.msra.mxu0 0.0
    %3237 = vmatprep.subr.mxu0 0.0
    %3238 = vmatpush1.msra.mxu0 %v1713
    %3239 = vmatprep.subr.mxu0 0.0
    %3240 = vmatpush1.msra.mxu0 %v1712
    %3241 = vmatprep.subr.mxu0 0.0
    %3242 = vmatpush1.msra.mxu0 %v1711
    %3243 = vmatprep.subr.mxu0 0.0
    %3244 = vmatpush1.msra.mxu0 %v1710
    %3245 = vmatprep.subr.mxu0 0.0
    %3246 = vmatpush2.msra.mxu0 0.0
    %3247 = vmatprep.subr.mxu0 0.0
    %3248 = vmatpush2.msra.mxu0 0.0
    %3249 = vmatprep.subr.mxu0 0.0
    %3250 = vmatpush2.msra.mxu0 0.0
    %3251 = vmatprep.subr.mxu0 0.0
    %3252 = vmatpush2.msra.mxu0 0.0
    %3253 = vmatprep.subr.mxu0 0.0
    %3254 = vmatpush2.msra.mxu0 0.0
    %3255 = vmatprep.subr.mxu0 0.0
    %3256 = vmatpush2.msra.mxu0 0.0
    %3257 = vmatprep.subr.mxu0 0.0
    %3258 = vmatpush2.msra.mxu0 0.0
    %3259 = vmatprep.subr.mxu0 0.0
    %3260 = vmatpush2.msra.mxu0 0.0
    %3261 = vmatprep.subr.mxu0 0.0
    %3262 = vmatpush2.msra.mxu0 0.0
    %3263 = vmatprep.subr.mxu0 0.0
    %3264 = vmatpush2.msra.mxu0 0.0
    %3265 = vmatprep.subr.mxu0 0.0
    %3266 = vmatpush2.msra.mxu0 0.0
    %3267 = vmatprep.subr.mxu0 0.0
    %3268 = vmatpush2.msra.mxu0 0.0
    %3269 = vmatprep.subr.mxu0 0.0
    %3270 = vmatpush2.msra.mxu0 0.0
    %3271 = vmatprep.subr.mxu0 0.0
    %3272 = vmatpush2.msra.mxu0 0.0
    %3273 = vmatprep.subr.mxu0 0.0
    %3274 = vmatpush2.msra.mxu0 0.0
    %3275 = vmatprep.subr.mxu0 0.0
    %3276 = vmatpush2.msra.mxu0 0.0
    %3277 = vmatprep.mubr.f32.mxu0 0.0
    %3278 = vmatmul.mubr.f32.gmra.mxu0 %v3211
    %v3279 = vpop.f32.mrf.mxu0
    %v3280 = vadd.f32 0.0, %v3279
    %v3281 = vpop.f32.mrf.mxu0
    %3282 = vdwg.mxu0
    %v3284 = vrot.slane %v3280, 2
    %v3285 = vrot.slane %v3280, 3
    %v3288 = vadd.f32 %v1702, %v3284
    %v3289 = vadd.f32 %v1707, %v3285
    %v3290 = vxor.u32 %v3288, 2147483648
    %v3291 = vxor.u32 %v3289, 2147483648
    %v3292 = vmul.f32 %v3290, 1.442695
    %v3293 = vpow.pop %v3292
    %v3294 = vmul.f32 %v3291, 1.442695
    %v3295 = vpow.pop %v3294
    %v3296 = vadd.f32 %v3293, 1.0
    %v3297 = vadd.f32 %v3295, 1.0
    %v3298 = vrcp.pop %v3296
    %v3299 = vmul.f32 1.0, %v3298
    %v3300 = vrcp.pop %v3297
    %v3301 = vmul.f32 1.0, %v3300
    %v3302 = vtanh.pop %v3288
    %v3303 = vtanh.pop %v3289
    %v3306 = vrot.slane %v3080, 7
    %v3307 = vrot.slane %v3081, 7
    %v3310 = vmul.f32 %v3299, %v3306
    %v3311 = vmul.f32 %v3301, %v3307
    %3314 = vrot.lane.b32.xlu0 %v3302, 32
    %v3315 = vpop.permute.xlu0 %3314
    %3316 = vrot.lane.b32.xlu0 %v3303, 32
    %v3317 = vpop.permute.xlu0 %3316
    %v3320 = vmul.f32 %v3299, %v3315
    %v3321 = vmul.f32 %v3301, %v3317
    %3324 = vrot.lane.b32.xlu0 %v3320, 32
    %v3325 = vpop.permute.xlu0 %3324
    %3326 = vrot.lane.b32.xlu0 %v3321, 32
    %v3327 = vpop.permute.xlu0 %3326
    %v3330 = vadd.f32 %v3310, %v3325
    %v3331 = vadd.f32 %v3311, %v3327
    %v3332 = vtanh.pop %v3330
    %v3333 = vtanh.pop %v3331
    %3336 = vrot.lane.b32.xlu0 %v3332, 32
    %v3337 = vpop.permute.xlu0 %3336
    %3338 = vrot.lane.b32.xlu0 %v3333, 32
    %v3339 = vpop.permute.xlu0 %3338
    %v3342 = vmul.f32 %v3299, %v3337
    %v3343 = vmul.f32 %v3301, %v3339
    %v3346 = vrot.slane %v3343, 7
    %vm3347 = vcmask 1047559
    %v3348 = vsel %vm3347, %v3346, %v3342
    %3349 = vrot.lane.b32.xlu0 %v3348, 64
    %v3350 = vpop.permute.xlu0 %3349
    %v3353 = vrot.slane %v3205, 2
    %3354 = vrot.lane.b32.xlu0 %v3353, 96
    %v3355 = vpop.permute.xlu0 %3354
    %v3357 = vsel %vm177, %v3350, %v3355
    %v3359 = vrot.slane %v3357, 6
    %v3360 = vsel %vm1865, %v3359, 0
    %3362 = vmatprep.subr.mxu0 0.0
    %3363 = vmatpush1.msra.mxu0 0.0
    %3364 = vmatprep.subr.mxu0 0.0
    %3365 = vmatpush1.msra.mxu0 0.0
    %3366 = vmatprep.subr.mxu0 0.0
    %3367 = vmatpush1.msra.mxu0 0.0
    %3368 = vmatprep.subr.mxu0 0.0
    %3369 = vmatpush1.msra.mxu0 0.0
    %3370 = vmatprep.subr.mxu0 0.0
    %3371 = vmatpush1.msra.mxu0 0.0
    %3372 = vmatprep.subr.mxu0 0.0
    %3373 = vmatpush1.msra.mxu0 0.0
    %3374 = vmatprep.subr.mxu0 0.0
    %3375 = vmatpush1.msra.mxu0 0.0
    %3376 = vmatprep.subr.mxu0 0.0
    %3377 = vmatpush1.msra.mxu0 0.0
    %3378 = vmatprep.subr.mxu0 0.0
    %3379 = vmatpush1.msra.mxu0 %v1721
    %3380 = vmatprep.subr.mxu0 0.0
    %3381 = vmatpush1.msra.mxu0 %v1720
    %3382 = vmatprep.subr.mxu0 0.0
    %3383 = vmatpush1.msra.mxu0 %v1719
    %3384 = vmatprep.subr.mxu0 0.0
    %3385 = vmatpush1.msra.mxu0 %v1718
    %3386 = vmatprep.subr.mxu0 0.0
    %3387 = vmatpush1.msra.mxu0 %v1717
    %3388 = vmatprep.subr.mxu0 0.0
    %3389 = vmatpush1.msra.mxu0 %v1716
    %3390 = vmatprep.subr.mxu0 0.0
    %3391 = vmatpush1.msra.mxu0 %v1715
    %3392 = vmatprep.subr.mxu0 0.0
    %3393 = vmatpush1.msra.mxu0 %v1714
    %3394 = vmatprep.subr.mxu0 0.0
    %3395 = vmatpush2.msra.mxu0 0.0
    %3396 = vmatprep.subr.mxu0 0.0
    %3397 = vmatpush2.msra.mxu0 0.0
    %3398 = vmatprep.subr.mxu0 0.0
    %3399 = vmatpush2.msra.mxu0 0.0
    %3400 = vmatprep.subr.mxu0 0.0
    %3401 = vmatpush2.msra.mxu0 0.0
    %3402 = vmatprep.subr.mxu0 0.0
    %3403 = vmatpush2.msra.mxu0 0.0
    %3404 = vmatprep.subr.mxu0 0.0
    %3405 = vmatpush2.msra.mxu0 0.0
    %3406 = vmatprep.subr.mxu0 0.0
    %3407 = vmatpush2.msra.mxu0 0.0
    %3408 = vmatprep.subr.mxu0 0.0
    %3409 = vmatpush2.msra.mxu0 0.0
    %3410 = vmatprep.subr.mxu0 0.0
    %3411 = vmatpush2.msra.mxu0 0.0
    %3412 = vmatprep.subr.mxu0 0.0
    %3413 = vmatpush2.msra.mxu0 0.0
    %3414 = vmatprep.subr.mxu0 0.0
    %3415 = vmatpush2.msra.mxu0 0.0
    %3416 = vmatprep.subr.mxu0 0.0
    %3417 = vmatpush2.msra.mxu0 0.0
    %3418 = vmatprep.subr.mxu0 0.0
    %3419 = vmatpush2.msra.mxu0 0.0
    %3420 = vmatprep.subr.mxu0 0.0
    %3421 = vmatpush2.msra.mxu0 0.0
    %3422 = vmatprep.subr.mxu0 0.0
    %3423 = vmatpush2.msra.mxu0 0.0
    %3424 = vmatprep.subr.mxu0 0.0
    %3425 = vmatpush2.msra.mxu0 0.0
    %3426 = vmatprep.mubr.f32.mxu0 0.0
    %3427 = vmatmul.mubr.f32.gmra.mxu0 %v3360
    %v3428 = vpop.f32.mrf.mxu0
    %v3429 = vadd.f32 %v1863, %v3428
    %v3430 = vpop.f32.mrf.mxu0
    %3431 = vdwg.mxu0
    %v3432 = vxor.u32 %v3429, 2147483648
    %v3433 = vmul.f32 %v3432, 1.442695
    %v3434 = vpow.pop %v3433
    %v3435 = vadd.f32 %v3434, 1.0
    %v3436 = vrcp.pop %v3435
    %v3437 = vmul.f32 1.0, %v3436
    %v3438 = vtanh.pop %v3429
    %v3439 = vmul.f32 %v3437, %v3199
    %3441 = vrot.lane.b32.xlu0 %v3438, 32
    %v3442 = vpop.permute.xlu0 %3441
    %v3444 = vmul.f32 %v3437, %v3442
    %3446 = vrot.lane.b32.xlu0 %v3444, 32
    %v3447 = vpop.permute.xlu0 %3446
    %v3449 = vadd.f32 %v3439, %v3447
    %v3450 = vtanh.pop %v3449
    %3452 = vrot.lane.b32.xlu0 %v3450, 32
    %v3453 = vpop.permute.xlu0 %3452
    %v3455 = vmul.f32 %v3437, %v3453
    %v3456 = vrot.slane %v3342, 6
    %v3457 = vrot.slane %v3343, 5
    %v3458 = vsel %vm1853, %v3457, %v3456
    %3459 = vrot.lane.b32.xlu0 %v3458, 64
    %v3460 = vpop.permute.xlu0 %3459
    %v3461 = vsel %vm177, %v3460, 0
    %3463 = vmatprep.subr.mxu0 0.0
    %3464 = vmatpush1.msra.mxu0 0.0
    %3465 = vmatprep.subr.mxu0 0.0
    %3466 = vmatpush1.msra.mxu0 0.0
    %3467 = vmatprep.subr.mxu0 0.0
    %3468 = vmatpush1.msra.mxu0 0.0
    %3469 = vmatprep.subr.mxu0 0.0
    %3470 = vmatpush1.msra.mxu0 0.0
    %3471 = vmatprep.subr.mxu0 0.0
    %3472 = vmatpush1.msra.mxu0 0.0
    %3473 = vmatprep.subr.mxu0 0.0
    %3474 = vmatpush1.msra.mxu0 0.0
    %3475 = vmatprep.subr.mxu0 0.0
    %3476 = vmatpush1.msra.mxu0 0.0
    %3477 = vmatprep.subr.mxu0 0.0
    %3478 = vmatpush1.msra.mxu0 0.0
    %3479 = vmatprep.subr.mxu0 0.0
    %3480 = vmatpush1.msra.mxu0 0.0
    %3481 = vmatprep.subr.mxu0 0.0
    %3482 = vmatpush1.msra.mxu0 0.0
    %3483 = vmatprep.subr.mxu0 0.0
    %3484 = vmatpush1.msra.mxu0 0.0
    %3485 = vmatprep.subr.mxu0 0.0
    %3486 = vmatpush1.msra.mxu0 0.0
    %3487 = vmatprep.subr.mxu0 0.0
    %3488 = vmatpush1.msra.mxu0 %v1713
    %3489 = vmatprep.subr.mxu0 0.0
    %3490 = vmatpush1.msra.mxu0 %v1712
    %3491 = vmatprep.subr.mxu0 0.0
    %3492 = vmatpush1.msra.mxu0 %v1711
    %3493 = vmatprep.subr.mxu0 0.0
    %3494 = vmatpush1.msra.mxu0 %v1710
    %3495 = vmatprep.subr.mxu0 0.0
    %3496 = vmatpush2.msra.mxu0 0.0
    %3497 = vmatprep.subr.mxu0 0.0
    %3498 = vmatpush2.msra.mxu0 0.0
    %3499 = vmatprep.subr.mxu0 0.0
    %3500 = vmatpush2.msra.mxu0 0.0
    %3501 = vmatprep.subr.mxu0 0.0
    %3502 = vmatpush2.msra.mxu0 0.0
    %3503 = vmatprep.subr.mxu0 0.0
    %3504 = vmatpush2.msra.mxu0 0.0
    %3505 = vmatprep.subr.mxu0 0.0
    %3506 = vmatpush2.msra.mxu0 0.0
    %3507 = vmatprep.subr.mxu0 0.0
    %3508 = vmatpush2.msra.mxu0 0.0
    %3509 = vmatprep.subr.mxu0 0.0
    %3510 = vmatpush2.msra.mxu0 0.0
    %3511 = vmatprep.subr.mxu0 0.0
    %3512 = vmatpush2.msra.mxu0 0.0
    %3513 = vmatprep.subr.mxu0 0.0
    %3514 = vmatpush2.msra.mxu0 0.0
    %3515 = vmatprep.subr.mxu0 0.0
    %3516 = vmatpush2.msra.mxu0 0.0
    %3517 = vmatprep.subr.mxu0 0.0
    %3518 = vmatpush2.msra.mxu0 0.0
    %3519 = vmatprep.subr.mxu0 0.0
    %3520 = vmatpush2.msra.mxu0 0.0
    %3521 = vmatprep.subr.mxu0 0.0
    %3522 = vmatpush2.msra.mxu0 0.0
    %3523 = vmatprep.subr.mxu0 0.0
    %3524 = vmatpush2.msra.mxu0 0.0
    %3525 = vmatprep.subr.mxu0 0.0
    %3526 = vmatpush2.msra.mxu0 0.0
    %3527 = vmatprep.mubr.f32.mxu0 0.0
    %3528 = vmatmul.mubr.f32.gmra.mxu0 %v3461
    %v3529 = vpop.f32.mrf.mxu0
    %v3530 = vadd.f32 0.0, %v3529
    %v3531 = vpop.f32.mrf.mxu0
    %3532 = vdwg.mxu0
    %v3534 = vrot.slane %v3530, 1
    %v3535 = vrot.slane %v3530, 2
    %v3538 = vadd.f32 %v1702, %v3534
    %v3539 = vadd.f32 %v1707, %v3535
    %v3540 = vxor.u32 %v3538, 2147483648
    %v3541 = vxor.u32 %v3539, 2147483648
    %v3542 = vmul.f32 %v3540, 1.442695
    %v3543 = vpow.pop %v3542
    %v3544 = vmul.f32 %v3541, 1.442695
    %v3545 = vpow.pop %v3544
    %v3546 = vadd.f32 %v3543, 1.0
    %v3547 = vadd.f32 %v3545, 1.0
    %v3548 = vrcp.pop %v3546
    %v3549 = vmul.f32 1.0, %v3548
    %v3550 = vrcp.pop %v3547
    %v3551 = vmul.f32 1.0, %v3550
    %v3552 = vtanh.pop %v3538
    %v3553 = vtanh.pop %v3539
    %v3556 = vrot.slane %v3330, 7
    %v3557 = vrot.slane %v3331, 7
    %v3560 = vmul.f32 %v3549, %v3556
    %v3561 = vmul.f32 %v3551, %v3557
    %3564 = vrot.lane.b32.xlu0 %v3552, 32
    %v3565 = vpop.permute.xlu0 %3564
    %3566 = vrot.lane.b32.xlu0 %v3553, 32
    %v3567 = vpop.permute.xlu0 %3566
    %v3570 = vmul.f32 %v3549, %v3565
    %v3571 = vmul.f32 %v3551, %v3567
    %3574 = vrot.lane.b32.xlu0 %v3570, 32
    %v3575 = vpop.permute.xlu0 %3574
    %3576 = vrot.lane.b32.xlu0 %v3571, 32
    %v3577 = vpop.permute.xlu0 %3576
    %v3580 = vadd.f32 %v3560, %v3575
    %v3581 = vadd.f32 %v3561, %v3577
    %v3582 = vtanh.pop %v3580
    %v3583 = vtanh.pop %v3581
    %3586 = vrot.lane.b32.xlu0 %v3582, 32
    %v3587 = vpop.permute.xlu0 %3586
    %3588 = vrot.lane.b32.xlu0 %v3583, 32
    %v3589 = vpop.permute.xlu0 %3588
    %v3592 = vmul.f32 %v3549, %v3587
    %v3593 = vmul.f32 %v3551, %v3589
    %v3596 = vrot.slane %v3593, 7
    %3597 = vrot.lane.b32.xlu0 %v3592, 64
    %v3598 = vpop.permute.xlu0 %3597
    %3599 = vrot.lane.b32.xlu0 %v3596, 64
    %v3600 = vpop.permute.xlu0 %3599
    %v3604 = vrot.slane %v3455, 1
    %3605 = vrot.lane.b32.xlu0 %v3604, 96
    %v3606 = vpop.permute.xlu0 %3605
    %v3608 = vsel %vm177, %v3598, %v3606
    %v3609 = vsel %vm177, %v3600, %v3606
    %vm3612 = vcmask 1040384
    %v3613 = vrot.slane %v3608, 7
    %v3614 = vrot.slane %v3609, 7
    %v3615 = vsel %vm3612, %v3613, %v3614
    %v3616 = vsel %vm1865, %v3615, 0
    %3618 = vmatprep.subr.mxu0 0.0
    %3619 = vmatpush1.msra.mxu0 0.0
    %3620 = vmatprep.subr.mxu0 0.0
    %3621 = vmatpush1.msra.mxu0 0.0
    %3622 = vmatprep.subr.mxu0 0.0
    %3623 = vmatpush1.msra.mxu0 0.0
    %3624 = vmatprep.subr.mxu0 0.0
    %3625 = vmatpush1.msra.mxu0 0.0
    %3626 = vmatprep.subr.mxu0 0.0
    %3627 = vmatpush1.msra.mxu0 0.0
    %3628 = vmatprep.subr.mxu0 0.0
    %3629 = vmatpush1.msra.mxu0 0.0
    %3630 = vmatprep.subr.mxu0 0.0
    %3631 = vmatpush1.msra.mxu0 0.0
    %3632 = vmatprep.subr.mxu0 0.0
    %3633 = vmatpush1.msra.mxu0 0.0
    %3634 = vmatprep.subr.mxu0 0.0
    %3635 = vmatpush1.msra.mxu0 %v1721
    %3636 = vmatprep.subr.mxu0 0.0
    %3637 = vmatpush1.msra.mxu0 %v1720
    %3638 = vmatprep.subr.mxu0 0.0
    %3639 = vmatpush1.msra.mxu0 %v1719
    %3640 = vmatprep.subr.mxu0 0.0
    %3641 = vmatpush1.msra.mxu0 %v1718
    %3642 = vmatprep.subr.mxu0 0.0
    %3643 = vmatpush1.msra.mxu0 %v1717
    %3644 = vmatprep.subr.mxu0 0.0
    %3645 = vmatpush1.msra.mxu0 %v1716
    %3646 = vmatprep.subr.mxu0 0.0
    %3647 = vmatpush1.msra.mxu0 %v1715
    %3648 = vmatprep.subr.mxu0 0.0
    %3649 = vmatpush1.msra.mxu0 %v1714
    %3650 = vmatprep.subr.mxu0 0.0
    %3651 = vmatpush2.msra.mxu0 0.0
    %3652 = vmatprep.subr.mxu0 0.0
    %3653 = vmatpush2.msra.mxu0 0.0
    %3654 = vmatprep.subr.mxu0 0.0
    %3655 = vmatpush2.msra.mxu0 0.0
    %3656 = vmatprep.subr.mxu0 0.0
    %3657 = vmatpush2.msra.mxu0 0.0
    %3658 = vmatprep.subr.mxu0 0.0
    %3659 = vmatpush2.msra.mxu0 0.0
    %3660 = vmatprep.subr.mxu0 0.0
    %3661 = vmatpush2.msra.mxu0 0.0
    %3662 = vmatprep.subr.mxu0 0.0
    %3663 = vmatpush2.msra.mxu0 0.0
    %3664 = vmatprep.subr.mxu0 0.0
    %3665 = vmatpush2.msra.mxu0 0.0
    %3666 = vmatprep.subr.mxu0 0.0
    %3667 = vmatpush2.msra.mxu0 0.0
    %3668 = vmatprep.subr.mxu0 0.0
    %3669 = vmatpush2.msra.mxu0 0.0
    %3670 = vmatprep.subr.mxu0 0.0
    %3671 = vmatpush2.msra.mxu0 0.0
    %3672 = vmatprep.subr.mxu0 0.0
    %3673 = vmatpush2.msra.mxu0 0.0
    %3674 = vmatprep.subr.mxu0 0.0
    %3675 = vmatpush2.msra.mxu0 0.0
    %3676 = vmatprep.subr.mxu0 0.0
    %3677 = vmatpush2.msra.mxu0 0.0
    %3678 = vmatprep.subr.mxu0 0.0
    %3679 = vmatpush2.msra.mxu0 0.0
    %3680 = vmatprep.subr.mxu0 0.0
    %3681 = vmatpush2.msra.mxu0 0.0
    %3682 = vmatprep.mubr.f32.mxu0 0.0
    %3683 = vmatmul.mubr.f32.gmra.mxu0 %v3616
    %v3684 = vpop.f32.mrf.mxu0
    %v3685 = vadd.f32 %v1863, %v3684
    %v3686 = vpop.f32.mrf.mxu0
    %3687 = vdwg.mxu0
    %v3688 = vxor.u32 %v3685, 2147483648
    %v3689 = vmul.f32 %v3688, 1.442695
    %v3690 = vpow.pop %v3689
    %v3691 = vadd.f32 %v3690, 1.0
    %v3692 = vrcp.pop %v3691
    %v3693 = vmul.f32 1.0, %v3692
    %v3694 = vtanh.pop %v3685
    %v3695 = vmul.f32 %v3693, %v3449
    %3697 = vrot.lane.b32.xlu0 %v3694, 32
    %v3698 = vpop.permute.xlu0 %3697
    %v3700 = vmul.f32 %v3693, %v3698
    %3702 = vrot.lane.b32.xlu0 %v3700, 32
    %v3703 = vpop.permute.xlu0 %3702
    %v3705 = vadd.f32 %v3695, %v3703
    %v3706 = vtanh.pop %v3705
    %3708 = vrot.lane.b32.xlu0 %v3706, 32
    %v3709 = vpop.permute.xlu0 %3708
    %v3711 = vmul.f32 %v3693, %v3709
    %v3713 = vunpack.c.l.s4 1966171168
    %v3714 = vunpack.c.0.s8 %v3713
    %v3715 = vlaneseq
    %v3716 = vshrl.u32 %v3715, 7
    %v3717 = vsub.s32 %v3714, %v3716
    %v3718 = vrot.slane %v1962, %v3717
    %v3719 = vcombine.high %v3718, %v3718
    %v3721 = vunpack.c.l.s4 1966171168
    %v3722 = vunpack.c.0.s8 %v3721
    %v3723 = vlaneseq
    %v3724 = vshrl.u32 %v3723, 7
    %v3725 = vsub.s32 %v3722, %v3724
    %v3726 = vrot.slane %v3718, %v3725
    %v3728 = vunpack.c.l.s4 1966171168
    %v3729 = vunpack.c.0.s8 %v3728
    %v3730 = vlaneseq
    %v3731 = vshrl.u32 %v3730, 7
    %v3732 = vsub.s32 %v3729, %v3731
    %v3733 = vrot.slane %v3719, %v3732
    %v3737 = vunpack.c.l.s4 1966171168
    %v3738 = vunpack.c.0.s8 %v3737
    %v3739 = vlaneseq
    %v3740 = vshrl.u32 %v3739, 7
    %v3741 = vsub.s32 %v3738, %v3740
    %v3742 = vrot.slane %v2206, %v3741
    %v3743 = vcombine.high %v3742, %v3742
    %v3745 = vunpack.c.l.s4 1966171168
    %v3746 = vunpack.c.0.s8 %v3745
    %v3747 = vlaneseq
    %v3748 = vshrl.u32 %v3747, 7
    %v3749 = vsub.s32 %v3746, %v3748
    %v3750 = vrot.slane %v3742, %v3749
    %v3752 = vunpack.c.l.s4 1966171168
    %v3753 = vunpack.c.0.s8 %v3752
    %v3754 = vlaneseq
    %v3755 = vshrl.u32 %v3754, 7
    %v3756 = vsub.s32 %v3753, %v3755
    %v3757 = vrot.slane %v3743, %v3756
    %v3759 = vunpack.c.l.s4 1966171168
    %v3760 = vunpack.c.0.s8 %v3759
    %v3761 = vlaneseq
    %v3762 = vshrl.u32 %v3761, 7
    %v3763 = vsub.s32 %v3760, %v3762
    %v3764 = vrot.slane %v2455, %v3763
    %v3765 = vcombine.high %v3764, %v3764
    %v3767 = vunpack.c.l.s4 1966171168
    %v3768 = vunpack.c.0.s8 %v3767
    %v3769 = vlaneseq
    %v3770 = vshrl.u32 %v3769, 7
    %v3771 = vsub.s32 %v3768, %v3770
    %v3772 = vrot.slane %v3764, %v3771
    %v3774 = vunpack.c.l.s4 1966171168
    %v3775 = vunpack.c.0.s8 %v3774
    %v3776 = vlaneseq
    %v3777 = vshrl.u32 %v3776, 7
    %v3778 = vsub.s32 %v3775, %v3777
    %v3779 = vrot.slane %v3765, %v3778
    %v3781 = vunpack.c.l.s4 1966171168
    %v3782 = vunpack.c.0.s8 %v3781
    %v3783 = vlaneseq
    %v3784 = vshrl.u32 %v3783, 7
    %v3785 = vsub.s32 %v3782, %v3784
    %v3786 = vrot.slane %v2705, %v3785
    %v3787 = vcombine.high %v3786, %v3786
    %v3789 = vunpack.c.l.s4 1966171168
    %v3790 = vunpack.c.0.s8 %v3789
    %v3791 = vlaneseq
    %v3792 = vshrl.u32 %v3791, 7
    %v3793 = vsub.s32 %v3790, %v3792
    %v3794 = vrot.slane %v3786, %v3793
    %v3796 = vunpack.c.l.s4 1966171168
    %v3797 = vunpack.c.0.s8 %v3796
    %v3798 = vlaneseq
    %v3799 = vshrl.u32 %v3798, 7
    %v3800 = vsub.s32 %v3797, %v3799
    %v3801 = vrot.slane %v3787, %v3800
    %v3803 = vunpack.c.l.s4 1966171168
    %v3804 = vunpack.c.0.s8 %v3803
    %v3805 = vlaneseq
    %v3806 = vshrl.u32 %v3805, 7
    %v3807 = vsub.s32 %v3804, %v3806
    %v3808 = vrot.slane %v2955, %v3807
    %v3809 = vcombine.high %v3808, %v3808
    %v3811 = vunpack.c.l.s4 1966171168
    %v3812 = vunpack.c.0.s8 %v3811
    %v3813 = vlaneseq
    %v3814 = vshrl.u32 %v3813, 7
    %v3815 = vsub.s32 %v3812, %v3814
    %v3816 = vrot.slane %v3808, %v3815
    %v3818 = vunpack.c.l.s4 1966171168
    %v3819 = vunpack.c.0.s8 %v3818
    %v3820 = vlaneseq
    %v3821 = vshrl.u32 %v3820, 7
    %v3822 = vsub.s32 %v3819, %v3821
    %v3823 = vrot.slane %v3809, %v3822
    %v3825 = vunpack.c.l.s4 1966171168
    %v3826 = vunpack.c.0.s8 %v3825
    %v3827 = vlaneseq
    %v3828 = vshrl.u32 %v3827, 7
    %v3829 = vsub.s32 %v3826, %v3828
    %v3830 = vrot.slane %v3205, %v3829
    %v3831 = vcombine.high %v3830, %v3830
    %v3833 = vunpack.c.l.s4 1966171168
    %v3834 = vunpack.c.0.s8 %v3833
    %v3835 = vlaneseq
    %v3836 = vshrl.u32 %v3835, 7
    %v3837 = vsub.s32 %v3834, %v3836
    %v3838 = vrot.slane %v3830, %v3837
    %v3840 = vunpack.c.l.s4 1966171168
    %v3841 = vunpack.c.0.s8 %v3840
    %v3842 = vlaneseq
    %v3843 = vshrl.u32 %v3842, 7
    %v3844 = vsub.s32 %v3841, %v3843
    %v3845 = vrot.slane %v3831, %v3844
    %v3847 = vunpack.c.l.s4 1966171168
    %v3848 = vunpack.c.0.s8 %v3847
    %v3849 = vlaneseq
    %v3850 = vshrl.u32 %v3849, 7
    %v3851 = vsub.s32 %v3848, %v3850
    %v3852 = vrot.slane %v3455, %v3851
    %v3853 = vcombine.high %v3852, %v3852
    %v3855 = vunpack.c.l.s4 1966171168
    %v3856 = vunpack.c.0.s8 %v3855
    %v3857 = vlaneseq
    %v3858 = vshrl.u32 %v3857, 7
    %v3859 = vsub.s32 %v3856, %v3858
    %v3860 = vrot.slane %v3852, %v3859
    %v3862 = vunpack.c.l.s4 1966171168
    %v3863 = vunpack.c.0.s8 %v3862
    %v3864 = vlaneseq
    %v3865 = vshrl.u32 %v3864, 7
    %v3866 = vsub.s32 %v3863, %v3865
    %v3867 = vrot.slane %v3853, %v3866
    %v3870 = vunpack.c.l.s4 1966171168
    %v3871 = vunpack.c.0.s8 %v3870
    %v3872 = vlaneseq
    %v3873 = vshrl.u32 %v3872, 7
    %v3874 = vsub.s32 %v3871, %v3873
    %v3875 = vrot.slane %v3711, %v3874
    %v3876 = vcombine.high %v3875, %v3875
    %v3878 = vunpack.c.l.s4 1966171168
    %v3879 = vunpack.c.0.s8 %v3878
    %v3880 = vlaneseq
    %v3881 = vshrl.u32 %v3880, 7
    %v3882 = vsub.s32 %v3879, %v3881
    %v3883 = vrot.slane %v3875, %v3882
    %v3885 = vunpack.c.l.s4 1966171168
    %v3886 = vunpack.c.0.s8 %v3885
    %v3887 = vlaneseq
    %v3888 = vshrl.u32 %v3887, 7
    %v3889 = vsub.s32 %v3886, %v3888
    %v3890 = vrot.slane %v3876, %v3889
    %v3891 = vlaneseq
    %v3892 = vshrl.u32 %v3891, 7
    %v3893 = vsub.s32 0, %v3892
    %v3894 = vrot.slane %v3750, %v3893
    %v3895 = vlaneseq
    %v3896 = vshrl.u32 %v3895, 7
    %v3897 = vsub.s32 0, %v3896
    %v3898 = vrot.slane %v3757, %v3897
    %v3901 = vlaneseq
    %v3902 = vshrl.u32 %v3901, 7
    %v3903 = vsub.s32 0, %v3902
    %v3904 = vrot.slane %v3772, %v3903
    %v3905 = vlaneseq
    %v3906 = vshrl.u32 %v3905, 7
    %v3907 = vsub.s32 0, %v3906
    %v3908 = vrot.slane %v3779, %v3907
    %v3911 = vlaneseq
    %v3912 = vshrl.u32 %v3911, 7
    %v3913 = vsub.s32 0, %v3912
    %v3914 = vrot.slane %v3794, %v3913
    %v3915 = vlaneseq
    %v3916 = vshrl.u32 %v3915, 7
    %v3917 = vsub.s32 0, %v3916
    %v3918 = vrot.slane %v3801, %v3917
    %v3921 = vlaneseq
    %v3922 = vshrl.u32 %v3921, 7
    %v3923 = vsub.s32 0, %v3922
    %v3924 = vrot.slane %v3816, %v3923
    %v3925 = vlaneseq
    %v3926 = vshrl.u32 %v3925, 7
    %v3927 = vsub.s32 0, %v3926
    %v3928 = vrot.slane %v3823, %v3927
    %v3931 = vlaneseq
    %v3932 = vshrl.u32 %v3931, 7
    %v3933 = vsub.s32 0, %v3932
    %v3934 = vrot.slane %v3838, %v3933
    %v3935 = vlaneseq
    %v3936 = vshrl.u32 %v3935, 7
    %v3937 = vsub.s32 0, %v3936
    %v3938 = vrot.slane %v3845, %v3937
    %v3941 = vlaneseq
    %v3942 = vshrl.u32 %v3941, 7
    %v3943 = vsub.s32 0, %v3942
    %v3944 = vrot.slane %v3860, %v3943
    %v3945 = vlaneseq
    %v3946 = vshrl.u32 %v3945, 7
    %v3947 = vsub.s32 0, %v3946
    %v3948 = vrot.slane %v3867, %v3947
    %v3951 = vlaneseq
    %v3952 = vshrl.u32 %v3951, 7
    %v3953 = vsub.s32 0, %v3952
    %v3954 = vrot.slane %v3883, %v3953
    %v3955 = vlaneseq
    %v3956 = vshrl.u32 %v3955, 7
    %v3957 = vsub.s32 0, %v3956
    %v3958 = vrot.slane %v3890, %v3957
    %v3961 = vsel %vm3612, %v3726, %v3894
    %v3962 = vsel %vm3612, %v3733, %v3898
    %v3963 = vsel %vm820, %v3961, %v3904
    %v3964 = vsel %vm820, %v3962, %v3908
    %v3965 = vsel %vm727, %v3963, %v3914
    %v3966 = vsel %vm727, %v3964, %v3918
    %v3967 = vsel %vm634, %v3965, %v3924
    %v3968 = vsel %vm634, %v3966, %v3928
    %v3969 = vsel %vm541, %v3967, %v3934
    %v3970 = vsel %vm541, %v3968, %v3938
    %v3971 = vsel %vm448, %v3969, %v3944
    %v3972 = vsel %vm448, %v3970, %v3948
    %v3973 = vsel %vm278, %v3971, %v3954
    %v3974 = vsel %vm278, %v3972, %v3958
    %3975 = vrot.lane.b32.xlu0 %v1616, 64
    %v3976 = vpop.permute.xlu0 %3975
    %3977 = vrot.lane.b32.xlu0 %v1617, 64
    %v3978 = vpop.permute.xlu0 %3977
    %v3981 = vadd.f32 %v3973, %v3976
    %v3982 = vadd.f32 %v3974, %v3978
    %v3983 = vld [vmem:[%s11] sm:$0xff]
    %v3984 = vld [vmem:[%s11 + $0x8] sm:$0xff]
    %v3985 = vld [vmem:[%s11 + $0x10] sm:$0xff]
    %v3986 = vld [vmem:[%s11 + $0x18] sm:$0xff]
    %v3987 = vld [vmem:[%s12] sm:$0x1]
    %v3989 = vlaneseq
    %v3990 = vshrl.u32 %v3989, 7
    %v3991 = vsub.s32 0, %v3990
    %v3992 = vrot.slane %v3987, %v3991
    %3996 = vrot.lane.b32.xlu0 %v3981, 64
    %v3997 = vpop.permute.xlu0 %3996
    %3998 = vrot.lane.b32.xlu0 %v3982, 64
    %v3999 = vpop.permute.xlu0 %3998
    %v4000 = vsel %vm177, %v3997, 0
    %v4002 = vsel %vm177, %v3999, 0
    %4004 = vmatprep.subr.mxu0 0.0
    %4005 = vmatpush1.msra.mxu0 0.0
    %4006 = vmatprep.subr.mxu0 0.0
    %4007 = vmatpush1.msra.mxu0 0.0
    %4008 = vmatprep.subr.mxu0 0.0
    %4009 = vmatpush1.msra.mxu0 0.0
    %4010 = vmatprep.subr.mxu0 0.0
    %4011 = vmatpush1.msra.mxu0 0.0
    %4012 = vmatprep.subr.mxu0 0.0
    %4013 = vmatpush1.msra.mxu0 0.0
    %4014 = vmatprep.subr.mxu0 0.0
    %4015 = vmatpush1.msra.mxu0 0.0
    %4016 = vmatprep.subr.mxu0 0.0
    %4017 = vmatpush1.msra.mxu0 0.0
    %4018 = vmatprep.subr.mxu0 0.0
    %4019 = vmatpush1.msra.mxu0 0.0
    %4020 = vmatprep.subr.mxu0 0.0
    %4021 = vmatpush1.msra.mxu0 0.0
    %4022 = vmatprep.subr.mxu0 0.0
    %4023 = vmatpush1.msra.mxu0 0.0
    %4024 = vmatprep.subr.mxu0 0.0
    %4025 = vmatpush1.msra.mxu0 0.0
    %4026 = vmatprep.subr.mxu0 0.0
    %4027 = vmatpush1.msra.mxu0 0.0
    %4028 = vmatprep.subr.mxu0 0.0
    %4029 = vmatpush1.msra.mxu0 %v3986
    %4030 = vmatprep.subr.mxu0 0.0
    %4031 = vmatpush1.msra.mxu0 %v3985
    %4032 = vmatprep.subr.mxu0 0.0
    %4033 = vmatpush1.msra.mxu0 %v3984
    %4034 = vmatprep.subr.mxu0 0.0
    %4035 = vmatpush1.msra.mxu0 %v3983
    %4036 = vmatprep.subr.mxu0 0.0
    %4037 = vmatpush2.msra.mxu0 0.0
    %4038 = vmatprep.subr.mxu0 0.0
    %4039 = vmatpush2.msra.mxu0 0.0
    %4040 = vmatprep.subr.mxu0 0.0
    %4041 = vmatpush2.msra.mxu0 0.0
    %4042 = vmatprep.subr.mxu0 0.0
    %4043 = vmatpush2.msra.mxu0 0.0
    %4044 = vmatprep.subr.mxu0 0.0
    %4045 = vmatpush2.msra.mxu0 0.0
    %4046 = vmatprep.subr.mxu0 0.0
    %4047 = vmatpush2.msra.mxu0 0.0
    %4048 = vmatprep.subr.mxu0 0.0
    %4049 = vmatpush2.msra.mxu0 0.0
    %4050 = vmatprep.subr.mxu0 0.0
    %4051 = vmatpush2.msra.mxu0 0.0
    %4052 = vmatprep.subr.mxu0 0.0
    %4053 = vmatpush2.msra.mxu0 0.0
    %4054 = vmatprep.subr.mxu0 0.0
    %4055 = vmatpush2.msra.mxu0 0.0
    %4056 = vmatprep.subr.mxu0 0.0
    %4057 = vmatpush2.msra.mxu0 0.0
    %4058 = vmatprep.subr.mxu0 0.0
    %4059 = vmatpush2.msra.mxu0 0.0
    %4060 = vmatprep.subr.mxu0 0.0
    %4061 = vmatpush2.msra.mxu0 0.0
    %4062 = vmatprep.subr.mxu0 0.0
    %4063 = vmatpush2.msra.mxu0 0.0
    %4064 = vmatprep.subr.mxu0 0.0
    %4065 = vmatpush2.msra.mxu0 0.0
    %4066 = vmatprep.subr.mxu0 0.0
    %4067 = vmatpush2.msra.mxu0 0.0
    %4068 = vmatprep.mubr.f32.mxu0 0.0
    %4069 = vmatmul.mubr.f32.gmra.mxu0 %v4000
    %v4070 = vpop.f32.mrf.mxu0
    %v4071 = vadd.f32 %v3992, %v4070
    %v4072 = vpop.f32.mrf.mxu0
    %4073 = vmatprep.mubr.f32.mxu0 0.0
    %4074 = vmatmul.mubr.f32.gmra.mxu0 %v4002
    %v4075 = vpop.f32.mrf.mxu0
    %v4076 = vadd.f32 %v3992, %v4075
    %v4077 = vpop.f32.mrf.mxu0
    %4078 = vdwg.mxu0
    %v4079 = vxor.u32 %v4071, 2147483648
    %v4080 = vxor.u32 %v4076, 2147483648
    %v4081 = vmul.f32 %v4079, 1.442695
    %v4082 = vpow.pop %v4081
    %v4083 = vmul.f32 %v4080, 1.442695
    %v4084 = vpow.pop %v4083
    %v4085 = vadd.f32 %v4082, 1.0
    %v4086 = vadd.f32 %v4084, 1.0
    %v4087 = vrcp.pop %v4085
    %v4088 = vmul.f32 1.0, %v4087
    %v4089 = vrcp.pop %v4086
    %v4090 = vmul.f32 1.0, %v4089
    %vm4091 = vcmask 64512
    %4092 = vst.msk [vmem:[#allocation18] sm:$0xff] %vm4091, %v4088
    %4093 = vst.msk [vmem:[#allocation18 + $0x8] sm:$0xff] %vm4091, %v4090
    // Predicated region
    $region90: #{inference_forward.1} parent=1 // pred_check
      _
    $region91: #{inference_forward.1} parent=1 // pred_check_branch
      %4095 = sbr.rel (0) target = $region93
    $region92: #{inference_forward.1} parent=1 // pred_region
      %s4097 = ssub.s32 256, 256
      %4098 = vsyncadd [#allocation5], %s4097
      %s4099 = sshll.u32 [#allocation18], 4
      %s4100 = int_to_ptr.vmem [resolvable:$true] %s4099
      %4105 = dma.vmem_to_hbm [thread:$0]  %s4100, 256, %s13, [#allocation5], 128, 128, 8
    $region93: #{inference_forward.1} parent=1 // pred_fallthru
      _
    // Predicated region
    $region94: #{inference_forward.1} parent=1 // pred_check
      _
    $region95: #{inference_forward.1} parent=1 // pred_check_branch
      %4107 = sbr.rel (0) target = $region97
    $region96: #{inference_forward.1} parent=1 // pred_region
      %4108 = dma.done [#allocation5], 256
    $region97: #{inference_forward.1} parent=1 // pred_fallthru
      _
    %4109 = vsyncpa [#allocation4], 1
    %4110 = vsyncpa [#allocation7], 1
    %4111 = vsyncpa [#allocation10], 1
    %4112 = vsyncpa [#allocation13], 1
    %4113 = vsyncpa [#allocation16], 1
    %4114 = vsyncpa [#allocation5], 1

</llo_original>
